<compile_context>
chip_gen: v5e
topology: v5e:2x2
jax: 0.10.0
libtpu: 0.0.40
codegen_flags: <defaults>
</compile_context>

<pallas_src>
import functools

import numpy as np

import jax
import jax.numpy as jnp
from jax.experimental import pallas as pl
from jax.experimental.pallas import tpu as pltpu

EPS_BN = 1e-5


# ----------------------------------------------------------------------------
# Fully fused kernel: backbone + projection + pooling + PCA + all heads
# ----------------------------------------------------------------------------


def _fsra_fused_kernel(patches_ref, bbw_ref, bbb_ref, projw_ref, paff_ref,
                       pool_ref, mean0_ref, pca_ref,
                       gw1_ref, gaff_ref, gw2_ref, gb2_ref,
                       rw1_ref, raff_ref, rw2_ref, rb2_ref,
                       fusw_ref, fusaff_ref,
                       fw1_ref, faff_ref, fw2_ref, fb2_ref,
                       preds_ref, feats_ref,
                       *, bt, num_clusters, bottleneck, target_dim, ncls_pad):
    # ---- backbone patch-embed (stand-in) -> ReLU -> 1x1 conv + folded BN+ReLU
    h = jnp.dot(patches_ref[...], bbw_ref[...],
                preferred_element_type=jnp.float32)
    h = jnp.maximum(h + bbb_ref[...], 0.0)
    f = jnp.dot(h.astype(jnp.bfloat16), projw_ref[...],
                preferred_element_type=jnp.float32)
    f = jnp.maximum(f * paff_ref[0:1, :] + paff_ref[1:2, :], 0.0)

    # ---- GAP + community-mean pooling as one small matmul (head-major rows)
    pooled = jnp.dot(pool_ref[...], f, preferred_element_type=jnp.float32)

    def class_block(x, w1, aff, w2, b2):
        # f = BN1d(Linear(x)) (eval-mode BN folded into aff); pred = Linear(f)
        g = jnp.dot(x.astype(jnp.bfloat16), w1,
                    preferred_element_type=jnp.float32)
        g = g * aff[0:1, :] + aff[1:2, :]
        p = jnp.dot(g.astype(jnp.bfloat16), w2,
                    preferred_element_type=jnp.float32) + b2
        return g, p

    # ---- global head; fusion input accumulated chunk-by-chunk (no concat)
    g_feat, g_pred = class_block(pooled[0:bt, :], gw1_ref[...], gaff_ref[...],
                                 gw2_ref[...], gb2_ref[...])
    preds_ref[:, 0:ncls_pad] = g_pred
    feats_ref[:, 0:bottleneck] = g_feat
    fused = jnp.dot(g_feat.astype(jnp.bfloat16), fusw_ref[0:bottleneck, :],
                    preferred_element_type=jnp.float32)

    # ---- regional heads (PCA transform fused as one small matmul per head)
    mean0 = mean0_ref[...]
    for k in range(num_clusters):                       # static unroll, K small
        clus_k = pooled[(1 + k) * bt:(2 + k) * bt, :]
        x_k = jnp.dot((clus_k - mean0).astype(jnp.bfloat16), pca_ref[...],
                      preferred_element_type=jnp.float32)
        r_feat, r_pred = class_block(x_k, rw1_ref[k], raff_ref[k],
                                     rw2_ref[k], rb2_ref[k])
        preds_ref[:, (1 + k) * ncls_pad:(2 + k) * ncls_pad] = r_pred
        off = bottleneck + k * target_dim
        feats_ref[:, off:off + target_dim] = r_feat
        fused = fused + jnp.dot(r_feat.astype(jnp.bfloat16),
                                fusw_ref[off:off + target_dim, :],
                                preferred_element_type=jnp.float32)

    # ---- feature fusion: Linear + BN1d + ReLU (Dropout == identity in eval)
    fused = jnp.maximum(fused * fusaff_ref[0:1, :] + fusaff_ref[1:2, :], 0.0)

    # ---- final head
    f_feat, f_pred = class_block(fused, fw1_ref[...], faff_ref[...],
                                 fw2_ref[...], fb2_ref[...])
    poff = (1 + num_clusters) * ncls_pad
    preds_ref[:, poff:poff + ncls_pad] = f_pred
    foff = bottleneck + num_clusters * target_dim
    feats_ref[:, foff:foff + bottleneck] = f_feat


def fsra_fused(patches, params, *, grid, bt, hw, num_clusters, bottleneck,
               target_dim, ncls_pad, feature_dim):
    num_heads = num_clusters + 2
    preds_w = num_heads * ncls_pad
    feats_w = bottleneck + num_clusters * target_dim + bottleneck
    pdp = patches.shape[-1]
    backbone_dim = params["bb_w"].shape[1]

    args = (patches, params["bb_w"], params["bb_b"], params["proj_w"],
            params["proj_aff"], params["pool_block"], params["pca_mean"],
            params["pca_proj"],
            params["g_w1"], params["g_aff"], params["g_w2p"], params["g_b2p"],
            params["r_w1"], params["r_aff"], params["r_w2p"], params["r_b2p"],
            params["fusion_w"], params["fusion_aff"],
            params["f_w1"], params["f_aff"], params["f_w2p"], params["f_b2p"])

    def const_spec(shape):
        n = len(shape)
        return pl.BlockSpec(shape, lambda i, _n=n: (0,) * _n)

    in_specs = [pl.BlockSpec((None, bt * hw, pdp), lambda i: (i, 0, 0))]
    in_specs += [const_spec(a.shape) for a in args[1:]]

    # Advisory cost so XLA overlaps this tiny custom call with the glue ops.
    flops = 2 * grid * bt * (
        hw * pdp * backbone_dim + hw * backbone_dim * feature_dim
        + (1 + num_clusters) * hw * feature_dim
        + feature_dim * bottleneck + bottleneck * ncls_pad
        + num_clusters * (feature_dim * target_dim + target_dim * target_dim
                          + target_dim * ncls_pad)
        + (bottleneck + num_clusters * target_dim) * feature_dim
        + feature_dim * bottleneck + bottleneck * ncls_pad)
    bytes_accessed = sum(int(np.prod(a.shape)) * a.dtype.itemsize for a in args)
    bytes_accessed += grid * bt * (preds_w + feats_w) * 4

    return pl.pallas_call(
        functools.partial(_fsra_fused_kernel, bt=bt, num_clusters=num_clusters,
                          bottleneck=bottleneck, target_dim=target_dim,
                          ncls_pad=ncls_pad),
        out_shape=(jax.ShapeDtypeStruct((grid, bt, preds_w), jnp.float32),
                   jax.ShapeDtypeStruct((grid, bt, feats_w), jnp.float32)),
        grid=(grid,),
        in_specs=in_specs,
        out_specs=(pl.BlockSpec((None, bt, preds_w), lambda i: (i, 0, 0)),
                   pl.BlockSpec((None, bt, feats_w), lambda i: (i, 0, 0))),
        compiler_params=pltpu.CompilerParams(
            dimension_semantics=("parallel",)),
        cost_estimate=pl.CostEstimate(flops=flops, transcendentals=0,
                                      bytes_accessed=bytes_accessed),
    )(*args)


# ----------------------------------------------------------------------------
# Parameter construction (deterministic, synthetic) + host-side setup
# ----------------------------------------------------------------------------


def _kaiming(key, shape, fan_in, dtype=jnp.float32):
    w = jax.random.normal(key, shape, jnp.float32) * jnp.sqrt(2.0 / fan_in)
    return w.astype(dtype)


def _fold_bn(lin_bias, gamma, beta, mean, var):
    """Fold eval-mode BatchNorm (+ preceding linear/conv bias) into a stacked
    (2, N) [scale; shift] affine used by the fused matmul epilogues."""
    s = gamma / jnp.sqrt(var + EPS_BN)
    shift = lin_bias * s + beta - mean * s
    return jnp.stack([s, shift], axis=0)


def _identity_affine(n):
    z = jnp.zeros((n,), jnp.float32)
    o = jnp.ones((n,), jnp.float32)
    return _fold_bn(z, o, z, z, o)


def _make_class_block(key, input_dim, num_classes, num_bottleneck, ncls_pad):
    # Standard FSRA ClassBlock (eval): f = BN1d(Linear(x)); pred = Linear(f).
    k1, k2 = jax.random.split(key)
    w1 = _kaiming(k1, (input_dim, num_bottleneck), input_dim, jnp.bfloat16)
    aff = _identity_affine(num_bottleneck)
    w2 = _kaiming(k2, (num_bottleneck, num_classes), num_bottleneck)
    # Classifier padded to a lane-dense 128-multiple width (zeros beyond classes).
    w2p = jnp.zeros((num_bottleneck, ncls_pad), jnp.float32)
    w2p = w2p.at[:, :num_classes].set(w2).astype(jnp.bfloat16)
    b2p = jnp.zeros((1, ncls_pad), jnp.float32)
    return dict(w1=w1, aff=aff, w2p=w2p, b2p=b2p)


def build_pool_heads(hw, num_clusters):
    """GAP row + fallback contiguous community-mean rows (== the module's
    _fallback_clustering), as (1+K, HW) pooling weights."""
    nodes_per = hw // num_clusters
    heads = [np.full((hw,), 1.0 / hw, np.float32)]       # adaptive_avg_pool2d
    communities = []
    for c in range(num_clusters):
        s = c * nodes_per
        e = s + nodes_per if c < num_clusters - 1 else hw
        row = np.zeros((hw,), np.float32)
        row[s:e] = 1.0 / (e - s)
        heads.append(row)
        communities.append(list(range(s, e)))
    return np.stack(heads), communities


def expand_pool(pool_heads, bt):
    """Per-program pooling matrix for a batch tile of bt images, head-major:
    row h*bt + j pools head h (0=GAP, 1+k=community k) of local image j."""
    kp1, hw = pool_heads.shape
    blk = np.zeros((kp1 * bt, bt * hw), np.float32)
    for h in range(kp1):
        for j in range(bt):
            blk[h * bt + j, j * hw:(j + 1) * hw] = pool_heads[h]
    return blk


def build_params(key, *, in_ch, patch, pdp, backbone_dim, feature_dim,
                 target_dim, num_clusters, num_classes, bottleneck, hw,
                 ncls_pad):
    keys = jax.random.split(key, 5 + num_clusters)
    patch_dim = in_ch * patch * patch

    # patch_dim (48) zero-padded to pdp (128) for unmasked lane-dense loads.
    bb_w_real = _kaiming(keys[0], (patch_dim, backbone_dim), patch_dim)
    bb_w = jnp.zeros((pdp, backbone_dim), jnp.float32)
    bb_w = bb_w.at[:patch_dim].set(bb_w_real).astype(jnp.bfloat16)

    pool_heads, communities = build_pool_heads(hw, num_clusters)

    g_cb = _make_class_block(keys[2], feature_dim, num_classes, bottleneck,
                             ncls_pad)
    r_cbs = [_make_class_block(keys[3 + i], target_dim, num_classes, target_dim,
                               ncls_pad) for i in range(num_clusters)]
    f_cb = _make_class_block(keys[3 + num_clusters], feature_dim, num_classes,
                             bottleneck, ncls_pad)

    fusion_in = bottleneck + num_clusters * target_dim
    params = dict(
        bb_w=bb_w,
        bb_b=jnp.zeros((1, backbone_dim), jnp.float32),
        proj_w=_kaiming(keys[1], (backbone_dim, feature_dim), backbone_dim,
                        jnp.bfloat16),
        proj_aff=_identity_affine(feature_dim),
        g_w1=g_cb["w1"], g_aff=g_cb["aff"], g_w2p=g_cb["w2p"], g_b2p=g_cb["b2p"],
        r_w1=jnp.stack([cb["w1"] for cb in r_cbs]),
        r_aff=jnp.stack([cb["aff"] for cb in r_cbs]),
        r_w2p=jnp.stack([cb["w2p"] for cb in r_cbs]),
        r_b2p=jnp.stack([cb["b2p"] for cb in r_cbs]),
        fusion_w=_kaiming(keys[4 + num_clusters], (fusion_in, feature_dim),
                          fusion_in, jnp.bfloat16),
        fusion_aff=_identity_affine(feature_dim),
        f_w1=f_cb["w1"], f_aff=f_cb["aff"], f_w2p=f_cb["w2p"], f_b2p=f_cb["b2p"],
    )
    return params, communities, pool_heads


def make_patches(x, patch, pdp):
    """NCHW -> (B, HW, patch_dim) patch-embed layout, zero-padded to pdp and
    cast to bf16 in the wrapper (halves the only non-trivial HBM->VMEM DMA)."""
    B, C, H, W = x.shape
    hp, wp = H // patch, W // patch
    p = x.reshape(B, C, hp, patch, wp, patch)
    p = p.transpose(0, 2, 4, 1, 3, 5).reshape(B, hp * wp, C * patch * patch)
    pad = pdp - C * patch * patch
    if pad > 0:
        p = jnp.concatenate(
            [p, jnp.zeros((B, hp * wp, pad), p.dtype)], axis=-1)
    return p.astype(jnp.bfloat16)


def fit_pca(params, x, pool_heads, *, patch, pdp, num_clusters, target_dim):
    """One-time host-side PCA fit on batch 0's clustered features, mirroring
    the module's cached sklearn self.pca (fit once, reused on every forward).
    Mirrors the kernel math (same folded weights / bf16 casts) for batch 0."""
    p0 = make_patches(x[0:1], patch, pdp)[0]                  # (HW, pdp) bf16
    h = jnp.dot(p0, params["bb_w"], preferred_element_type=jnp.float32)
    h = jnp.maximum(h + params["bb_b"], 0.0)
    f = jnp.dot(h.astype(jnp.bfloat16), params["proj_w"],
                preferred_element_type=jnp.float32)
    f = jnp.maximum(f * params["proj_aff"][0:1] + params["proj_aff"][1:2], 0.0)
    x0 = jnp.dot(jnp.asarray(pool_heads[1:], jnp.float32), f)  # (K, FD)
    mean0 = jnp.mean(x0, axis=0, keepdims=True)
    xc = np.asarray(x0 - mean0, dtype=np.float64)
    feat_dim = xc.shape[1]
    n_comp = min(target_dim, min(num_clusters, feat_dim))
    # Host LAPACK SVD at setup only — NOT a TPU custom call in the forward.
    _, _, vt = np.linalg.svd(xc, full_matrices=False)
    proj = np.zeros((feat_dim, target_dim), np.float32)
    proj[:, :n_comp] = vt[:n_comp].T
    return (jnp.asarray(mean0, jnp.float32),
            jnp.asarray(proj).astype(jnp.bfloat16))


# ----------------------------------------------------------------------------
# Forward pass (thin glue around the single fused Pallas kernel)
# ----------------------------------------------------------------------------


def fsra_forward(params, x, *, patch, pdp, grid, num_clusters, target_dim,
                 num_classes, ncls_pad, bottleneck, feature_dim):
    """x: (B, C, H, W) NCHW (PyTorch convention)."""
    B, _, H, W = x.shape
    hw = (H // patch) * (W // patch)
    bt = B // grid

    patches = make_patches(x, patch, pdp).reshape(grid, bt * hw, pdp)
    preds_slab, feats_slab = fsra_fused(
        patches, params, grid=grid, bt=bt, hw=hw, num_clusters=num_clusters,
        bottleneck=bottleneck, target_dim=target_dim, ncls_pad=ncls_pad,
        feature_dim=feature_dim)

    num_heads = num_clusters + 2
    # Single reshape+slice per slab (all head feature widths are equal here).
    assert bottleneck == target_dim
    preds = preds_slab.reshape(B, num_heads, ncls_pad)[:, :, :num_classes]
    feats = feats_slab.reshape(B, num_heads, bottleneck)
    predictions = [preds[:, h, :] for h in range(num_heads)]
    features = [feats[:, h, :] for h in range(num_heads)]
    return predictions, features


# ----------------------------------------------------------------------------
# Main
# ----------------------------------------------------------------------------

if __name__ == "__main__":
    # Small, module-consistent shapes.  256-wide features fill the v6e/v7x
    # 256x256 MXU tile (and TARGET_DIM matches the module's target_dim=256).
    B, IN_CH, H, W = 2, 3, 16, 16
    PATCH = 4                     # backbone stand-in downsample factor
    BACKBONE_DIM = 256
    FEATURE_DIM = 256             # feature_dim (scaled down from 512)
    TARGET_DIM = 256              # CommunityClusteringModule.target_dim
    BOTTLENECK = 256              # ClassBlock bottleneck for global/final heads
    NUM_CLASSES = 10
    NUM_CLUSTERS = 3
    HW = (H // PATCH) * (W // PATCH)
    PDP = 128                     # patch_dim (48) zero-padded to 128
    NCLS_PAD = 128                # classifier width padded for lane density
    GRID = 2 if B % 2 == 0 else 1  # "parallel" batch-tile axis (megacore, v7x)
    BT = B // GRID

    key = jax.random.PRNGKey(0)
    pkey, xkey = jax.random.split(key)
    params, communities, pool_heads = build_params(
        pkey, in_ch=IN_CH, patch=PATCH, pdp=PDP, backbone_dim=BACKBONE_DIM,
        feature_dim=FEATURE_DIM, target_dim=TARGET_DIM,
        num_clusters=NUM_CLUSTERS, num_classes=NUM_CLASSES,
        bottleneck=BOTTLENECK, hw=HW, ncls_pad=NCLS_PAD)

    x = jax.random.normal(xkey, (B, IN_CH, H, W), jnp.float32)

    # Host-side setup: per-program pooling block + one-time PCA fit state.
    params["pool_block"] = jnp.asarray(expand_pool(pool_heads, BT), jnp.float32)
    pca_mean, pca_proj = fit_pca(params, x, pool_heads, patch=PATCH, pdp=PDP,
                                 num_clusters=NUM_CLUSTERS,
                                 target_dim=TARGET_DIM)
    params["pca_mean"] = pca_mean
    params["pca_proj"] = pca_proj

    fwd = jax.jit(functools.partial(
        fsra_forward, patch=PATCH, pdp=PDP, grid=GRID,
        num_clusters=NUM_CLUSTERS, target_dim=TARGET_DIM,
        num_classes=NUM_CLASSES, ncls_pad=NCLS_PAD, bottleneck=BOTTLENECK,
        feature_dim=FEATURE_DIM))

    preds, feats = fwd(params, x)
    batch_communities = [communities for _ in range(B)]

    for t in preds + feats:
        jax.block_until_ready(t)

    assert len(preds) == NUM_CLUSTERS + 2 and len(feats) == NUM_CLUSTERS + 2
    assert all(p.shape == (B, NUM_CLASSES) for p in preds)
    assert feats[0].shape == (B, BOTTLENECK)
    assert all(f.shape == (B, TARGET_DIM) for f in feats[1:1 + NUM_CLUSTERS])
    assert feats[-1].shape == (B, BOTTLENECK)
    assert len(batch_communities) == B

    print("KERNEL_OK")
</pallas_src>

<mosaic_0001>
module attributes {stable_mosaic.version = 11 : i64} {
  func.func @_fsra_fused_kernel(%arg0: i32, %arg1: memref<1x16x128xbf16, #tpu.memory_space<vmem>>, %arg2: memref<128x256xbf16, #tpu.memory_space<vmem>>, %arg3: memref<1x256xf32, #tpu.memory_space<vmem>>, %arg4: memref<256x256xbf16, #tpu.memory_space<vmem>>, %arg5: memref<2x256xf32, #tpu.memory_space<vmem>>, %arg6: memref<4x16xf32, #tpu.memory_space<vmem>>, %arg7: memref<1x256xf32, #tpu.memory_space<vmem>>, %arg8: memref<256x256xbf16, #tpu.memory_space<vmem>>, %arg9: memref<256x256xbf16, #tpu.memory_space<vmem>>, %arg10: memref<2x256xf32, #tpu.memory_space<vmem>>, %arg11: memref<256x128xbf16, #tpu.memory_space<vmem>>, %arg12: memref<1x128xf32, #tpu.memory_space<vmem>>, %arg13: memref<3x256x256xbf16, #tpu.memory_space<vmem>>, %arg14: memref<3x2x256xf32, #tpu.memory_space<vmem>>, %arg15: memref<3x256x128xbf16, #tpu.memory_space<vmem>>, %arg16: memref<3x1x128xf32, #tpu.memory_space<vmem>>, %arg17: memref<1024x256xbf16, #tpu.memory_space<vmem>>, %arg18: memref<2x256xf32, #tpu.memory_space<vmem>>, %arg19: memref<256x256xbf16, #tpu.memory_space<vmem>>, %arg20: memref<2x256xf32, #tpu.memory_space<vmem>>, %arg21: memref<256x128xbf16, #tpu.memory_space<vmem>>, %arg22: memref<1x128xf32, #tpu.memory_space<vmem>>, %arg23: memref<1x1x640xf32, #tpu.memory_space<vmem>>, %arg24: memref<1x1x1280xf32, #tpu.memory_space<vmem>>) attributes {dimension_semantics = [#tpu.dimension_semantics<parallel>], iteration_bounds = array<i64: 2>, scalar_prefetch = 0 : i64, scratch_operands = 0 : i64, tpu.core_type = #tpu.core_type<tc>, window_params = [{transform_indices = @transform_0, window_bounds = array<i64: 1, 16, 128>}, {pipeline_mode = #tpu.pipeline_mode<synchronous>, transform_indices = @transform_1, window_bounds = array<i64: 128, 256>}, {pipeline_mode = #tpu.pipeline_mode<synchronous>, transform_indices = @transform_2, window_bounds = array<i64: 1, 256>}, {pipeline_mode = #tpu.pipeline_mode<synchronous>, transform_indices = @transform_3, window_bounds = array<i64: 256, 256>}, {pipeline_mode = #tpu.pipeline_mode<synchronous>, transform_indices = @transform_4, window_bounds = array<i64: 2, 256>}, {pipeline_mode = #tpu.pipeline_mode<synchronous>, transform_indices = @transform_5, window_bounds = array<i64: 4, 16>}, {pipeline_mode = #tpu.pipeline_mode<synchronous>, transform_indices = @transform_6, window_bounds = array<i64: 1, 256>}, {pipeline_mode = #tpu.pipeline_mode<synchronous>, transform_indices = @transform_7, window_bounds = array<i64: 256, 256>}, {pipeline_mode = #tpu.pipeline_mode<synchronous>, transform_indices = @transform_8, window_bounds = array<i64: 256, 256>}, {pipeline_mode = #tpu.pipeline_mode<synchronous>, transform_indices = @transform_9, window_bounds = array<i64: 2, 256>}, {pipeline_mode = #tpu.pipeline_mode<synchronous>, transform_indices = @transform_10, window_bounds = array<i64: 256, 128>}, {pipeline_mode = #tpu.pipeline_mode<synchronous>, transform_indices = @transform_11, window_bounds = array<i64: 1, 128>}, {pipeline_mode = #tpu.pipeline_mode<synchronous>, transform_indices = @transform_12, window_bounds = array<i64: 3, 256, 256>}, {pipeline_mode = #tpu.pipeline_mode<synchronous>, transform_indices = @transform_13, window_bounds = array<i64: 3, 2, 256>}, {pipeline_mode = #tpu.pipeline_mode<synchronous>, transform_indices = @transform_14, window_bounds = array<i64: 3, 256, 128>}, {pipeline_mode = #tpu.pipeline_mode<synchronous>, transform_indices = @transform_15, window_bounds = array<i64: 3, 1, 128>}, {pipeline_mode = #tpu.pipeline_mode<synchronous>, transform_indices = @transform_16, window_bounds = array<i64: 1024, 256>}, {pipeline_mode = #tpu.pipeline_mode<synchronous>, transform_indices = @transform_17, window_bounds = array<i64: 2, 256>}, {pipeline_mode = #tpu.pipeline_mode<synchronous>, transform_indices = @transform_18, window_bounds = array<i64: 256, 256>}, {pipeline_mode = #tpu.pipeline_mode<synchronous>, transform_indices = @transform_19, window_bounds = array<i64: 2, 256>}, {pipeline_mode = #tpu.pipeline_mode<synchronous>, transform_indices = @transform_20, window_bounds = array<i64: 256, 128>}, {pipeline_mode = #tpu.pipeline_mode<synchronous>, transform_indices = @transform_21, window_bounds = array<i64: 1, 128>}, {transform_indices = @transform_22, window_bounds = array<i64: 1, 1, 640>}, {transform_indices = @transform_23, window_bounds = array<i64: 1, 1, 1280>}]} {
    %c0 = arith.constant 0 : index
    %c0_0 = arith.constant 0 : index
    %c0_1 = arith.constant 0 : index
    %0 = vector.load %arg1[%c0, %c0_0, %c0_1] : memref<1x16x128xbf16, #tpu.memory_space<vmem>>, vector<1x16x128xbf16>
    %1 = vector.shape_cast %0 : vector<1x16x128xbf16> to vector<16x128xbf16>
    %c0_2 = arith.constant 0 : index
    %c0_3 = arith.constant 0 : index
    %2 = vector.load %arg2[%c0_2, %c0_3] : memref<128x256xbf16, #tpu.memory_space<vmem>>, vector<128x256xbf16>
    %cst = arith.constant dense<0.000000e+00> : vector<16x256xf32>
    %3 = tpu.matmul %1, %2, %cst {dimension_numbers = #tpu.dot_dimension_numbers<[1], [0], [0], [1], [0, 0, 1, 1], [], []>} : vector<16x128xbf16>, vector<128x256xbf16>, vector<16x256xf32> -> vector<16x256xf32>
    %c0_4 = arith.constant 0 : index
    %c0_5 = arith.constant 0 : index
    %4 = vector.load %arg3[%c0_4, %c0_5] : memref<1x256xf32, #tpu.memory_space<vmem>>, vector<1x256xf32>
    %5 = vector.broadcast %4 : vector<1x256xf32> to vector<16x256xf32>
    %6 = arith.addf %3, %5 : vector<16x256xf32>
    %cst_6 = arith.constant 0.000000e+00 : f32
    %7 = vector.broadcast %cst_6 : f32 to vector<16x256xf32>
    %8 = arith.maximumf %6, %7 : vector<16x256xf32>
    %9 = arith.truncf %8 : vector<16x256xf32> to vector<16x256xbf16>
    %c0_7 = arith.constant 0 : index
    %c0_8 = arith.constant 0 : index
    %10 = vector.load %arg4[%c0_7, %c0_8] : memref<256x256xbf16, #tpu.memory_space<vmem>>, vector<256x256xbf16>
    %cst_9 = arith.constant dense<0.000000e+00> : vector<16x256xf32>
    %11 = tpu.matmul %9, %10, %cst_9 {dimension_numbers = #tpu.dot_dimension_numbers<[1], [0], [0], [1], [0, 0, 1, 1], [], []>} : vector<16x256xbf16>, vector<256x256xbf16>, vector<16x256xf32> -> vector<16x256xf32>
    %c0_10 = arith.constant 0 : index
    %c0_11 = arith.constant 0 : index
    %12 = vector.load %arg5[%c0_10, %c0_11] : memref<2x256xf32, #tpu.memory_space<vmem>>, vector<1x256xf32>
    %13 = vector.broadcast %12 : vector<1x256xf32> to vector<16x256xf32>
    %14 = arith.mulf %11, %13 : vector<16x256xf32>
    %c1 = arith.constant 1 : index
    %c0_12 = arith.constant 0 : index
    %15 = vector.load %arg5[%c1, %c0_12] : memref<2x256xf32, #tpu.memory_space<vmem>>, vector<1x256xf32>
    %16 = vector.broadcast %15 : vector<1x256xf32> to vector<16x256xf32>
    %17 = arith.addf %14, %16 : vector<16x256xf32>
    %cst_13 = arith.constant 0.000000e+00 : f32
    %18 = vector.broadcast %cst_13 : f32 to vector<16x256xf32>
    %19 = arith.maximumf %17, %18 : vector<16x256xf32>
    %c0_14 = arith.constant 0 : index
    %c0_15 = arith.constant 0 : index
    %20 = vector.load %arg6[%c0_14, %c0_15] : memref<4x16xf32, #tpu.memory_space<vmem>>, vector<4x16xf32>
    %cst_16 = arith.constant dense<0.000000e+00> : vector<4x256xf32>
    %21 = tpu.matmul %20, %19, %cst_16 {dimension_numbers = #tpu.dot_dimension_numbers<[1], [0], [0], [1], [0, 0, 1, 1], [], []>} : vector<4x16xf32>, vector<16x256xf32>, vector<4x256xf32> -> vector<4x256xf32>
    %22 = vector.extract_strided_slice %21 {offsets = [0, 0], sizes = [1, 256], strides = [1, 1]} : vector<4x256xf32> to vector<1x256xf32>
    %c0_17 = arith.constant 0 : index
    %c0_18 = arith.constant 0 : index
    %23 = vector.load %arg9[%c0_17, %c0_18] : memref<256x256xbf16, #tpu.memory_space<vmem>>, vector<256x256xbf16>
    %c0_19 = arith.constant 0 : index
    %c0_20 = arith.constant 0 : index
    %24 = vector.load %arg10[%c0_19, %c0_20] : memref<2x256xf32, #tpu.memory_space<vmem>>, vector<2x256xf32>
    %c0_21 = arith.constant 0 : index
    %c0_22 = arith.constant 0 : index
    %25 = vector.load %arg11[%c0_21, %c0_22] : memref<256x128xbf16, #tpu.memory_space<vmem>>, vector<256x128xbf16>
    %c0_23 = arith.constant 0 : index
    %c0_24 = arith.constant 0 : index
    %26 = vector.load %arg12[%c0_23, %c0_24] : memref<1x128xf32, #tpu.memory_space<vmem>>, vector<1x128xf32>
    %27 = arith.truncf %22 : vector<1x256xf32> to vector<1x256xbf16>
    %cst_25 = arith.constant dense<0.000000e+00> : vector<1x256xf32>
    %28 = tpu.matmul %27, %23, %cst_25 {dimension_numbers = #tpu.dot_dimension_numbers<[1], [0], [0], [1], [0, 0, 1, 1], [], []>} : vector<1x256xbf16>, vector<256x256xbf16>, vector<1x256xf32> -> vector<1x256xf32>
    %29 = vector.extract_strided_slice %24 {offsets = [0, 0], sizes = [1, 256], strides = [1, 1]} : vector<2x256xf32> to vector<1x256xf32>
    %30 = arith.mulf %28, %29 : vector<1x256xf32>
    %31 = vector.extract_strided_slice %24 {offsets = [1, 0], sizes = [1, 256], strides = [1, 1]} : vector<2x256xf32> to vector<1x256xf32>
    %32 = arith.addf %30, %31 : vector<1x256xf32>
    %33 = arith.truncf %32 : vector<1x256xf32> to vector<1x256xbf16>
    %cst_26 = arith.constant dense<0.000000e+00> : vector<1x128xf32>
    %34 = tpu.matmul %33, %25, %cst_26 {dimension_numbers = #tpu.dot_dimension_numbers<[1], [0], [0], [1], [0, 0, 1, 1], [], []>} : vector<1x256xbf16>, vector<256x128xbf16>, vector<1x128xf32> -> vector<1x128xf32>
    %35 = arith.addf %34, %26 : vector<1x128xf32>
    %c0_27 = arith.constant 0 : index
    %c0_28 = arith.constant 0 : index
    %c0_29 = arith.constant 0 : index
    %36 = vector.load %arg23[%c0_27, %c0_28, %c0_29] : memref<1x1x640xf32, #tpu.memory_space<vmem>>, vector<1x1x128xf32>
    %37 = vector.shape_cast %36 : vector<1x1x128xf32> to vector<1x128xf32>
    %38 = vector.shape_cast %35 : vector<1x128xf32> to vector<1x1x128xf32>
    tpu.vector_store %arg23[%c0_27, %c0_28, %c0_29], %38 {strides = array<i32>} : memref<1x1x640xf32, #tpu.memory_space<vmem>>, vector<1x1x128xf32>,
    %c0_30 = arith.constant 0 : index
    %c0_31 = arith.constant 0 : index
    %c0_32 = arith.constant 0 : index
    %39 = vector.load %arg24[%c0_30, %c0_31, %c0_32] : memref<1x1x1280xf32, #tpu.memory_space<vmem>>, vector<1x1x256xf32>
    %40 = vector.shape_cast %39 : vector<1x1x256xf32> to vector<1x256xf32>
    %41 = vector.shape_cast %32 : vector<1x256xf32> to vector<1x1x256xf32>
    tpu.vector_store %arg24[%c0_30, %c0_31, %c0_32], %41 {strides = array<i32>} : memref<1x1x1280xf32, #tpu.memory_space<vmem>>, vector<1x1x256xf32>,
    %42 = arith.truncf %32 : vector<1x256xf32> to vector<1x256xbf16>
    %c0_33 = arith.constant 0 : index
    %c0_34 = arith.constant 0 : index
    %43 = vector.load %arg17[%c0_33, %c0_34] : memref<1024x256xbf16, #tpu.memory_space<vmem>>, vector<256x256xbf16>
    %cst_35 = arith.constant dense<0.000000e+00> : vector<1x256xf32>
    %44 = tpu.matmul %42, %43, %cst_35 {dimension_numbers = #tpu.dot_dimension_numbers<[1], [0], [0], [1], [0, 0, 1, 1], [], []>} : vector<1x256xbf16>, vector<256x256xbf16>, vector<1x256xf32> -> vector<1x256xf32>
    %c0_36 = arith.constant 0 : index
    %c0_37 = arith.constant 0 : index
    %45 = vector.load %arg7[%c0_36, %c0_37] : memref<1x256xf32, #tpu.memory_space<vmem>>, vector<1x256xf32>
    %46 = vector.extract_strided_slice %21 {offsets = [1, 0], sizes = [1, 256], strides = [1, 1]} : vector<4x256xf32> to vector<1x256xf32>
    %47 = arith.subf %46, %45 : vector<1x256xf32>
    %48 = arith.truncf %47 : vector<1x256xf32> to vector<1x256xbf16>
    %c0_38 = arith.constant 0 : index
    %c0_39 = arith.constant 0 : index
    %49 = vector.load %arg8[%c0_38, %c0_39] : memref<256x256xbf16, #tpu.memory_space<vmem>>, vector<256x256xbf16>
    %cst_40 = arith.constant dense<0.000000e+00> : vector<1x256xf32>
    %50 = tpu.matmul %48, %49, %cst_40 {dimension_numbers = #tpu.dot_dimension_numbers<[1], [0], [0], [1], [0, 0, 1, 1], [], []>} : vector<1x256xbf16>, vector<256x256xbf16>, vector<1x256xf32> -> vector<1x256xf32>
    %c0_41 = arith.constant 0 : index
    %c0_42 = arith.constant 0 : index
    %c0_43 = arith.constant 0 : index
    %51 = vector.load %arg13[%c0_41, %c0_42, %c0_43] : memref<3x256x256xbf16, #tpu.memory_space<vmem>>, vector<1x256x256xbf16>
    %52 = vector.shape_cast %51 : vector<1x256x256xbf16> to vector<256x256xbf16>
    %c0_44 = arith.constant 0 : index
    %c0_45 = arith.constant 0 : index
    %c0_46 = arith.constant 0 : index
    %53 = vector.load %arg14[%c0_44, %c0_45, %c0_46] : memref<3x2x256xf32, #tpu.memory_space<vmem>>, vector<1x2x256xf32>
    %54 = vector.shape_cast %53 : vector<1x2x256xf32> to vector<2x256xf32>
    %c0_47 = arith.constant 0 : index
    %c0_48 = arith.constant 0 : index
    %c0_49 = arith.constant 0 : index
    %55 = vector.load %arg15[%c0_47, %c0_48, %c0_49] : memref<3x256x128xbf16, #tpu.memory_space<vmem>>, vector<1x256x128xbf16>
    %56 = vector.shape_cast %55 : vector<1x256x128xbf16> to vector<256x128xbf16>
    %c0_50 = arith.constant 0 : index
    %c0_51 = arith.constant 0 : index
    %c0_52 = arith.constant 0 : index
    %57 = vector.load %arg16[%c0_50, %c0_51, %c0_52] : memref<3x1x128xf32, #tpu.memory_space<vmem>>, vector<1x1x128xf32>
    %58 = vector.shape_cast %57 : vector<1x1x128xf32> to vector<1x128xf32>
    %59 = arith.truncf %50 : vector<1x256xf32> to vector<1x256xbf16>
    %cst_53 = arith.constant dense<0.000000e+00> : vector<1x256xf32>
    %60 = tpu.matmul %59, %52, %cst_53 {dimension_numbers = #tpu.dot_dimension_numbers<[1], [0], [0], [1], [0, 0, 1, 1], [], []>} : vector<1x256xbf16>, vector<256x256xbf16>, vector<1x256xf32> -> vector<1x256xf32>
    %61 = vector.extract_strided_slice %54 {offsets = [0, 0], sizes = [1, 256], strides = [1, 1]} : vector<2x256xf32> to vector<1x256xf32>
    %62 = arith.mulf %60, %61 : vector<1x256xf32>
    %63 = vector.extract_strided_slice %54 {offsets = [1, 0], sizes = [1, 256], strides = [1, 1]} : vector<2x256xf32> to vector<1x256xf32>
    %64 = arith.addf %62, %63 : vector<1x256xf32>
    %65 = arith.truncf %64 : vector<1x256xf32> to vector<1x256xbf16>
    %cst_54 = arith.constant dense<0.000000e+00> : vector<1x128xf32>
    %66 = tpu.matmul %65, %56, %cst_54 {dimension_numbers = #tpu.dot_dimension_numbers<[1], [0], [0], [1], [0, 0, 1, 1], [], []>} : vector<1x256xbf16>, vector<256x128xbf16>, vector<1x128xf32> -> vector<1x128xf32>
    %67 = arith.addf %66, %58 : vector<1x128xf32>
    %c0_55 = arith.constant 0 : index
    %c0_56 = arith.constant 0 : index
    %c128 = arith.constant 128 : index
    %68 = vector.load %arg23[%c0_55, %c0_56, %c128] : memref<1x1x640xf32, #tpu.memory_space<vmem>>, vector<1x1x128xf32>
    %69 = vector.shape_cast %68 : vector<1x1x128xf32> to vector<1x128xf32>
    %70 = vector.shape_cast %67 : vector<1x128xf32> to vector<1x1x128xf32>
    tpu.vector_store %arg23[%c0_55, %c0_56, %c128], %70 {strides = array<i32>} : memref<1x1x640xf32, #tpu.memory_space<vmem>>, vector<1x1x128xf32>,
    %c0_57 = arith.constant 0 : index
    %c0_58 = arith.constant 0 : index
    %c256 = arith.constant 256 : index
    %71 = vector.load %arg24[%c0_57, %c0_58, %c256] : memref<1x1x1280xf32, #tpu.memory_space<vmem>>, vector<1x1x256xf32>
    %72 = vector.shape_cast %71 : vector<1x1x256xf32> to vector<1x256xf32>
    %73 = vector.shape_cast %64 : vector<1x256xf32> to vector<1x1x256xf32>
    tpu.vector_store %arg24[%c0_57, %c0_58, %c256], %73 {strides = array<i32>} : memref<1x1x1280xf32, #tpu.memory_space<vmem>>, vector<1x1x256xf32>,
    %74 = arith.truncf %64 : vector<1x256xf32> to vector<1x256xbf16>
    %c256_59 = arith.constant 256 : index
    %c0_60 = arith.constant 0 : index
    %75 = vector.load %arg17[%c256_59, %c0_60] : memref<1024x256xbf16, #tpu.memory_space<vmem>>, vector<256x256xbf16>
    %cst_61 = arith.constant dense<0.000000e+00> : vector<1x256xf32>
    %76 = tpu.matmul %74, %75, %cst_61 {dimension_numbers = #tpu.dot_dimension_numbers<[1], [0], [0], [1], [0, 0, 1, 1], [], []>} : vector<1x256xbf16>, vector<256x256xbf16>, vector<1x256xf32> -> vector<1x256xf32>
    %77 = arith.addf %44, %76 : vector<1x256xf32>
    %78 = vector.extract_strided_slice %21 {offsets = [2, 0], sizes = [1, 256], strides = [1, 1]} : vector<4x256xf32> to vector<1x256xf32>
    %79 = arith.subf %78, %45 : vector<1x256xf32>
    %80 = arith.truncf %79 : vector<1x256xf32> to vector<1x256xbf16>
    %c0_62 = arith.constant 0 : index
    %c0_63 = arith.constant 0 : index
    %81 = vector.load %arg8[%c0_62, %c0_63] : memref<256x256xbf16, #tpu.memory_space<vmem>>, vector<256x256xbf16>
    %cst_64 = arith.constant dense<0.000000e+00> : vector<1x256xf32>
    %82 = tpu.matmul %80, %81, %cst_64 {dimension_numbers = #tpu.dot_dimension_numbers<[1], [0], [0], [1], [0, 0, 1, 1], [], []>} : vector<1x256xbf16>, vector<256x256xbf16>, vector<1x256xf32> -> vector<1x256xf32>
    %c1_65 = arith.constant 1 : index
    %c0_66 = arith.constant 0 : index
    %c0_67 = arith.constant 0 : index
    %83 = vector.load %arg13[%c1_65, %c0_66, %c0_67] : memref<3x256x256xbf16, #tpu.memory_space<vmem>>, vector<1x256x256xbf16>
    %84 = vector.shape_cast %83 : vector<1x256x256xbf16> to vector<256x256xbf16>
    %c1_68 = arith.constant 1 : index
    %c0_69 = arith.constant 0 : index
    %c0_70 = arith.constant 0 : index
    %85 = vector.load %arg14[%c1_68, %c0_69, %c0_70] : memref<3x2x256xf32, #tpu.memory_space<vmem>>, vector<1x2x256xf32>
    %86 = vector.shape_cast %85 : vector<1x2x256xf32> to vector<2x256xf32>
    %c1_71 = arith.constant 1 : index
    %c0_72 = arith.constant 0 : index
    %c0_73 = arith.constant 0 : index
    %87 = vector.load %arg15[%c1_71, %c0_72, %c0_73] : memref<3x256x128xbf16, #tpu.memory_space<vmem>>, vector<1x256x128xbf16>
    %88 = vector.shape_cast %87 : vector<1x256x128xbf16> to vector<256x128xbf16>
    %c1_74 = arith.constant 1 : index
    %c0_75 = arith.constant 0 : index
    %c0_76 = arith.constant 0 : index
    %89 = vector.load %arg16[%c1_74, %c0_75, %c0_76] : memref<3x1x128xf32, #tpu.memory_space<vmem>>, vector<1x1x128xf32>
    %90 = vector.shape_cast %89 : vector<1x1x128xf32> to vector<1x128xf32>
    %91 = arith.truncf %82 : vector<1x256xf32> to vector<1x256xbf16>
    %cst_77 = arith.constant dense<0.000000e+00> : vector<1x256xf32>
    %92 = tpu.matmul %91, %84, %cst_77 {dimension_numbers = #tpu.dot_dimension_numbers<[1], [0], [0], [1], [0, 0, 1, 1], [], []>} : vector<1x256xbf16>, vector<256x256xbf16>, vector<1x256xf32> -> vector<1x256xf32>
    %93 = vector.extract_strided_slice %86 {offsets = [0, 0], sizes = [1, 256], strides = [1, 1]} : vector<2x256xf32> to vector<1x256xf32>
    %94 = arith.mulf %92, %93 : vector<1x256xf32>
    %95 = vector.extract_strided_slice %86 {offsets = [1, 0], sizes = [1, 256], strides = [1, 1]} : vector<2x256xf32> to vector<1x256xf32>
    %96 = arith.addf %94, %95 : vector<1x256xf32>
    %97 = arith.truncf %96 : vector<1x256xf32> to vector<1x256xbf16>
    %cst_78 = arith.constant dense<0.000000e+00> : vector<1x128xf32>
    %98 = tpu.matmul %97, %88, %cst_78 {dimension_numbers = #tpu.dot_dimension_numbers<[1], [0], [0], [1], [0, 0, 1, 1], [], []>} : vector<1x256xbf16>, vector<256x128xbf16>, vector<1x128xf32> -> vector<1x128xf32>
    %99 = arith.addf %98, %90 : vector<1x128xf32>
    %c0_79 = arith.constant 0 : index
    %c0_80 = arith.constant 0 : index
    %c256_81 = arith.constant 256 : index
    %100 = vector.load %arg23[%c0_79, %c0_80, %c256_81] : memref<1x1x640xf32, #tpu.memory_space<vmem>>, vector<1x1x128xf32>
    %101 = vector.shape_cast %100 : vector<1x1x128xf32> to vector<1x128xf32>
    %102 = vector.shape_cast %99 : vector<1x128xf32> to vector<1x1x128xf32>
    tpu.vector_store %arg23[%c0_79, %c0_80, %c256_81], %102 {strides = array<i32>} : memref<1x1x640xf32, #tpu.memory_space<vmem>>, vector<1x1x128xf32>,
    %c0_82 = arith.constant 0 : index
    %c0_83 = arith.constant 0 : index
    %c512 = arith.constant 512 : index
    %103 = vector.load %arg24[%c0_82, %c0_83, %c512] : memref<1x1x1280xf32, #tpu.memory_space<vmem>>, vector<1x1x256xf32>
    %104 = vector.shape_cast %103 : vector<1x1x256xf32> to vector<1x256xf32>
    %105 = vector.shape_cast %96 : vector<1x256xf32> to vector<1x1x256xf32>
    tpu.vector_store %arg24[%c0_82, %c0_83, %c512], %105 {strides = array<i32>} : memref<1x1x1280xf32, #tpu.memory_space<vmem>>, vector<1x1x256xf32>,
    %106 = arith.truncf %96 : vector<1x256xf32> to vector<1x256xbf16>
    %c512_84 = arith.constant 512 : index
    %c0_85 = arith.constant 0 : index
    %107 = vector.load %arg17[%c512_84, %c0_85] : memref<1024x256xbf16, #tpu.memory_space<vmem>>, vector<256x256xbf16>
    %cst_86 = arith.constant dense<0.000000e+00> : vector<1x256xf32>
    %108 = tpu.matmul %106, %107, %cst_86 {dimension_numbers = #tpu.dot_dimension_numbers<[1], [0], [0], [1], [0, 0, 1, 1], [], []>} : vector<1x256xbf16>, vector<256x256xbf16>, vector<1x256xf32> -> vector<1x256xf32>
    %109 = arith.addf %77, %108 : vector<1x256xf32>
    %110 = vector.extract_strided_slice %21 {offsets = [3, 0], sizes = [1, 256], strides = [1, 1]} : vector<4x256xf32> to vector<1x256xf32>
    %111 = arith.subf %110, %45 : vector<1x256xf32>
    %112 = arith.truncf %111 : vector<1x256xf32> to vector<1x256xbf16>
    %c0_87 = arith.constant 0 : index
    %c0_88 = arith.constant 0 : index
    %113 = vector.load %arg8[%c0_87, %c0_88] : memref<256x256xbf16, #tpu.memory_space<vmem>>, vector<256x256xbf16>
    %cst_89 = arith.constant dense<0.000000e+00> : vector<1x256xf32>
    %114 = tpu.matmul %112, %113, %cst_89 {dimension_numbers = #tpu.dot_dimension_numbers<[1], [0], [0], [1], [0, 0, 1, 1], [], []>} : vector<1x256xbf16>, vector<256x256xbf16>, vector<1x256xf32> -> vector<1x256xf32>
    %c2 = arith.constant 2 : index
    %c0_90 = arith.constant 0 : index
    %c0_91 = arith.constant 0 : index
    %115 = vector.load %arg13[%c2, %c0_90, %c0_91] : memref<3x256x256xbf16, #tpu.memory_space<vmem>>, vector<1x256x256xbf16>
    %116 = vector.shape_cast %115 : vector<1x256x256xbf16> to vector<256x256xbf16>
    %c2_92 = arith.constant 2 : index
    %c0_93 = arith.constant 0 : index
    %c0_94 = arith.constant 0 : index
    %117 = vector.load %arg14[%c2_92, %c0_93, %c0_94] : memref<3x2x256xf32, #tpu.memory_space<vmem>>, vector<1x2x256xf32>
    %118 = vector.shape_cast %117 : vector<1x2x256xf32> to vector<2x256xf32>
    %c2_95 = arith.constant 2 : index
    %c0_96 = arith.constant 0 : index
    %c0_97 = arith.constant 0 : index
    %119 = vector.load %arg15[%c2_95, %c0_96, %c0_97] : memref<3x256x128xbf16, #tpu.memory_space<vmem>>, vector<1x256x128xbf16>
    %120 = vector.shape_cast %119 : vector<1x256x128xbf16> to vector<256x128xbf16>
    %c2_98 = arith.constant 2 : index
    %c0_99 = arith.constant 0 : index
    %c0_100 = arith.constant 0 : index
    %121 = vector.load %arg16[%c2_98, %c0_99, %c0_100] : memref<3x1x128xf32, #tpu.memory_space<vmem>>, vector<1x1x128xf32>
    %122 = vector.shape_cast %121 : vector<1x1x128xf32> to vector<1x128xf32>
    %123 = arith.truncf %114 : vector<1x256xf32> to vector<1x256xbf16>
    %cst_101 = arith.constant dense<0.000000e+00> : vector<1x256xf32>
    %124 = tpu.matmul %123, %116, %cst_101 {dimension_numbers = #tpu.dot_dimension_numbers<[1], [0], [0], [1], [0, 0, 1, 1], [], []>} : vector<1x256xbf16>, vector<256x256xbf16>, vector<1x256xf32> -> vector<1x256xf32>
    %125 = vector.extract_strided_slice %118 {offsets = [0, 0], sizes = [1, 256], strides = [1, 1]} : vector<2x256xf32> to vector<1x256xf32>
    %126 = arith.mulf %124, %125 : vector<1x256xf32>
    %127 = vector.extract_strided_slice %118 {offsets = [1, 0], sizes = [1, 256], strides = [1, 1]} : vector<2x256xf32> to vector<1x256xf32>
    %128 = arith.addf %126, %127 : vector<1x256xf32>
    %129 = arith.truncf %128 : vector<1x256xf32> to vector<1x256xbf16>
    %cst_102 = arith.constant dense<0.000000e+00> : vector<1x128xf32>
    %130 = tpu.matmul %129, %120, %cst_102 {dimension_numbers = #tpu.dot_dimension_numbers<[1], [0], [0], [1], [0, 0, 1, 1], [], []>} : vector<1x256xbf16>, vector<256x128xbf16>, vector<1x128xf32> -> vector<1x128xf32>
    %131 = arith.addf %130, %122 : vector<1x128xf32>
    %c0_103 = arith.constant 0 : index
    %c0_104 = arith.constant 0 : index
    %c384 = arith.constant 384 : index
    %132 = vector.load %arg23[%c0_103, %c0_104, %c384] : memref<1x1x640xf32, #tpu.memory_space<vmem>>, vector<1x1x128xf32>
    %133 = vector.shape_cast %132 : vector<1x1x128xf32> to vector<1x128xf32>
    %134 = vector.shape_cast %131 : vector<1x128xf32> to vector<1x1x128xf32>
    tpu.vector_store %arg23[%c0_103, %c0_104, %c384], %134 {strides = array<i32>} : memref<1x1x640xf32, #tpu.memory_space<vmem>>, vector<1x1x128xf32>,
    %c0_105 = arith.constant 0 : index
    %c0_106 = arith.constant 0 : index
    %c768 = arith.constant 768 : index
    %135 = vector.load %arg24[%c0_105, %c0_106, %c768] : memref<1x1x1280xf32, #tpu.memory_space<vmem>>, vector<1x1x256xf32>
    %136 = vector.shape_cast %135 : vector<1x1x256xf32> to vector<1x256xf32>
    %137 = vector.shape_cast %128 : vector<1x256xf32> to vector<1x1x256xf32>
    tpu.vector_store %arg24[%c0_105, %c0_106, %c768], %137 {strides = array<i32>} : memref<1x1x1280xf32, #tpu.memory_space<vmem>>, vector<1x1x256xf32>,
    %138 = arith.truncf %128 : vector<1x256xf32> to vector<1x256xbf16>
    %c768_107 = arith.constant 768 : index
    %c0_108 = arith.constant 0 : index
    %139 = vector.load %arg17[%c768_107, %c0_108] : memref<1024x256xbf16, #tpu.memory_space<vmem>>, vector<256x256xbf16>
    %cst_109 = arith.constant dense<0.000000e+00> : vector<1x256xf32>
    %140 = tpu.matmul %138, %139, %cst_109 {dimension_numbers = #tpu.dot_dimension_numbers<[1], [0], [0], [1], [0, 0, 1, 1], [], []>} : vector<1x256xbf16>, vector<256x256xbf16>, vector<1x256xf32> -> vector<1x256xf32>
    %141 = arith.addf %109, %140 : vector<1x256xf32>
    %c0_110 = arith.constant 0 : index
    %c0_111 = arith.constant 0 : index
    %142 = vector.load %arg18[%c0_110, %c0_111] : memref<2x256xf32, #tpu.memory_space<vmem>>, vector<1x256xf32>
    %143 = arith.mulf %141, %142 : vector<1x256xf32>
    %c1_112 = arith.constant 1 : index
    %c0_113 = arith.constant 0 : index
    %144 = vector.load %arg18[%c1_112, %c0_113] : memref<2x256xf32, #tpu.memory_space<vmem>>, vector<1x256xf32>
    %145 = arith.addf %143, %144 : vector<1x256xf32>
    %cst_114 = arith.constant 0.000000e+00 : f32
    %146 = vector.broadcast %cst_114 : f32 to vector<1x256xf32>
    %147 = arith.maximumf %145, %146 : vector<1x256xf32>
    %c0_115 = arith.constant 0 : index
    %c0_116 = arith.constant 0 : index
    %148 = vector.load %arg19[%c0_115, %c0_116] : memref<256x256xbf16, #tpu.memory_space<vmem>>, vector<256x256xbf16>
    %c0_117 = arith.constant 0 : index
    %c0_118 = arith.constant 0 : index
    %149 = vector.load %arg20[%c0_117, %c0_118] : memref<2x256xf32, #tpu.memory_space<vmem>>, vector<2x256xf32>
    %c0_119 = arith.constant 0 : index
    %c0_120 = arith.constant 0 : index
    %150 = vector.load %arg21[%c0_119, %c0_120] : memref<256x128xbf16, #tpu.memory_space<vmem>>, vector<256x128xbf16>
    %c0_121 = arith.constant 0 : index
    %c0_122 = arith.constant 0 : index
    %151 = vector.load %arg22[%c0_121, %c0_122] : memref<1x128xf32, #tpu.memory_space<vmem>>, vector<1x128xf32>
    %152 = arith.truncf %147 : vector<1x256xf32> to vector<1x256xbf16>
    %cst_123 = arith.constant dense<0.000000e+00> : vector<1x256xf32>
    %153 = tpu.matmul %152, %148, %cst_123 {dimension_numbers = #tpu.dot_dimension_numbers<[1], [0], [0], [1], [0, 0, 1, 1], [], []>} : vector<1x256xbf16>, vector<256x256xbf16>, vector<1x256xf32> -> vector<1x256xf32>
    %154 = vector.extract_strided_slice %149 {offsets = [0, 0], sizes = [1, 256], strides = [1, 1]} : vector<2x256xf32> to vector<1x256xf32>
    %155 = arith.mulf %153, %154 : vector<1x256xf32>
    %156 = vector.extract_strided_slice %149 {offsets = [1, 0], sizes = [1, 256], strides = [1, 1]} : vector<2x256xf32> to vector<1x256xf32>
    %157 = arith.addf %155, %156 : vector<1x256xf32>
    %158 = arith.truncf %157 : vector<1x256xf32> to vector<1x256xbf16>
    %cst_124 = arith.constant dense<0.000000e+00> : vector<1x128xf32>
    %159 = tpu.matmul %158, %150, %cst_124 {dimension_numbers = #tpu.dot_dimension_numbers<[1], [0], [0], [1], [0, 0, 1, 1], [], []>} : vector<1x256xbf16>, vector<256x128xbf16>, vector<1x128xf32> -> vector<1x128xf32>
    %160 = arith.addf %159, %151 : vector<1x128xf32>
    %c0_125 = arith.constant 0 : index
    %c0_126 = arith.constant 0 : index
    %c512_127 = arith.constant 512 : index
    %161 = vector.load %arg23[%c0_125, %c0_126, %c512_127] : memref<1x1x640xf32, #tpu.memory_space<vmem>>, vector<1x1x128xf32>
    %162 = vector.shape_cast %161 : vector<1x1x128xf32> to vector<1x128xf32>
    %163 = vector.shape_cast %160 : vector<1x128xf32> to vector<1x1x128xf32>
    tpu.vector_store %arg23[%c0_125, %c0_126, %c512_127], %163 {strides = array<i32>} : memref<1x1x640xf32, #tpu.memory_space<vmem>>, vector<1x1x128xf32>,
    %c0_128 = arith.constant 0 : index
    %c0_129 = arith.constant 0 : index
    %c1024 = arith.constant 1024 : index
    %164 = vector.load %arg24[%c0_128, %c0_129, %c1024] : memref<1x1x1280xf32, #tpu.memory_space<vmem>>, vector<1x1x256xf32>
    %165 = vector.shape_cast %164 : vector<1x1x256xf32> to vector<1x256xf32>
    %166 = vector.shape_cast %157 : vector<1x256xf32> to vector<1x1x256xf32>
    tpu.vector_store %arg24[%c0_128, %c0_129, %c1024], %166 {strides = array<i32>} : memref<1x1x1280xf32, #tpu.memory_space<vmem>>, vector<1x1x256xf32>,
    return
  }
  func.func @transform_0(%arg0: i32) -> (i32, i32, i32) {
    %c0_i32 = arith.constant 0 : i32
    %c0_i32_0 = arith.constant 0 : i32
    %c0_i32_1 = arith.constant 0 : i32
    return %arg0, %c0_i32, %c0_i32_0 : i32, i32, i32
  }
  func.func @transform_1(%arg0: i32) -> (i32, i32) {
    %c0_i32 = arith.constant 0 : i32
    %c0_i32_0 = arith.constant 0 : i32
    %c0_i32_1 = arith.constant 0 : i32
    return %c0_i32, %c0_i32_0 : i32, i32
  }
  func.func @transform_2(%arg0: i32) -> (i32, i32) {
    %c0_i32 = arith.constant 0 : i32
    %c0_i32_0 = arith.constant 0 : i32
    %c0_i32_1 = arith.constant 0 : i32
    return %c0_i32, %c0_i32_0 : i32, i32
  }
  func.func @transform_3(%arg0: i32) -> (i32, i32) {
    %c0_i32 = arith.constant 0 : i32
    %c0_i32_0 = arith.constant 0 : i32
    %c0_i32_1 = arith.constant 0 : i32
    return %c0_i32, %c0_i32_0 : i32, i32
  }
  func.func @transform_4(%arg0: i32) -> (i32, i32) {
    %c0_i32 = arith.constant 0 : i32
    %c0_i32_0 = arith.constant 0 : i32
    %c0_i32_1 = arith.constant 0 : i32
    return %c0_i32, %c0_i32_0 : i32, i32
  }
  func.func @transform_5(%arg0: i32) -> (i32, i32) {
    %c0_i32 = arith.constant 0 : i32
    %c0_i32_0 = arith.constant 0 : i32
    %c0_i32_1 = arith.constant 0 : i32
    return %c0_i32, %c0_i32_0 : i32, i32
  }
  func.func @transform_6(%arg0: i32) -> (i32, i32) {
    %c0_i32 = arith.constant 0 : i32
    %c0_i32_0 = arith.constant 0 : i32
    %c0_i32_1 = arith.constant 0 : i32
    return %c0_i32, %c0_i32_0 : i32, i32
  }
  func.func @transform_7(%arg0: i32) -> (i32, i32) {
    %c0_i32 = arith.constant 0 : i32
    %c0_i32_0 = arith.constant 0 : i32
    %c0_i32_1 = arith.constant 0 : i32
    return %c0_i32, %c0_i32_0 : i32, i32
  }
  func.func @transform_8(%arg0: i32) -> (i32, i32) {
    %c0_i32 = arith.constant 0 : i32
    %c0_i32_0 = arith.constant 0 : i32
    %c0_i32_1 = arith.constant 0 : i32
    return %c0_i32, %c0_i32_0 : i32, i32
  }
  func.func @transform_9(%arg0: i32) -> (i32, i32) {
    %c0_i32 = arith.constant 0 : i32
    %c0_i32_0 = arith.constant 0 : i32
    %c0_i32_1 = arith.constant 0 : i32
    return %c0_i32, %c0_i32_0 : i32, i32
  }
  func.func @transform_10(%arg0: i32) -> (i32, i32) {
    %c0_i32 = arith.constant 0 : i32
    %c0_i32_0 = arith.constant 0 : i32
    %c0_i32_1 = arith.constant 0 : i32
    return %c0_i32, %c0_i32_0 : i32, i32
  }
  func.func @transform_11(%arg0: i32) -> (i32, i32) {
    %c0_i32 = arith.constant 0 : i32
    %c0_i32_0 = arith.constant 0 : i32
    %c0_i32_1 = arith.constant 0 : i32
    return %c0_i32, %c0_i32_0 : i32, i32
  }
  func.func @transform_12(%arg0: i32) -> (i32, i32, i32) {
    %c0_i32 = arith.constant 0 : i32
    %c0_i32_0 = arith.constant 0 : i32
    %c0_i32_1 = arith.constant 0 : i32
    %c0_i32_2 = arith.constant 0 : i32
    return %c0_i32, %c0_i32_0, %c0_i32_1 : i32, i32, i32
  }
  func.func @transform_13(%arg0: i32) -> (i32, i32, i32) {
    %c0_i32 = arith.constant 0 : i32
    %c0_i32_0 = arith.constant 0 : i32
    %c0_i32_1 = arith.constant 0 : i32
    %c0_i32_2 = arith.constant 0 : i32
    return %c0_i32, %c0_i32_0, %c0_i32_1 : i32, i32, i32
  }
  func.func @transform_14(%arg0: i32) -> (i32, i32, i32) {
    %c0_i32 = arith.constant 0 : i32
    %c0_i32_0 = arith.constant 0 : i32
    %c0_i32_1 = arith.constant 0 : i32
    %c0_i32_2 = arith.constant 0 : i32
    return %c0_i32, %c0_i32_0, %c0_i32_1 : i32, i32, i32
  }
  func.func @transform_15(%arg0: i32) -> (i32, i32, i32) {
    %c0_i32 = arith.constant 0 : i32
    %c0_i32_0 = arith.constant 0 : i32
    %c0_i32_1 = arith.constant 0 : i32
    %c0_i32_2 = arith.constant 0 : i32
    return %c0_i32, %c0_i32_0, %c0_i32_1 : i32, i32, i32
  }
  func.func @transform_16(%arg0: i32) -> (i32, i32) {
    %c0_i32 = arith.constant 0 : i32
    %c0_i32_0 = arith.constant 0 : i32
    %c0_i32_1 = arith.constant 0 : i32
    return %c0_i32, %c0_i32_0 : i32, i32
  }
  func.func @transform_17(%arg0: i32) -> (i32, i32) {
    %c0_i32 = arith.constant 0 : i32
    %c0_i32_0 = arith.constant 0 : i32
    %c0_i32_1 = arith.constant 0 : i32
    return %c0_i32, %c0_i32_0 : i32, i32
  }
  func.func @transform_18(%arg0: i32) -> (i32, i32) {
    %c0_i32 = arith.constant 0 : i32
    %c0_i32_0 = arith.constant 0 : i32
    %c0_i32_1 = arith.constant 0 : i32
    return %c0_i32, %c0_i32_0 : i32, i32
  }
  func.func @transform_19(%arg0: i32) -> (i32, i32) {
    %c0_i32 = arith.constant 0 : i32
    %c0_i32_0 = arith.constant 0 : i32
    %c0_i32_1 = arith.constant 0 : i32
    return %c0_i32, %c0_i32_0 : i32, i32
  }
  func.func @transform_20(%arg0: i32) -> (i32, i32) {
    %c0_i32 = arith.constant 0 : i32
    %c0_i32_0 = arith.constant 0 : i32
    %c0_i32_1 = arith.constant 0 : i32
    return %c0_i32, %c0_i32_0 : i32, i32
  }
  func.func @transform_21(%arg0: i32) -> (i32, i32) {
    %c0_i32 = arith.constant 0 : i32
    %c0_i32_0 = arith.constant 0 : i32
    %c0_i32_1 = arith.constant 0 : i32
    return %c0_i32, %c0_i32_0 : i32, i32
  }
  func.func @transform_22(%arg0: i32) -> (i32, i32, i32) {
    %c0_i32 = arith.constant 0 : i32
    %c0_i32_0 = arith.constant 0 : i32
    %c0_i32_1 = arith.constant 0 : i32
    return %arg0, %c0_i32, %c0_i32_0 : i32, i32, i32
  }
  func.func @transform_23(%arg0: i32) -> (i32, i32, i32) {
    %c0_i32 = arith.constant 0 : i32
    %c0_i32_0 = arith.constant 0 : i32
    %c0_i32_1 = arith.constant 0 : i32
    return %arg0, %c0_i32, %c0_i32_0 : i32, i32, i32
  }
}

</mosaic_0001>

<llo_original>
// kernel: fsra_forward.1
$region0: #{fsra_forward.1}
  #allocation0 [shape = 'u32[]', space=smem, size = 0x4, offset = 0x4, fixed_abs, tag = 'smem constant byte address 0x4 - core index']
  #allocation1 [shape = 'u32[72,128]{1,0:T(1,128)}', space=vmem, size = 0x9000, scoped, tag = 'internal scratch']
  %s0 = inlined_call_operand.vmem [shape: bf16[2,16,128], index: 0, kind: input, shape index: {}]
  %s1 = inlined_call_operand.hbm [shape: bf16[128,256], index: 1, kind: input, shape index: {}]
  %s2 = inlined_call_operand.hbm [shape: f32[1,256], index: 2, kind: input, shape index: {}]
  %s3 = inlined_call_operand.vmem [shape: bf16[256,256], index: 3, kind: input, shape index: {}]
  %s4 = inlined_call_operand.hbm [shape: f32[2,256], index: 4, kind: input, shape index: {}]
  %s5 = inlined_call_operand.hbm [shape: f32[4,16], index: 5, kind: input, shape index: {}]
  %s6 = inlined_call_operand.hbm [shape: f32[1,256], index: 6, kind: input, shape index: {}]
  %s7 = inlined_call_operand.hbm [shape: bf16[256,256], index: 7, kind: input, shape index: {}]
  %s8 = inlined_call_operand.hbm [shape: bf16[256,256], index: 8, kind: input, shape index: {}]
  %s9 = inlined_call_operand.hbm [shape: f32[2,256], index: 9, kind: input, shape index: {}]
  %s10 = inlined_call_operand.hbm [shape: bf16[256,128], index: 10, kind: input, shape index: {}]
  %s11 = inlined_call_operand.hbm [shape: f32[1,128], index: 11, kind: input, shape index: {}]
  %s12 = inlined_call_operand.vmem [shape: bf16[3,256,256], index: 12, kind: input, shape index: {}]
  %s13 = inlined_call_operand.hbm [shape: f32[3,2,256], index: 13, kind: input, shape index: {}]
  %s14 = inlined_call_operand.hbm [shape: bf16[3,256,128], index: 14, kind: input, shape index: {}]
  %s15 = inlined_call_operand.vmem [shape: f32[3,1,128], index: 15, kind: input, shape index: {}]
  %s16 = inlined_call_operand.hbm [shape: bf16[1024,256], index: 16, kind: input, shape index: {}]
  %s17 = inlined_call_operand.hbm [shape: f32[2,256], index: 17, kind: input, shape index: {}]
  %s18 = inlined_call_operand.hbm [shape: bf16[256,256], index: 18, kind: input, shape index: {}]
  %s19 = inlined_call_operand.hbm [shape: f32[2,256], index: 19, kind: input, shape index: {}]
  %s20 = inlined_call_operand.hbm [shape: bf16[256,128], index: 20, kind: input, shape index: {}]
  %s21 = inlined_call_operand.hbm [shape: f32[1,128], index: 21, kind: input, shape index: {}]
  %s22 = inlined_call_operand.vmem [shape: f32[2,1,640], index: 22, kind: output, shape index: {0}]
  %s23 = inlined_call_operand.vmem [shape: f32[2,1,1280], index: 23, kind: output, shape index: {1}]
  %24 = xla_tuple %s22, %s23
  %s25 = sld [smem:[#allocation0]]
  $region201: #{fsra_forward.1} parent=0
    _
  %s27 = ssub.s32 1, %s25
  %s28 = scalar_select 0, %s27, %s25
  $region1: #{fsra_forward.1} parent=0
    #allocation2 [shape = 'u8[65536]{0}', space=vmem, size = 0x10000, scoped, tag = 'input window, operand 1, single buffered']
    #allocation3 [shape = 's32[2]{0}', space=sflag, size = 0x8, scoped, tag = 'scoped memory for fsra_forward.1']
    #allocation4 [shape = 'u8[1024]{0}', space=vmem, size = 0x400, scoped, tag = 'input window, operand 2, single buffered']
    #allocation5 [shape = 's32[1]{0}', space=sflag, size = 0x4, scoped, tag = 'scoped memory for fsra_forward.1']
    #allocation6 [shape = 'u8[2048]{0}', space=vmem, size = 0x800, scoped, tag = 'input window, operand 4, single buffered']
    #allocation7 [shape = 'u8[2048]{0}', space=vmem, size = 0x800, scoped, tag = 'input window, operand 5, single buffered']
    #allocation8 [shape = 's32[1]{0}', space=sflag, size = 0x4, scoped, tag = 'scoped memory for fsra_forward.1']
    #allocation9 [shape = 'u8[1024]{0}', space=vmem, size = 0x400, scoped, tag = 'input window, operand 6, single buffered']
    #allocation10 [shape = 'u8[131072]{0}', space=vmem, size = 0x20000, scoped, tag = 'input window, operand 7, single buffered']
    #allocation11 [shape = 's32[1]{0}', space=sflag, size = 0x4, scoped, tag = 'scoped memory for fsra_forward.1']
    #allocation12 [shape = 'u8[131072]{0}', space=vmem, size = 0x20000, scoped, tag = 'input window, operand 8, single buffered']
    #allocation13 [shape = 'u8[2048]{0}', space=vmem, size = 0x800, scoped, tag = 'input window, operand 9, single buffered']
    #allocation14 [shape = 's32[1]{0}', space=sflag, size = 0x4, scoped, tag = 'scoped memory for fsra_forward.1']
    #allocation15 [shape = 'u8[65536]{0}', space=vmem, size = 0x10000, scoped, tag = 'input window, operand 10, single buffered']
    #allocation16 [shape = 'u8[512]{0}', space=vmem, size = 0x400, scoped, tag = 'input window, operand 11, single buffered']
    #allocation17 [shape = 's32[1]{0}', space=sflag, size = 0x4, scoped, tag = 'scoped memory for fsra_forward.1']
    #allocation18 [shape = 'u8[6144]{0}', space=vmem, size = 0x1800, scoped, tag = 'input window, operand 13, single buffered']
    #allocation19 [shape = 'u8[196608]{0}', space=vmem, size = 0x30000, scoped, tag = 'input window, operand 14, single buffered']
    #allocation20 [shape = 's32[1]{0}', space=sflag, size = 0x4, scoped, tag = 'scoped memory for fsra_forward.1']
    #allocation21 [shape = 'u8[524288]{0}', space=vmem, size = 0x80000, scoped, tag = 'input window, operand 16, single buffered']
    #allocation22 [shape = 'u8[2048]{0}', space=vmem, size = 0x800, scoped, tag = 'input window, operand 17, single buffered']
    #allocation23 [shape = 's32[1]{0}', space=sflag, size = 0x4, scoped, tag = 'scoped memory for fsra_forward.1']
    #allocation24 [shape = 'u8[131072]{0}', space=vmem, size = 0x20000, scoped, tag = 'input window, operand 18, single buffered']
    #allocation25 [shape = 'u8[2048]{0}', space=vmem, size = 0x800, scoped, tag = 'input window, operand 19, single buffered']
    #allocation26 [shape = 's32[1]{0}', space=sflag, size = 0x4, scoped, tag = 'scoped memory for fsra_forward.1']
    #allocation27 [shape = 'u8[65536]{0}', space=vmem, size = 0x10000, scoped, tag = 'input window, operand 20, single buffered']
    #allocation28 [shape = 'u8[512]{0}', space=vmem, size = 0x400, scoped, tag = 'input window, operand 21, single buffered']
    #allocation29 [shape = 's32[1]{0}', space=sflag, size = 0x4, scoped, tag = 'scoped memory for fsra_forward.1']
    %29 = vsyncpa [#allocation3], 0
    %30 = vsyncpa [#allocation5], 0
    %31 = vsyncpa [#allocation8], 0
    %32 = vsyncpa [#allocation11], 0
    %33 = vsyncpa [#allocation14], 0
    %34 = vsyncpa [#allocation17], 0
    %35 = vsyncpa [#allocation20], 0
    %36 = vsyncpa [#allocation23], 0
    %37 = vsyncpa [#allocation26], 0
    %38 = vsyncpa [#allocation29], 0
    loop: start=0, step=1, limit=4
    $region2: #{fsra_forward.1} parent=1 // loop_pre_header
      _
    $region3: #{fsra_forward.1} parent=1 // loop_header
      %s40 = sphi 0, %s44
      %p41 = scmp.ge.s32.totalorder %s40, 4
      %s50 = sphi 0, %s52
      %s53 = sphi 0, %s50
      %s54 = sphi 0, %s53
      %s70 = sphi 0, %s54
      %s74 = sphi 0, %s74
      %s76 = sphi 0, %s74
      %s77 = sphi 0, %s76
      %s91 = sphi 0, %s77
      %s95 = sphi 0, %s95
      %s97 = sphi 0, %s95
      %s98 = sphi 0, %s97
      %s112 = sphi 0, %s98
      %s116 = sphi 0, %s116
      %s118 = sphi 0, %s116
      %s119 = sphi 0, %s118
      %s133 = sphi 0, %s119
      %s137 = sphi 0, %s137
      %s139 = sphi 0, %s137
      %s140 = sphi 0, %s139
      %s154 = sphi 0, %s140
      %s158 = sphi 0, %s158
      %s160 = sphi 0, %s158
      %s161 = sphi 0, %s160
      %s175 = sphi 0, %s161
      %s179 = sphi 0, %s179
      %s181 = sphi 0, %s179
      %s182 = sphi 0, %s181
      %s196 = sphi 0, %s182
      %s200 = sphi 0, %s200
      %s202 = sphi 0, %s200
      %s203 = sphi 0, %s202
      %s217 = sphi 0, %s203
      %s221 = sphi 0, %s221
      %s223 = sphi 0, %s221
      %s224 = sphi 0, %s223
      %s238 = sphi 0, %s224
      %s242 = sphi 0, %s242
      %s244 = sphi 0, %s242
      %s245 = sphi 0, %s244
      %s259 = sphi 0, %s245
      %s263 = sphi 0, %s263
      %s265 = sphi 0, %s263
      %s266 = sphi 0, %s265
      %s280 = sphi 0, %s266
      %s284 = sphi 0, %s284
      %s286 = sphi 0, %s284
      %s287 = sphi 0, %s286
      %s301 = sphi 0, %s287
      %s305 = sphi 0, %s305
      %s307 = sphi 0, %s305
      %s308 = sphi 0, %s307
      %s322 = sphi 0, %s308
      %s326 = sphi 0, %s326
      %s328 = sphi 0, %s326
      %s329 = sphi 0, %s328
      %s343 = sphi 0, %s329
      %s347 = sphi 0, %s347
      %s349 = sphi 0, %s347
      %s350 = sphi 0, %s349
      %s364 = sphi 0, %s350
      %s368 = sphi 0, %s368
      %s370 = sphi 0, %s368
      %s371 = sphi 0, %s370
      %s385 = sphi 0, %s371
      %s389 = sphi 0, %s389
      %s391 = sphi 0, %s389
      %s392 = sphi 0, %s391
      %s406 = sphi 0, %s392
      %s410 = sphi 0, %s410
      %s412 = sphi 0, %s410
      %s413 = sphi 0, %s412
      %s427 = sphi 0, %s413
      %s431 = sphi 0, %s431
      %s433 = sphi 0, %s431
      %s434 = sphi 0, %s433
      %s448 = sphi 0, %s434
      %s452 = sphi 0, %s452
      %s454 = sphi 0, %s452
      %s455 = sphi 0, %s454
      %s469 = sphi 0, %s455
      %s473 = sphi 0, %s473
      %s475 = sphi 0, %s473
      %s476 = sphi 0, %s475
      %s490 = sphi 0, %s476
      %s494 = sphi 0, %s494
      %s496 = sphi 0, %s494
      %s497 = sphi 0, %s496
      %s511 = sphi 0, %s497
      %s517 = sphi 0, %s519
      %s520 = sphi 0, %s517
      %s521 = sphi 0, %s520
      %s537 = sphi 0, %s521
      %s543 = sphi 0, %s545
      %s546 = sphi 0, %s543
      %s547 = sphi 0, %s546
      %s563 = sphi 0, %s547
    $region4: #{fsra_forward.1} parent=1 // loop_header_branch
      %43 = sbr.rel (%p41) target = $region8
    $region5: #{fsra_forward.1} parent=1 // loop_body
      %s45 = ssub.s32 %s40, 1
      %s46 = ssub.s32 %s40, 2
      %s47 = sadd.s32 %s40, 1
      %s48 = ssub.s32 %s40, %s47
      %p49 = scmp.eq.s32.totalorder %s48, 0
      %s51 = sadd.s32 %s50, 1
      %s52 = scalar_select %p49, %s50, %s51
      %p55 = pneg %p49
      %p56 = scmp.eq.s32.totalorder %s40, 1
      %p57 = por %p55, %p56
      %p58 = scmp.ne.s32.totalorder %s50, %s53
      %p59 = scmp.eq.s32.totalorder %s40, 0
      %p60 = por %p58, %p59
      %p61 = scmp.ne.s32.totalorder %s50, %s53
      %p62 = scmp.eq.s32.totalorder %s45, 1
      %p63 = por %p61, %p62
      %p64 = scmp.ne.s32.totalorder %s53, %s54
      %p65 = scmp.eq.s32.totalorder %s45, 0
      %p66 = por %p64, %p65
      %p67 = scmp.ne.s32.totalorder %s53, %s54
      %p68 = scmp.eq.s32.totalorder %s46, 1
      %p69 = por %p67, %p68
      %p71 = scmp.ne.s32.totalorder %s54, %s70
      %p72 = scmp.eq.s32.totalorder %s46, 0
      %p73 = por %p71, %p72
      %s75 = sadd.s32 %s74, 1
      %p78 = scmp.eq.s32.totalorder %s40, 1
      %p79 = scmp.ne.s32.totalorder %s74, %s76
      %p80 = scmp.eq.s32.totalorder %s40, 0
      %p81 = por %p79, %p80
      %p82 = scmp.ne.s32.totalorder %s74, %s76
      %p83 = scmp.eq.s32.totalorder %s45, 1
      %p84 = por %p82, %p83
      %p85 = scmp.ne.s32.totalorder %s76, %s77
      %p86 = scmp.eq.s32.totalorder %s45, 0
      %p87 = por %p85, %p86
      %p88 = scmp.ne.s32.totalorder %s76, %s77
      %p89 = scmp.eq.s32.totalorder %s46, 1
      %p90 = por %p88, %p89
      %p92 = scmp.ne.s32.totalorder %s77, %s91
      %p93 = scmp.eq.s32.totalorder %s46, 0
      %p94 = por %p92, %p93
      %s96 = sadd.s32 %s95, 1
      %p99 = scmp.eq.s32.totalorder %s40, 1
      %p100 = scmp.ne.s32.totalorder %s95, %s97
      %p101 = scmp.eq.s32.totalorder %s40, 0
      %p102 = por %p100, %p101
      %p103 = scmp.ne.s32.totalorder %s95, %s97
      %p104 = scmp.eq.s32.totalorder %s45, 1
      %p105 = por %p103, %p104
      %p106 = scmp.ne.s32.totalorder %s97, %s98
      %p107 = scmp.eq.s32.totalorder %s45, 0
      %p108 = por %p106, %p107
      %p109 = scmp.ne.s32.totalorder %s97, %s98
      %p110 = scmp.eq.s32.totalorder %s46, 1
      %p111 = por %p109, %p110
      %p113 = scmp.ne.s32.totalorder %s98, %s112
      %p114 = scmp.eq.s32.totalorder %s46, 0
      %p115 = por %p113, %p114
      %s117 = sadd.s32 %s116, 1
      %p120 = scmp.eq.s32.totalorder %s40, 1
      %p121 = scmp.ne.s32.totalorder %s116, %s118
      %p122 = scmp.eq.s32.totalorder %s40, 0
      %p123 = por %p121, %p122
      %p124 = scmp.ne.s32.totalorder %s116, %s118
      %p125 = scmp.eq.s32.totalorder %s45, 1
      %p126 = por %p124, %p125
      %p127 = scmp.ne.s32.totalorder %s118, %s119
      %p128 = scmp.eq.s32.totalorder %s45, 0
      %p129 = por %p127, %p128
      %p130 = scmp.ne.s32.totalorder %s118, %s119
      %p131 = scmp.eq.s32.totalorder %s46, 1
      %p132 = por %p130, %p131
      %p134 = scmp.ne.s32.totalorder %s119, %s133
      %p135 = scmp.eq.s32.totalorder %s46, 0
      %p136 = por %p134, %p135
      %s138 = sadd.s32 %s137, 1
      %p141 = scmp.eq.s32.totalorder %s40, 1
      %p142 = scmp.ne.s32.totalorder %s137, %s139
      %p143 = scmp.eq.s32.totalorder %s40, 0
      %p144 = por %p142, %p143
      %p145 = scmp.ne.s32.totalorder %s137, %s139
      %p146 = scmp.eq.s32.totalorder %s45, 1
      %p147 = por %p145, %p146
      %p148 = scmp.ne.s32.totalorder %s139, %s140
      %p149 = scmp.eq.s32.totalorder %s45, 0
      %p150 = por %p148, %p149
      %p151 = scmp.ne.s32.totalorder %s139, %s140
      %p152 = scmp.eq.s32.totalorder %s46, 1
      %p153 = por %p151, %p152
      %p155 = scmp.ne.s32.totalorder %s140, %s154
      %p156 = scmp.eq.s32.totalorder %s46, 0
      %p157 = por %p155, %p156
      %s159 = sadd.s32 %s158, 1
      %p162 = scmp.eq.s32.totalorder %s40, 1
      %p163 = scmp.ne.s32.totalorder %s158, %s160
      %p164 = scmp.eq.s32.totalorder %s40, 0
      %p165 = por %p163, %p164
      %p166 = scmp.ne.s32.totalorder %s158, %s160
      %p167 = scmp.eq.s32.totalorder %s45, 1
      %p168 = por %p166, %p167
      %p169 = scmp.ne.s32.totalorder %s160, %s161
      %p170 = scmp.eq.s32.totalorder %s45, 0
      %p171 = por %p169, %p170
      %p172 = scmp.ne.s32.totalorder %s160, %s161
      %p173 = scmp.eq.s32.totalorder %s46, 1
      %p174 = por %p172, %p173
      %p176 = scmp.ne.s32.totalorder %s161, %s175
      %p177 = scmp.eq.s32.totalorder %s46, 0
      %p178 = por %p176, %p177
      %s180 = sadd.s32 %s179, 1
      %p183 = scmp.eq.s32.totalorder %s40, 1
      %p184 = scmp.ne.s32.totalorder %s179, %s181
      %p185 = scmp.eq.s32.totalorder %s40, 0
      %p186 = por %p184, %p185
      %p187 = scmp.ne.s32.totalorder %s179, %s181
      %p188 = scmp.eq.s32.totalorder %s45, 1
      %p189 = por %p187, %p188
      %p190 = scmp.ne.s32.totalorder %s181, %s182
      %p191 = scmp.eq.s32.totalorder %s45, 0
      %p192 = por %p190, %p191
      %p193 = scmp.ne.s32.totalorder %s181, %s182
      %p194 = scmp.eq.s32.totalorder %s46, 1
      %p195 = por %p193, %p194
      %p197 = scmp.ne.s32.totalorder %s182, %s196
      %p198 = scmp.eq.s32.totalorder %s46, 0
      %p199 = por %p197, %p198
      %s201 = sadd.s32 %s200, 1
      %p204 = scmp.eq.s32.totalorder %s40, 1
      %p205 = scmp.ne.s32.totalorder %s200, %s202
      %p206 = scmp.eq.s32.totalorder %s40, 0
      %p207 = por %p205, %p206
      %p208 = scmp.ne.s32.totalorder %s200, %s202
      %p209 = scmp.eq.s32.totalorder %s45, 1
      %p210 = por %p208, %p209
      %p211 = scmp.ne.s32.totalorder %s202, %s203
      %p212 = scmp.eq.s32.totalorder %s45, 0
      %p213 = por %p211, %p212
      %p214 = scmp.ne.s32.totalorder %s202, %s203
      %p215 = scmp.eq.s32.totalorder %s46, 1
      %p216 = por %p214, %p215
      %p218 = scmp.ne.s32.totalorder %s203, %s217
      %p219 = scmp.eq.s32.totalorder %s46, 0
      %p220 = por %p218, %p219
      %s222 = sadd.s32 %s221, 1
      %p225 = scmp.eq.s32.totalorder %s40, 1
      %p226 = scmp.ne.s32.totalorder %s221, %s223
      %p227 = scmp.eq.s32.totalorder %s40, 0
      %p228 = por %p226, %p227
      %p229 = scmp.ne.s32.totalorder %s221, %s223
      %p230 = scmp.eq.s32.totalorder %s45, 1
      %p231 = por %p229, %p230
      %p232 = scmp.ne.s32.totalorder %s223, %s224
      %p233 = scmp.eq.s32.totalorder %s45, 0
      %p234 = por %p232, %p233
      %p235 = scmp.ne.s32.totalorder %s223, %s224
      %p236 = scmp.eq.s32.totalorder %s46, 1
      %p237 = por %p235, %p236
      %p239 = scmp.ne.s32.totalorder %s224, %s238
      %p240 = scmp.eq.s32.totalorder %s46, 0
      %p241 = por %p239, %p240
      %s243 = sadd.s32 %s242, 1
      %p246 = scmp.eq.s32.totalorder %s40, 1
      %p247 = scmp.ne.s32.totalorder %s242, %s244
      %p248 = scmp.eq.s32.totalorder %s40, 0
      %p249 = por %p247, %p248
      %p250 = scmp.ne.s32.totalorder %s242, %s244
      %p251 = scmp.eq.s32.totalorder %s45, 1
      %p252 = por %p250, %p251
      %p253 = scmp.ne.s32.totalorder %s244, %s245
      %p254 = scmp.eq.s32.totalorder %s45, 0
      %p255 = por %p253, %p254
      %p256 = scmp.ne.s32.totalorder %s244, %s245
      %p257 = scmp.eq.s32.totalorder %s46, 1
      %p258 = por %p256, %p257
      %p260 = scmp.ne.s32.totalorder %s245, %s259
      %p261 = scmp.eq.s32.totalorder %s46, 0
      %p262 = por %p260, %p261
      %s264 = sadd.s32 %s263, 1
      %p267 = scmp.eq.s32.totalorder %s40, 1
      %p268 = scmp.ne.s32.totalorder %s263, %s265
      %p269 = scmp.eq.s32.totalorder %s40, 0
      %p270 = por %p268, %p269
      %p271 = scmp.ne.s32.totalorder %s263, %s265
      %p272 = scmp.eq.s32.totalorder %s45, 1
      %p273 = por %p271, %p272
      %p274 = scmp.ne.s32.totalorder %s265, %s266
      %p275 = scmp.eq.s32.totalorder %s45, 0
      %p276 = por %p274, %p275
      %p277 = scmp.ne.s32.totalorder %s265, %s266
      %p278 = scmp.eq.s32.totalorder %s46, 1
      %p279 = por %p277, %p278
      %p281 = scmp.ne.s32.totalorder %s266, %s280
      %p282 = scmp.eq.s32.totalorder %s46, 0
      %p283 = por %p281, %p282
      %s285 = sadd.s32 %s284, 1
      %p288 = scmp.eq.s32.totalorder %s40, 1
      %p289 = scmp.ne.s32.totalorder %s284, %s286
      %p290 = scmp.eq.s32.totalorder %s40, 0
      %p291 = por %p289, %p290
      %p292 = scmp.ne.s32.totalorder %s284, %s286
      %p293 = scmp.eq.s32.totalorder %s45, 1
      %p294 = por %p292, %p293
      %p295 = scmp.ne.s32.totalorder %s286, %s287
      %p296 = scmp.eq.s32.totalorder %s45, 0
      %p297 = por %p295, %p296
      %p298 = scmp.ne.s32.totalorder %s286, %s287
      %p299 = scmp.eq.s32.totalorder %s46, 1
      %p300 = por %p298, %p299
      %p302 = scmp.ne.s32.totalorder %s287, %s301
      %p303 = scmp.eq.s32.totalorder %s46, 0
      %p304 = por %p302, %p303
      %s306 = sadd.s32 %s305, 1
      %p309 = scmp.eq.s32.totalorder %s40, 1
      %p310 = scmp.ne.s32.totalorder %s305, %s307
      %p311 = scmp.eq.s32.totalorder %s40, 0
      %p312 = por %p310, %p311
      %p313 = scmp.ne.s32.totalorder %s305, %s307
      %p314 = scmp.eq.s32.totalorder %s45, 1
      %p315 = por %p313, %p314
      %p316 = scmp.ne.s32.totalorder %s307, %s308
      %p317 = scmp.eq.s32.totalorder %s45, 0
      %p318 = por %p316, %p317
      %p319 = scmp.ne.s32.totalorder %s307, %s308
      %p320 = scmp.eq.s32.totalorder %s46, 1
      %p321 = por %p319, %p320
      %p323 = scmp.ne.s32.totalorder %s308, %s322
      %p324 = scmp.eq.s32.totalorder %s46, 0
      %p325 = por %p323, %p324
      %s327 = sadd.s32 %s326, 1
      %p330 = scmp.eq.s32.totalorder %s40, 1
      %p331 = scmp.ne.s32.totalorder %s326, %s328
      %p332 = scmp.eq.s32.totalorder %s40, 0
      %p333 = por %p331, %p332
      %p334 = scmp.ne.s32.totalorder %s326, %s328
      %p335 = scmp.eq.s32.totalorder %s45, 1
      %p336 = por %p334, %p335
      %p337 = scmp.ne.s32.totalorder %s328, %s329
      %p338 = scmp.eq.s32.totalorder %s45, 0
      %p339 = por %p337, %p338
      %p340 = scmp.ne.s32.totalorder %s328, %s329
      %p341 = scmp.eq.s32.totalorder %s46, 1
      %p342 = por %p340, %p341
      %p344 = scmp.ne.s32.totalorder %s329, %s343
      %p345 = scmp.eq.s32.totalorder %s46, 0
      %p346 = por %p344, %p345
      %s348 = sadd.s32 %s347, 1
      %p351 = scmp.eq.s32.totalorder %s40, 1
      %p352 = scmp.ne.s32.totalorder %s347, %s349
      %p353 = scmp.eq.s32.totalorder %s40, 0
      %p354 = por %p352, %p353
      %p355 = scmp.ne.s32.totalorder %s347, %s349
      %p356 = scmp.eq.s32.totalorder %s45, 1
      %p357 = por %p355, %p356
      %p358 = scmp.ne.s32.totalorder %s349, %s350
      %p359 = scmp.eq.s32.totalorder %s45, 0
      %p360 = por %p358, %p359
      %p361 = scmp.ne.s32.totalorder %s349, %s350
      %p362 = scmp.eq.s32.totalorder %s46, 1
      %p363 = por %p361, %p362
      %p365 = scmp.ne.s32.totalorder %s350, %s364
      %p366 = scmp.eq.s32.totalorder %s46, 0
      %p367 = por %p365, %p366
      %s369 = sadd.s32 %s368, 1
      %p372 = scmp.eq.s32.totalorder %s40, 1
      %p373 = scmp.ne.s32.totalorder %s368, %s370
      %p374 = scmp.eq.s32.totalorder %s40, 0
      %p375 = por %p373, %p374
      %p376 = scmp.ne.s32.totalorder %s368, %s370
      %p377 = scmp.eq.s32.totalorder %s45, 1
      %p378 = por %p376, %p377
      %p379 = scmp.ne.s32.totalorder %s370, %s371
      %p380 = scmp.eq.s32.totalorder %s45, 0
      %p381 = por %p379, %p380
      %p382 = scmp.ne.s32.totalorder %s370, %s371
      %p383 = scmp.eq.s32.totalorder %s46, 1
      %p384 = por %p382, %p383
      %p386 = scmp.ne.s32.totalorder %s371, %s385
      %p387 = scmp.eq.s32.totalorder %s46, 0
      %p388 = por %p386, %p387
      %s390 = sadd.s32 %s389, 1
      %p393 = scmp.eq.s32.totalorder %s40, 1
      %p394 = scmp.ne.s32.totalorder %s389, %s391
      %p395 = scmp.eq.s32.totalorder %s40, 0
      %p396 = por %p394, %p395
      %p397 = scmp.ne.s32.totalorder %s389, %s391
      %p398 = scmp.eq.s32.totalorder %s45, 1
      %p399 = por %p397, %p398
      %p400 = scmp.ne.s32.totalorder %s391, %s392
      %p401 = scmp.eq.s32.totalorder %s45, 0
      %p402 = por %p400, %p401
      %p403 = scmp.ne.s32.totalorder %s391, %s392
      %p404 = scmp.eq.s32.totalorder %s46, 1
      %p405 = por %p403, %p404
      %p407 = scmp.ne.s32.totalorder %s392, %s406
      %p408 = scmp.eq.s32.totalorder %s46, 0
      %p409 = por %p407, %p408
      %s411 = sadd.s32 %s410, 1
      %p414 = scmp.eq.s32.totalorder %s40, 1
      %p415 = scmp.ne.s32.totalorder %s410, %s412
      %p416 = scmp.eq.s32.totalorder %s40, 0
      %p417 = por %p415, %p416
      %p418 = scmp.ne.s32.totalorder %s410, %s412
      %p419 = scmp.eq.s32.totalorder %s45, 1
      %p420 = por %p418, %p419
      %p421 = scmp.ne.s32.totalorder %s412, %s413
      %p422 = scmp.eq.s32.totalorder %s45, 0
      %p423 = por %p421, %p422
      %p424 = scmp.ne.s32.totalorder %s412, %s413
      %p425 = scmp.eq.s32.totalorder %s46, 1
      %p426 = por %p424, %p425
      %p428 = scmp.ne.s32.totalorder %s413, %s427
      %p429 = scmp.eq.s32.totalorder %s46, 0
      %p430 = por %p428, %p429
      %s432 = sadd.s32 %s431, 1
      %p435 = scmp.eq.s32.totalorder %s40, 1
      %p436 = scmp.ne.s32.totalorder %s431, %s433
      %p437 = scmp.eq.s32.totalorder %s40, 0
      %p438 = por %p436, %p437
      %p439 = scmp.ne.s32.totalorder %s431, %s433
      %p440 = scmp.eq.s32.totalorder %s45, 1
      %p441 = por %p439, %p440
      %p442 = scmp.ne.s32.totalorder %s433, %s434
      %p443 = scmp.eq.s32.totalorder %s45, 0
      %p444 = por %p442, %p443
      %p445 = scmp.ne.s32.totalorder %s433, %s434
      %p446 = scmp.eq.s32.totalorder %s46, 1
      %p447 = por %p445, %p446
      %p449 = scmp.ne.s32.totalorder %s434, %s448
      %p450 = scmp.eq.s32.totalorder %s46, 0
      %p451 = por %p449, %p450
      %s453 = sadd.s32 %s452, 1
      %p456 = scmp.eq.s32.totalorder %s40, 1
      %p457 = scmp.ne.s32.totalorder %s452, %s454
      %p458 = scmp.eq.s32.totalorder %s40, 0
      %p459 = por %p457, %p458
      %p460 = scmp.ne.s32.totalorder %s452, %s454
      %p461 = scmp.eq.s32.totalorder %s45, 1
      %p462 = por %p460, %p461
      %p463 = scmp.ne.s32.totalorder %s454, %s455
      %p464 = scmp.eq.s32.totalorder %s45, 0
      %p465 = por %p463, %p464
      %p466 = scmp.ne.s32.totalorder %s454, %s455
      %p467 = scmp.eq.s32.totalorder %s46, 1
      %p468 = por %p466, %p467
      %p470 = scmp.ne.s32.totalorder %s455, %s469
      %p471 = scmp.eq.s32.totalorder %s46, 0
      %p472 = por %p470, %p471
      %s474 = sadd.s32 %s473, 1
      %p477 = scmp.eq.s32.totalorder %s40, 1
      %p478 = scmp.ne.s32.totalorder %s473, %s475
      %p479 = scmp.eq.s32.totalorder %s40, 0
      %p480 = por %p478, %p479
      %p481 = scmp.ne.s32.totalorder %s473, %s475
      %p482 = scmp.eq.s32.totalorder %s45, 1
      %p483 = por %p481, %p482
      %p484 = scmp.ne.s32.totalorder %s475, %s476
      %p485 = scmp.eq.s32.totalorder %s45, 0
      %p486 = por %p484, %p485
      %p487 = scmp.ne.s32.totalorder %s475, %s476
      %p488 = scmp.eq.s32.totalorder %s46, 1
      %p489 = por %p487, %p488
      %p491 = scmp.ne.s32.totalorder %s476, %s490
      %p492 = scmp.eq.s32.totalorder %s46, 0
      %p493 = por %p491, %p492
      %s495 = sadd.s32 %s494, 1
      %p498 = scmp.eq.s32.totalorder %s40, 1
      %p499 = scmp.ne.s32.totalorder %s494, %s496
      %p500 = scmp.eq.s32.totalorder %s40, 0
      %p501 = por %p499, %p500
      %p502 = scmp.ne.s32.totalorder %s494, %s496
      %p503 = scmp.eq.s32.totalorder %s45, 1
      %p504 = por %p502, %p503
      %p505 = scmp.ne.s32.totalorder %s496, %s497
      %p506 = scmp.eq.s32.totalorder %s45, 0
      %p507 = por %p505, %p506
      %p508 = scmp.ne.s32.totalorder %s496, %s497
      %p509 = scmp.eq.s32.totalorder %s46, 1
      %p510 = por %p508, %p509
      %p512 = scmp.ne.s32.totalorder %s497, %s511
      %p513 = scmp.eq.s32.totalorder %s46, 0
      %p514 = por %p512, %p513
      %s515 = ssub.s32 %s40, %s47
      %p516 = scmp.eq.s32.totalorder %s515, 0
      %s518 = sadd.s32 %s517, 1
      %s519 = scalar_select %p516, %s517, %s518
      %p522 = pneg %p516
      %p523 = scmp.eq.s32.totalorder %s40, 1
      %p524 = por %p522, %p523
      %p525 = scmp.ne.s32.totalorder %s517, %s520
      %p526 = scmp.eq.s32.totalorder %s40, 0
      %p527 = por %p525, %p526
      %p528 = scmp.ne.s32.totalorder %s517, %s520
      %p529 = scmp.eq.s32.totalorder %s45, 1
      %p530 = por %p528, %p529
      %p531 = scmp.ne.s32.totalorder %s520, %s521
      %p532 = scmp.eq.s32.totalorder %s45, 0
      %p533 = por %p531, %p532
      %p534 = scmp.ne.s32.totalorder %s520, %s521
      %p535 = scmp.eq.s32.totalorder %s46, 1
      %p536 = por %p534, %p535
      %p538 = scmp.ne.s32.totalorder %s521, %s537
      %p539 = scmp.eq.s32.totalorder %s46, 0
      %p540 = por %p538, %p539
      %s541 = ssub.s32 %s40, %s47
      %p542 = scmp.eq.s32.totalorder %s541, 0
      %s544 = sadd.s32 %s543, 1
      %s545 = scalar_select %p542, %s543, %s544
      %p548 = pneg %p542
      %p549 = scmp.eq.s32.totalorder %s40, 1
      %p550 = por %p548, %p549
      %p551 = scmp.ne.s32.totalorder %s543, %s546
      %p552 = scmp.eq.s32.totalorder %s40, 0
      %p553 = por %p551, %p552
      %p554 = scmp.ne.s32.totalorder %s543, %s546
      %p555 = scmp.eq.s32.totalorder %s45, 1
      %p556 = por %p554, %p555
      %p557 = scmp.ne.s32.totalorder %s546, %s547
      %p558 = scmp.eq.s32.totalorder %s45, 0
      %p559 = por %p557, %p558
      %p560 = scmp.ne.s32.totalorder %s546, %s547
      %p561 = scmp.eq.s32.totalorder %s46, 1
      %p562 = por %p560, %p561
      %p564 = scmp.ne.s32.totalorder %s547, %s563
      %p565 = scmp.eq.s32.totalorder %s46, 0
      %p566 = por %p564, %p565
      %p567 = scmp.le.s32.totalorder 1, %s40
      %p568 = scmp.lt.s32.totalorder %s40, 3
      %p569 = pnand %p567, %p568
      %p570 = pneg %p569
      // Predicated region
      $region9: #{fsra_forward.1} parent=5 // pred_check
        _
      $region10: #{fsra_forward.1} parent=5 // pred_check_branch
        %572 = sbr.rel (%p569) target = $region12
      $region11: #{fsra_forward.1} parent=5 // pred_region
        %s573 = ssub.s32 %s40, 1
        // Predicated region
        $region13: #{fsra_forward.1} parent=11 // pred_check
          %p574 = pneg %p87
        $region14: #{fsra_forward.1} parent=11 // pred_check_branch
          %576 = sbr.rel (%p574) target = $region16
        $region15: #{fsra_forward.1} parent=11 // pred_region
          %578 = vsyncadd [#allocation3], 0
          %s579 = sshll.u32 %s1, 4
          %s580 = int_to_ptr.hbm [resolvable:$true] %s579
          %s581 = sshll.u32 [#allocation2], 4
          %s582 = int_to_ptr.vmem [resolvable:$true] %s581
          %587 = dma.hbm_to_vmem [thread:$0]  %s580, 2048, %s582, [#allocation3], 128, 128, 8
        $region16: #{fsra_forward.1} parent=11 // pred_fallthru
          _
        // Predicated region
        $region17: #{fsra_forward.1} parent=11 // pred_check
          %p588 = pneg %p108
        $region18: #{fsra_forward.1} parent=11 // pred_check_branch
          %590 = sbr.rel (%p588) target = $region20
        $region19: #{fsra_forward.1} parent=11 // pred_region
          %592 = vsyncadd [#allocation5], 0
          %s594 = sshll.u32 %s2, 4
          %s595 = int_to_ptr.hbm [resolvable:$true] %s594
          %s596 = sshll.u32 [#allocation4], 4
          %s597 = int_to_ptr.vmem [resolvable:$true] %s596
          %599 = dma.hbm_to_vmem [thread:$0]  %s595, 32, %s597, [#allocation5]
        $region20: #{fsra_forward.1} parent=11 // pred_fallthru
          _
        // Predicated region
        $region21: #{fsra_forward.1} parent=11 // pred_check
          %p600 = pneg %p129
        $region22: #{fsra_forward.1} parent=11 // pred_check_branch
          %602 = sbr.rel (%p600) target = $region24
        $region23: #{fsra_forward.1} parent=11 // pred_region
          _
        $region24: #{fsra_forward.1} parent=11 // pred_fallthru
          _
        // Predicated region
        $region25: #{fsra_forward.1} parent=11 // pred_check
          %p603 = pneg %p150
        $region26: #{fsra_forward.1} parent=11 // pred_check_branch
          %605 = sbr.rel (%p603) target = $region28
        $region27: #{fsra_forward.1} parent=11 // pred_region
          %607 = vsyncadd [#allocation5], 0
          %s609 = sshll.u32 %s4, 4
          %s610 = int_to_ptr.hbm [resolvable:$true] %s609
          %s611 = sshll.u32 [#allocation6], 4
          %s612 = int_to_ptr.vmem [resolvable:$true] %s611
          %614 = dma.hbm_to_vmem [thread:$0]  %s610, 64, %s612, [#allocation5]
        $region28: #{fsra_forward.1} parent=11 // pred_fallthru
          _
        // Predicated region
        $region29: #{fsra_forward.1} parent=11 // pred_check
          %p615 = pneg %p171
        $region30: #{fsra_forward.1} parent=11 // pred_check_branch
          %617 = sbr.rel (%p615) target = $region32
        $region31: #{fsra_forward.1} parent=11 // pred_region
          %619 = vsyncadd [#allocation8], 0
          %s621 = sshll.u32 %s5, 4
          %s622 = int_to_ptr.hbm [resolvable:$true] %s621
          %s623 = sshll.u32 [#allocation7], 4
          %s624 = int_to_ptr.vmem [resolvable:$true] %s623
          %626 = dma.hbm_to_vmem [thread:$0]  %s622, 64, %s624, [#allocation8]
        $region32: #{fsra_forward.1} parent=11 // pred_fallthru
          _
        // Predicated region
        $region33: #{fsra_forward.1} parent=11 // pred_check
          %p627 = pneg %p192
        $region34: #{fsra_forward.1} parent=11 // pred_check_branch
          %629 = sbr.rel (%p627) target = $region36
        $region35: #{fsra_forward.1} parent=11 // pred_region
          %631 = vsyncadd [#allocation8], 0
          %s633 = sshll.u32 %s6, 4
          %s634 = int_to_ptr.hbm [resolvable:$true] %s633
          %s635 = sshll.u32 [#allocation9], 4
          %s636 = int_to_ptr.vmem [resolvable:$true] %s635
          %638 = dma.hbm_to_vmem [thread:$0]  %s634, 32, %s636, [#allocation8]
        $region36: #{fsra_forward.1} parent=11 // pred_fallthru
          _
        // Predicated region
        $region37: #{fsra_forward.1} parent=11 // pred_check
          %p639 = pneg %p213
        $region38: #{fsra_forward.1} parent=11 // pred_check_branch
          %641 = sbr.rel (%p639) target = $region40
        $region39: #{fsra_forward.1} parent=11 // pred_region
          %643 = vsyncadd [#allocation11], 0
          %s644 = sshll.u32 %s7, 4
          %s645 = int_to_ptr.hbm [resolvable:$true] %s644
          %s646 = sshll.u32 [#allocation10], 4
          %s647 = int_to_ptr.vmem [resolvable:$true] %s646
          %652 = dma.hbm_to_vmem [thread:$0]  %s645, 4096, %s647, [#allocation11], 128, 128, 8
        $region40: #{fsra_forward.1} parent=11 // pred_fallthru
          _
        // Predicated region
        $region41: #{fsra_forward.1} parent=11 // pred_check
          %p653 = pneg %p234
        $region42: #{fsra_forward.1} parent=11 // pred_check_branch
          %655 = sbr.rel (%p653) target = $region44
        $region43: #{fsra_forward.1} parent=11 // pred_region
          %657 = vsyncadd [#allocation11], 0
          %s658 = sshll.u32 %s8, 4
          %s659 = int_to_ptr.hbm [resolvable:$true] %s658
          %s660 = sshll.u32 [#allocation12], 4
          %s661 = int_to_ptr.vmem [resolvable:$true] %s660
          %666 = dma.hbm_to_vmem [thread:$0]  %s659, 4096, %s661, [#allocation11], 128, 128, 8
        $region44: #{fsra_forward.1} parent=11 // pred_fallthru
          _
        // Predicated region
        $region45: #{fsra_forward.1} parent=11 // pred_check
          %p667 = pneg %p255
        $region46: #{fsra_forward.1} parent=11 // pred_check_branch
          %669 = sbr.rel (%p667) target = $region48
        $region47: #{fsra_forward.1} parent=11 // pred_region
          %671 = vsyncadd [#allocation14], 0
          %s673 = sshll.u32 %s9, 4
          %s674 = int_to_ptr.hbm [resolvable:$true] %s673
          %s675 = sshll.u32 [#allocation13], 4
          %s676 = int_to_ptr.vmem [resolvable:$true] %s675
          %678 = dma.hbm_to_vmem [thread:$0]  %s674, 64, %s676, [#allocation14]
        $region48: #{fsra_forward.1} parent=11 // pred_fallthru
          _
        // Predicated region
        $region49: #{fsra_forward.1} parent=11 // pred_check
          %p679 = pneg %p276
        $region50: #{fsra_forward.1} parent=11 // pred_check_branch
          %681 = sbr.rel (%p679) target = $region52
        $region51: #{fsra_forward.1} parent=11 // pred_region
          %683 = vsyncadd [#allocation14], 0
          %s684 = sshll.u32 %s10, 4
          %s685 = int_to_ptr.hbm [resolvable:$true] %s684
          %s686 = sshll.u32 [#allocation15], 4
          %s687 = int_to_ptr.vmem [resolvable:$true] %s686
          %692 = dma.hbm_to_vmem [thread:$0]  %s685, 2048, %s687, [#allocation14], 64, 64, 4
        $region52: #{fsra_forward.1} parent=11 // pred_fallthru
          _
        // Predicated region
        $region53: #{fsra_forward.1} parent=11 // pred_check
          %p693 = pneg %p297
        $region54: #{fsra_forward.1} parent=11 // pred_check_branch
          %695 = sbr.rel (%p693) target = $region56
        $region55: #{fsra_forward.1} parent=11 // pred_region
          %697 = vsyncadd [#allocation17], 0
          %s699 = sshll.u32 %s11, 4
          %s700 = int_to_ptr.hbm [resolvable:$true] %s699
          %s701 = sshll.u32 [#allocation16], 4
          %s702 = int_to_ptr.vmem [resolvable:$true] %s701
          %704 = dma.hbm_to_vmem [thread:$0]  %s700, 16, %s702, [#allocation17]
        $region56: #{fsra_forward.1} parent=11 // pred_fallthru
          _
        // Predicated region
        $region57: #{fsra_forward.1} parent=11 // pred_check
          %p705 = pneg %p318
        $region58: #{fsra_forward.1} parent=11 // pred_check_branch
          %707 = sbr.rel (%p705) target = $region60
        $region59: #{fsra_forward.1} parent=11 // pred_region
          _
        $region60: #{fsra_forward.1} parent=11 // pred_fallthru
          _
        // Predicated region
        $region61: #{fsra_forward.1} parent=11 // pred_check
          %p708 = pneg %p339
        $region62: #{fsra_forward.1} parent=11 // pred_check_branch
          %710 = sbr.rel (%p708) target = $region64
        $region63: #{fsra_forward.1} parent=11 // pred_region
          %712 = vsyncadd [#allocation17], 0
          %s713 = sshll.u32 %s13, 4
          %s714 = int_to_ptr.hbm [resolvable:$true] %s713
          %s715 = sshll.u32 [#allocation18], 4
          %s716 = int_to_ptr.vmem [resolvable:$true] %s715
          %721 = dma.hbm_to_vmem [thread:$0]  %s714, 192, %s716, [#allocation17], 64, 64, 4
        $region64: #{fsra_forward.1} parent=11 // pred_fallthru
          _
        // Predicated region
        $region65: #{fsra_forward.1} parent=11 // pred_check
          %p722 = pneg %p360
        $region66: #{fsra_forward.1} parent=11 // pred_check_branch
          %724 = sbr.rel (%p722) target = $region68
        $region67: #{fsra_forward.1} parent=11 // pred_region
          %726 = vsyncadd [#allocation20], 0
          %s727 = sshll.u32 %s14, 4
          %s728 = int_to_ptr.hbm [resolvable:$true] %s727
          %s729 = sshll.u32 [#allocation19], 4
          %s730 = int_to_ptr.vmem [resolvable:$true] %s729
          %735 = dma.hbm_to_vmem [thread:$0]  %s728, 6144, %s730, [#allocation20], 64, 64, 4
        $region68: #{fsra_forward.1} parent=11 // pred_fallthru
          _
        // Predicated region
        $region69: #{fsra_forward.1} parent=11 // pred_check
          %p736 = pneg %p381
        $region70: #{fsra_forward.1} parent=11 // pred_check_branch
          %738 = sbr.rel (%p736) target = $region72
        $region71: #{fsra_forward.1} parent=11 // pred_region
          _
        $region72: #{fsra_forward.1} parent=11 // pred_fallthru
          _
        // Predicated region
        $region73: #{fsra_forward.1} parent=11 // pred_check
          %p739 = pneg %p402
        $region74: #{fsra_forward.1} parent=11 // pred_check_branch
          %741 = sbr.rel (%p739) target = $region76
        $region75: #{fsra_forward.1} parent=11 // pred_region
          %743 = vsyncadd [#allocation20], 0
          %s744 = sshll.u32 %s16, 4
          %s745 = int_to_ptr.hbm [resolvable:$true] %s744
          %s746 = sshll.u32 [#allocation21], 4
          %s747 = int_to_ptr.vmem [resolvable:$true] %s746
          %752 = dma.hbm_to_vmem [thread:$0]  %s745, 16384, %s747, [#allocation20], 128, 128, 8
        $region76: #{fsra_forward.1} parent=11 // pred_fallthru
          _
        // Predicated region
        $region77: #{fsra_forward.1} parent=11 // pred_check
          %p753 = pneg %p423
        $region78: #{fsra_forward.1} parent=11 // pred_check_branch
          %755 = sbr.rel (%p753) target = $region80
        $region79: #{fsra_forward.1} parent=11 // pred_region
          %757 = vsyncadd [#allocation23], 0
          %s759 = sshll.u32 %s17, 4
          %s760 = int_to_ptr.hbm [resolvable:$true] %s759
          %s761 = sshll.u32 [#allocation22], 4
          %s762 = int_to_ptr.vmem [resolvable:$true] %s761
          %764 = dma.hbm_to_vmem [thread:$0]  %s760, 64, %s762, [#allocation23]
        $region80: #{fsra_forward.1} parent=11 // pred_fallthru
          _
        // Predicated region
        $region81: #{fsra_forward.1} parent=11 // pred_check
          %p765 = pneg %p444
        $region82: #{fsra_forward.1} parent=11 // pred_check_branch
          %767 = sbr.rel (%p765) target = $region84
        $region83: #{fsra_forward.1} parent=11 // pred_region
          %769 = vsyncadd [#allocation23], 0
          %s770 = sshll.u32 %s18, 4
          %s771 = int_to_ptr.hbm [resolvable:$true] %s770
          %s772 = sshll.u32 [#allocation24], 4
          %s773 = int_to_ptr.vmem [resolvable:$true] %s772
          %778 = dma.hbm_to_vmem [thread:$0]  %s771, 4096, %s773, [#allocation23], 128, 128, 8
        $region84: #{fsra_forward.1} parent=11 // pred_fallthru
          _
        // Predicated region
        $region85: #{fsra_forward.1} parent=11 // pred_check
          %p779 = pneg %p465
        $region86: #{fsra_forward.1} parent=11 // pred_check_branch
          %781 = sbr.rel (%p779) target = $region88
        $region87: #{fsra_forward.1} parent=11 // pred_region
          %783 = vsyncadd [#allocation26], 0
          %s785 = sshll.u32 %s19, 4
          %s786 = int_to_ptr.hbm [resolvable:$true] %s785
          %s787 = sshll.u32 [#allocation25], 4
          %s788 = int_to_ptr.vmem [resolvable:$true] %s787
          %790 = dma.hbm_to_vmem [thread:$0]  %s786, 64, %s788, [#allocation26]
        $region88: #{fsra_forward.1} parent=11 // pred_fallthru
          _
        // Predicated region
        $region89: #{fsra_forward.1} parent=11 // pred_check
          %p791 = pneg %p486
        $region90: #{fsra_forward.1} parent=11 // pred_check_branch
          %793 = sbr.rel (%p791) target = $region92
        $region91: #{fsra_forward.1} parent=11 // pred_region
          %795 = vsyncadd [#allocation26], 0
          %s796 = sshll.u32 %s20, 4
          %s797 = int_to_ptr.hbm [resolvable:$true] %s796
          %s798 = sshll.u32 [#allocation27], 4
          %s799 = int_to_ptr.vmem [resolvable:$true] %s798
          %804 = dma.hbm_to_vmem [thread:$0]  %s797, 2048, %s799, [#allocation26], 64, 64, 4
        $region92: #{fsra_forward.1} parent=11 // pred_fallthru
          _
        // Predicated region
        $region93: #{fsra_forward.1} parent=11 // pred_check
          %p805 = pneg %p507
        $region94: #{fsra_forward.1} parent=11 // pred_check_branch
          %807 = sbr.rel (%p805) target = $region96
        $region95: #{fsra_forward.1} parent=11 // pred_region
          %809 = vsyncadd [#allocation29], 0
          %s811 = sshll.u32 %s21, 4
          %s812 = int_to_ptr.hbm [resolvable:$true] %s811
          %s813 = sshll.u32 [#allocation28], 4
          %s814 = int_to_ptr.vmem [resolvable:$true] %s813
          %816 = dma.hbm_to_vmem [thread:$0]  %s812, 16, %s814, [#allocation29]
        $region96: #{fsra_forward.1} parent=11 // pred_fallthru
          _
      $region12: #{fsra_forward.1} parent=5 // pred_fallthru
        _
      %p817 = scmp.lt.s32.totalorder %s40, 2
      // Predicated region
      $region97: #{fsra_forward.1} parent=5 // pred_check
        %p818 = pneg %p817
      $region98: #{fsra_forward.1} parent=5 // pred_check_branch
        %820 = sbr.rel (%p818) target = $region100
      $region99: #{fsra_forward.1} parent=5 // pred_region
        // Predicated region
        $region101: #{fsra_forward.1} parent=99 // pred_check
          %p821 = pneg %p60
        $region102: #{fsra_forward.1} parent=99 // pred_check_branch
          %823 = sbr.rel (%p821) target = $region104
        $region103: #{fsra_forward.1} parent=99 // pred_region
          %p824 = scmp.lt.s32.totalorder %s40, 1
          %s825 = scalar_select %p824, %s40, 1
          %s826 = smul.addr %s825, 2
          %s827 = smul.addr %s826, 4
          %s828 = scalar_lea.vmem %s0, %s827
        $region104: #{fsra_forward.1} parent=99 // pred_fallthru
          _
      $region100: #{fsra_forward.1} parent=5 // pred_fallthru
        _
      %p829 = scmp.le.s32.totalorder 1, %s40
      %p830 = scmp.lt.s32.totalorder %s40, 3
      %p831 = pnand %p829, %p830
      %p832 = pneg %p831
      // Predicated region
      $region105: #{fsra_forward.1} parent=5 // pred_check
        _
      $region106: #{fsra_forward.1} parent=5 // pred_check_branch
        %834 = sbr.rel (%p831) target = $region108
      $region107: #{fsra_forward.1} parent=5 // pred_region
        %s835 = ssub.s32 %s40, 1
        // Predicated region
        $region109: #{fsra_forward.1} parent=107 // pred_check
          %p836 = pneg %p87
        $region110: #{fsra_forward.1} parent=107 // pred_check_branch
          %838 = sbr.rel (%p836) target = $region112
        $region111: #{fsra_forward.1} parent=107 // pred_region
          %840 = dma.done [#allocation3], 2048
        $region112: #{fsra_forward.1} parent=107 // pred_fallthru
          _
        // Predicated region
        $region113: #{fsra_forward.1} parent=107 // pred_check
          %p841 = pneg %p108
        $region114: #{fsra_forward.1} parent=107 // pred_check_branch
          %843 = sbr.rel (%p841) target = $region116
        $region115: #{fsra_forward.1} parent=107 // pred_region
          %845 = dma.done [#allocation5], 32
        $region116: #{fsra_forward.1} parent=107 // pred_fallthru
          _
        // Predicated region
        $region117: #{fsra_forward.1} parent=107 // pred_check
          %p846 = pneg %p150
        $region118: #{fsra_forward.1} parent=107 // pred_check_branch
          %848 = sbr.rel (%p846) target = $region120
        $region119: #{fsra_forward.1} parent=107 // pred_region
          %850 = dma.done [#allocation5], 64
        $region120: #{fsra_forward.1} parent=107 // pred_fallthru
          _
        // Predicated region
        $region121: #{fsra_forward.1} parent=107 // pred_check
          %p851 = pneg %p171
        $region122: #{fsra_forward.1} parent=107 // pred_check_branch
          %853 = sbr.rel (%p851) target = $region124
        $region123: #{fsra_forward.1} parent=107 // pred_region
          %855 = dma.done [#allocation8], 64
        $region124: #{fsra_forward.1} parent=107 // pred_fallthru
          _
        // Predicated region
        $region125: #{fsra_forward.1} parent=107 // pred_check
          %p856 = pneg %p192
        $region126: #{fsra_forward.1} parent=107 // pred_check_branch
          %858 = sbr.rel (%p856) target = $region128
        $region127: #{fsra_forward.1} parent=107 // pred_region
          %860 = dma.done [#allocation8], 32
        $region128: #{fsra_forward.1} parent=107 // pred_fallthru
          _
        // Predicated region
        $region129: #{fsra_forward.1} parent=107 // pred_check
          %p861 = pneg %p213
        $region130: #{fsra_forward.1} parent=107 // pred_check_branch
          %863 = sbr.rel (%p861) target = $region132
        $region131: #{fsra_forward.1} parent=107 // pred_region
          %865 = dma.done [#allocation11], 4096
        $region132: #{fsra_forward.1} parent=107 // pred_fallthru
          _
        // Predicated region
        $region133: #{fsra_forward.1} parent=107 // pred_check
          %p866 = pneg %p234
        $region134: #{fsra_forward.1} parent=107 // pred_check_branch
          %868 = sbr.rel (%p866) target = $region136
        $region135: #{fsra_forward.1} parent=107 // pred_region
          %870 = dma.done [#allocation11], 4096
        $region136: #{fsra_forward.1} parent=107 // pred_fallthru
          _
        // Predicated region
        $region137: #{fsra_forward.1} parent=107 // pred_check
          %p871 = pneg %p255
        $region138: #{fsra_forward.1} parent=107 // pred_check_branch
          %873 = sbr.rel (%p871) target = $region140
        $region139: #{fsra_forward.1} parent=107 // pred_region
          %875 = dma.done [#allocation14], 64
        $region140: #{fsra_forward.1} parent=107 // pred_fallthru
          _
        // Predicated region
        $region141: #{fsra_forward.1} parent=107 // pred_check
          %p876 = pneg %p276
        $region142: #{fsra_forward.1} parent=107 // pred_check_branch
          %878 = sbr.rel (%p876) target = $region144
        $region143: #{fsra_forward.1} parent=107 // pred_region
          %880 = dma.done [#allocation14], 2048
        $region144: #{fsra_forward.1} parent=107 // pred_fallthru
          _
        // Predicated region
        $region145: #{fsra_forward.1} parent=107 // pred_check
          %p881 = pneg %p297
        $region146: #{fsra_forward.1} parent=107 // pred_check_branch
          %883 = sbr.rel (%p881) target = $region148
        $region147: #{fsra_forward.1} parent=107 // pred_region
          %885 = dma.done [#allocation17], 16
        $region148: #{fsra_forward.1} parent=107 // pred_fallthru
          _
        // Predicated region
        $region149: #{fsra_forward.1} parent=107 // pred_check
          %p886 = pneg %p339
        $region150: #{fsra_forward.1} parent=107 // pred_check_branch
          %888 = sbr.rel (%p886) target = $region152
        $region151: #{fsra_forward.1} parent=107 // pred_region
          %890 = dma.done [#allocation17], 192
        $region152: #{fsra_forward.1} parent=107 // pred_fallthru
          _
        // Predicated region
        $region153: #{fsra_forward.1} parent=107 // pred_check
          %p891 = pneg %p360
        $region154: #{fsra_forward.1} parent=107 // pred_check_branch
          %893 = sbr.rel (%p891) target = $region156
        $region155: #{fsra_forward.1} parent=107 // pred_region
          %895 = dma.done [#allocation20], 6144
        $region156: #{fsra_forward.1} parent=107 // pred_fallthru
          _
        // Predicated region
        $region157: #{fsra_forward.1} parent=107 // pred_check
          %p896 = pneg %p402
        $region158: #{fsra_forward.1} parent=107 // pred_check_branch
          %898 = sbr.rel (%p896) target = $region160
        $region159: #{fsra_forward.1} parent=107 // pred_region
          %900 = dma.done [#allocation20], 16384
        $region160: #{fsra_forward.1} parent=107 // pred_fallthru
          _
        // Predicated region
        $region161: #{fsra_forward.1} parent=107 // pred_check
          %p901 = pneg %p423
        $region162: #{fsra_forward.1} parent=107 // pred_check_branch
          %903 = sbr.rel (%p901) target = $region164
        $region163: #{fsra_forward.1} parent=107 // pred_region
          %905 = dma.done [#allocation23], 64
        $region164: #{fsra_forward.1} parent=107 // pred_fallthru
          _
        // Predicated region
        $region165: #{fsra_forward.1} parent=107 // pred_check
          %p906 = pneg %p444
        $region166: #{fsra_forward.1} parent=107 // pred_check_branch
          %908 = sbr.rel (%p906) target = $region168
        $region167: #{fsra_forward.1} parent=107 // pred_region
          %910 = dma.done [#allocation23], 4096
        $region168: #{fsra_forward.1} parent=107 // pred_fallthru
          _
        // Predicated region
        $region169: #{fsra_forward.1} parent=107 // pred_check
          %p911 = pneg %p465
        $region170: #{fsra_forward.1} parent=107 // pred_check_branch
          %913 = sbr.rel (%p911) target = $region172
        $region171: #{fsra_forward.1} parent=107 // pred_region
          %915 = dma.done [#allocation26], 64
        $region172: #{fsra_forward.1} parent=107 // pred_fallthru
          _
        // Predicated region
        $region173: #{fsra_forward.1} parent=107 // pred_check
          %p916 = pneg %p486
        $region174: #{fsra_forward.1} parent=107 // pred_check_branch
          %918 = sbr.rel (%p916) target = $region176
        $region175: #{fsra_forward.1} parent=107 // pred_region
          %920 = dma.done [#allocation26], 2048
        $region176: #{fsra_forward.1} parent=107 // pred_fallthru
          _
        // Predicated region
        $region177: #{fsra_forward.1} parent=107 // pred_check
          %p921 = pneg %p507
        $region178: #{fsra_forward.1} parent=107 // pred_check_branch
          %923 = sbr.rel (%p921) target = $region180
        $region179: #{fsra_forward.1} parent=107 // pred_region
          %925 = dma.done [#allocation29], 16
        $region180: #{fsra_forward.1} parent=107 // pred_fallthru
          _
        %p926 = scmp.lt.s32.totalorder %s45, 1
        %s927 = scalar_select %p926, %s45, 1
        %s928 = smul.addr %s927, 2
        %s929 = smul.addr %s928, 4
        %s930 = scalar_lea.vmem %s0, %s929
        %p931 = pneg %p66
        %p932 = pneg %p63
        %p933 = pneg %p87
        %p934 = pneg %p84
        %p935 = pneg %p108
        %p936 = pneg %p105
        %p937 = pneg %p129
        %p938 = pneg %p126
        %p939 = pneg %p150
        %p940 = pneg %p147
        %p941 = pneg %p171
        %p942 = pneg %p168
        %p943 = pneg %p192
        %p944 = pneg %p189
        %p945 = pneg %p213
        %p946 = pneg %p210
        %p947 = pneg %p234
        %p948 = pneg %p231
        %p949 = pneg %p255
        %p950 = pneg %p252
        %p951 = pneg %p276
        %p952 = pneg %p273
        %p953 = pneg %p297
        %p954 = pneg %p294
        %p955 = pneg %p318
        %p956 = pneg %p315
        %p957 = pneg %p339
        %p958 = pneg %p336
        %p959 = pneg %p360
        %p960 = pneg %p357
        %p961 = pneg %p381
        %p962 = pneg %p378
        %p963 = pneg %p402
        %p964 = pneg %p399
        %p965 = pneg %p423
        %p966 = pneg %p420
        %p967 = pneg %p444
        %p968 = pneg %p441
        %p969 = pneg %p465
        %p970 = pneg %p462
        %p971 = pneg %p486
        %p972 = pneg %p483
        %p973 = pneg %p507
        %p974 = pneg %p504
        %p975 = pneg %p533
        %p976 = pneg %p530
        %p977 = scmp.lt.s32.totalorder %s45, 1
        %s978 = scalar_select %p977, %s45, 1
        %s979 = smul.addr %s978, 5
        %s980 = scalar_lea.vmem %s22, %s979
        %p981 = pneg %p559
        %p982 = pneg %p556
        %p983 = scmp.lt.s32.totalorder %s45, 1
        %s984 = scalar_select %p983, %s45, 1
        %s985 = smul.addr %s984, 10
        %s986 = scalar_lea.vmem %s23, %s985
        %p987 = scmp.lt.s32.totalorder %s45, 1
        %s988 = scalar_select %p987, %s45, 1
        %s989 = smul.addr %s988, 2
        %s990 = smul.addr %s989, 4
        %s991 = scalar_lea.vmem %s0, %s990
        %p992 = scmp.lt.s32.totalorder %s45, 1
        %s993 = scalar_select %p992, %s45, 1
        %s994 = smul.addr %s993, 5
        %s995 = scalar_lea.vmem %s22, %s994
        %p996 = scmp.lt.s32.totalorder %s45, 1
        %s997 = scalar_select %p996, %s45, 1
        %s998 = smul.addr %s997, 10
        %s999 = scalar_lea.vmem %s23, %s998
        %v1000 = vld [vmem:[%s991] sm:$0xf]
        %v1001 = vld [vmem:[%s991 + $0x4] sm:$0xf]
        %v1002 = vld [vmem:[#allocation2] sm:$0xff]
        %v1003 = vld [vmem:[#allocation2 + $0x8] sm:$0xff]
        %v1004 = vld [vmem:[#allocation2 + $0x10] sm:$0xff]
        %v1005 = vld [vmem:[#allocation2 + $0x18] sm:$0xff]
        %v1006 = vld [vmem:[#allocation2 + $0x20] sm:$0xff]
        %v1007 = vld [vmem:[#allocation2 + $0x28] sm:$0xff]
        %v1008 = vld [vmem:[#allocation2 + $0x30] sm:$0xff]
        %v1009 = vld [vmem:[#allocation2 + $0x38] sm:$0xff]
        %v1010 = vld [vmem:[#allocation2 + $0x40] sm:$0xff]
        %v1011 = vld [vmem:[#allocation2 + $0x48] sm:$0xff]
        %v1012 = vld [vmem:[#allocation2 + $0x50] sm:$0xff]
        %v1013 = vld [vmem:[#allocation2 + $0x58] sm:$0xff]
        %v1014 = vld [vmem:[#allocation2 + $0x60] sm:$0xff]
        %v1015 = vld [vmem:[#allocation2 + $0x68] sm:$0xff]
        %v1016 = vld [vmem:[#allocation2 + $0x70] sm:$0xff]
        %v1017 = vld [vmem:[#allocation2 + $0x78] sm:$0xff]
        %v1018 = vld [vmem:[#allocation4] sm:$0x3]
        %v1020 = vperm.slane %v1018, 0
        %v1021 = vperm.slane %v1018, 1
        %v1026 = vunpack.c.l.b16 %v1000
        %v1027 = vunpack.c.l.b16 %v1001
        %v1028 = vpack.c.b16 %v1027, %v1026
        %v1046 = vunpack.c.l.b16 %v1002
        %v1047 = vunpack.c.h.b16 %v1002
        %v1048 = vunpack.c.l.b16 %v1003
        %v1049 = vunpack.c.h.b16 %v1003
        %v1050 = vunpack.c.l.b16 %v1004
        %v1051 = vunpack.c.h.b16 %v1004
        %v1052 = vunpack.c.l.b16 %v1005
        %v1053 = vunpack.c.h.b16 %v1005
        %v1054 = vunpack.c.l.b16 %v1006
        %v1055 = vunpack.c.h.b16 %v1006
        %v1056 = vunpack.c.l.b16 %v1007
        %v1057 = vunpack.c.h.b16 %v1007
        %v1058 = vunpack.c.l.b16 %v1008
        %v1059 = vunpack.c.h.b16 %v1008
        %v1060 = vunpack.c.l.b16 %v1009
        %v1061 = vunpack.c.h.b16 %v1009
        %v1062 = vunpack.c.l.b16 %v1010
        %v1063 = vunpack.c.h.b16 %v1010
        %v1064 = vunpack.c.l.b16 %v1011
        %v1065 = vunpack.c.h.b16 %v1011
        %v1066 = vunpack.c.l.b16 %v1012
        %v1067 = vunpack.c.h.b16 %v1012
        %v1068 = vunpack.c.l.b16 %v1013
        %v1069 = vunpack.c.h.b16 %v1013
        %v1070 = vunpack.c.l.b16 %v1014
        %v1071 = vunpack.c.h.b16 %v1014
        %v1072 = vunpack.c.l.b16 %v1015
        %v1073 = vunpack.c.h.b16 %v1015
        %v1074 = vunpack.c.l.b16 %v1016
        %v1075 = vunpack.c.h.b16 %v1016
        %v1076 = vunpack.c.l.b16 %v1017
        %v1077 = vunpack.c.h.b16 %v1017
        %v1078 = vpack.c.b16 %v1048, %v1046
        %v1079 = vpack.c.b16 %v1049, %v1047
        %v1080 = vpack.c.b16 %v1052, %v1050
        %v1081 = vpack.c.b16 %v1053, %v1051
        %v1082 = vpack.c.b16 %v1056, %v1054
        %v1083 = vpack.c.b16 %v1057, %v1055
        %v1084 = vpack.c.b16 %v1060, %v1058
        %v1085 = vpack.c.b16 %v1061, %v1059
        %v1086 = vpack.c.b16 %v1064, %v1062
        %v1087 = vpack.c.b16 %v1065, %v1063
        %v1088 = vpack.c.b16 %v1068, %v1066
        %v1089 = vpack.c.b16 %v1069, %v1067
        %v1090 = vpack.c.b16 %v1072, %v1070
        %v1091 = vpack.c.b16 %v1073, %v1071
        %v1092 = vpack.c.b16 %v1076, %v1074
        %v1093 = vpack.c.b16 %v1077, %v1075
        %1110 = vmatpush.bf16.msra.mxu0 %v1092
        %1111 = vmatpush.bf16.msra.mxu0 %v1090
        %1112 = vmatpush.bf16.msra.mxu0 %v1088
        %1113 = vmatpush.bf16.msra.mxu0 %v1086
        %1114 = vmatpush.bf16.msra.mxu0 %v1084
        %1115 = vmatpush.bf16.msra.mxu0 %v1082
        %1116 = vmatpush.bf16.msra.mxu0 %v1080
        %1117 = vmatpush.bf16.msra.mxu0 %v1078
        %1118 = vmatmul.bf16.gmra.mxu0 %v1028
        %v1119 = vpop.f32.mrf.mxu0
        %v1120 = vadd.f32 %v1020, %v1119
        %v1121 = vpop.f32.mrf.mxu0
        %v1122 = vadd.f32 %v1020, %v1121
        %1123 = vdwg.mxu0
        %1124 = vmatpush.bf16.msra.mxu0 %v1093
        %1125 = vmatpush.bf16.msra.mxu0 %v1091
        %1126 = vmatpush.bf16.msra.mxu0 %v1089
        %1127 = vmatpush.bf16.msra.mxu0 %v1087
        %1128 = vmatpush.bf16.msra.mxu0 %v1085
        %1129 = vmatpush.bf16.msra.mxu0 %v1083
        %1130 = vmatpush.bf16.msra.mxu0 %v1081
        %1131 = vmatpush.bf16.msra.mxu0 %v1079
        %1132 = vmatmul.bf16.gmra.mxu0 %v1028
        %v1133 = vpop.f32.mrf.mxu0
        %v1134 = vadd.f32 %v1021, %v1133
        %v1135 = vpop.f32.mrf.mxu0
        %v1136 = vadd.f32 %v1021, %v1135
        %1137 = vdwg.mxu0
        %v1138 = vmax.f32 %v1120, 0.0
        %v1139 = vmax.f32 %v1134, 0.0
        %v1140 = vmax.f32 %v1122, 0.0
        %v1141 = vmax.f32 %v1136, 0.0
        %v1142 = vpack.c.bf16 %v1140, %v1138
        %v1143 = vpack.c.bf16 %v1141, %v1139
        %v1144 = vld [vmem:[%s3] sm:$0xff]
        %v1145 = vld [vmem:[%s3 + $0x8] sm:$0xff]
        %v1146 = vld [vmem:[%s3 + $0x10] sm:$0xff]
        %v1147 = vld [vmem:[%s3 + $0x18] sm:$0xff]
        %v1148 = vld [vmem:[%s3 + $0x20] sm:$0xff]
        %v1149 = vld [vmem:[%s3 + $0x28] sm:$0xff]
        %v1150 = vld [vmem:[%s3 + $0x30] sm:$0xff]
        %v1151 = vld [vmem:[%s3 + $0x38] sm:$0xff]
        %v1152 = vld [vmem:[%s3 + $0x40] sm:$0xff]
        %v1153 = vld [vmem:[%s3 + $0x48] sm:$0xff]
        %v1154 = vld [vmem:[%s3 + $0x50] sm:$0xff]
        %v1155 = vld [vmem:[%s3 + $0x58] sm:$0xff]
        %v1156 = vld [vmem:[%s3 + $0x60] sm:$0xff]
        %v1157 = vld [vmem:[%s3 + $0x68] sm:$0xff]
        %v1158 = vld [vmem:[%s3 + $0x70] sm:$0xff]
        %v1159 = vld [vmem:[%s3 + $0x78] sm:$0xff]
        %v1160 = vld [vmem:[%s3 + $0x80] sm:$0xff]
        %v1161 = vld [vmem:[%s3 + $0x88] sm:$0xff]
        %v1162 = vld [vmem:[%s3 + $0x90] sm:$0xff]
        %v1163 = vld [vmem:[%s3 + $0x98] sm:$0xff]
        %v1164 = vld [vmem:[%s3 + $0xa0] sm:$0xff]
        %v1165 = vld [vmem:[%s3 + $0xa8] sm:$0xff]
        %v1166 = vld [vmem:[%s3 + $0xb0] sm:$0xff]
        %v1167 = vld [vmem:[%s3 + $0xb8] sm:$0xff]
        %v1168 = vld [vmem:[%s3 + $0xc0] sm:$0xff]
        %v1169 = vld [vmem:[%s3 + $0xc8] sm:$0xff]
        %v1170 = vld [vmem:[%s3 + $0xd0] sm:$0xff]
        %v1171 = vld [vmem:[%s3 + $0xd8] sm:$0xff]
        %v1172 = vld [vmem:[%s3 + $0xe0] sm:$0xff]
        %v1173 = vld [vmem:[%s3 + $0xe8] sm:$0xff]
        %v1174 = vld [vmem:[%s3 + $0xf0] sm:$0xff]
        %v1175 = vld [vmem:[%s3 + $0xf8] sm:$0xff]
        %v1208 = vunpack.c.l.b16 %v1144
        %v1209 = vunpack.c.h.b16 %v1144
        %v1210 = vunpack.c.l.b16 %v1145
        %v1211 = vunpack.c.h.b16 %v1145
        %v1212 = vunpack.c.l.b16 %v1146
        %v1213 = vunpack.c.h.b16 %v1146
        %v1214 = vunpack.c.l.b16 %v1147
        %v1215 = vunpack.c.h.b16 %v1147
        %v1216 = vunpack.c.l.b16 %v1148
        %v1217 = vunpack.c.h.b16 %v1148
        %v1218 = vunpack.c.l.b16 %v1149
        %v1219 = vunpack.c.h.b16 %v1149
        %v1220 = vunpack.c.l.b16 %v1150
        %v1221 = vunpack.c.h.b16 %v1150
        %v1222 = vunpack.c.l.b16 %v1151
        %v1223 = vunpack.c.h.b16 %v1151
        %v1224 = vunpack.c.l.b16 %v1152
        %v1225 = vunpack.c.h.b16 %v1152
        %v1226 = vunpack.c.l.b16 %v1153
        %v1227 = vunpack.c.h.b16 %v1153
        %v1228 = vunpack.c.l.b16 %v1154
        %v1229 = vunpack.c.h.b16 %v1154
        %v1230 = vunpack.c.l.b16 %v1155
        %v1231 = vunpack.c.h.b16 %v1155
        %v1232 = vunpack.c.l.b16 %v1156
        %v1233 = vunpack.c.h.b16 %v1156
        %v1234 = vunpack.c.l.b16 %v1157
        %v1235 = vunpack.c.h.b16 %v1157
        %v1236 = vunpack.c.l.b16 %v1158
        %v1237 = vunpack.c.h.b16 %v1158
        %v1238 = vunpack.c.l.b16 %v1159
        %v1239 = vunpack.c.h.b16 %v1159
        %v1240 = vunpack.c.l.b16 %v1160
        %v1241 = vunpack.c.h.b16 %v1160
        %v1242 = vunpack.c.l.b16 %v1161
        %v1243 = vunpack.c.h.b16 %v1161
        %v1244 = vunpack.c.l.b16 %v1162
        %v1245 = vunpack.c.h.b16 %v1162
        %v1246 = vunpack.c.l.b16 %v1163
        %v1247 = vunpack.c.h.b16 %v1163
        %v1248 = vunpack.c.l.b16 %v1164
        %v1249 = vunpack.c.h.b16 %v1164
        %v1250 = vunpack.c.l.b16 %v1165
        %v1251 = vunpack.c.h.b16 %v1165
        %v1252 = vunpack.c.l.b16 %v1166
        %v1253 = vunpack.c.h.b16 %v1166
        %v1254 = vunpack.c.l.b16 %v1167
        %v1255 = vunpack.c.h.b16 %v1167
        %v1256 = vunpack.c.l.b16 %v1168
        %v1257 = vunpack.c.h.b16 %v1168
        %v1258 = vunpack.c.l.b16 %v1169
        %v1259 = vunpack.c.h.b16 %v1169
        %v1260 = vunpack.c.l.b16 %v1170
        %v1261 = vunpack.c.h.b16 %v1170
        %v1262 = vunpack.c.l.b16 %v1171
        %v1263 = vunpack.c.h.b16 %v1171
        %v1264 = vunpack.c.l.b16 %v1172
        %v1265 = vunpack.c.h.b16 %v1172
        %v1266 = vunpack.c.l.b16 %v1173
        %v1267 = vunpack.c.h.b16 %v1173
        %v1268 = vunpack.c.l.b16 %v1174
        %v1269 = vunpack.c.h.b16 %v1174
        %v1270 = vunpack.c.l.b16 %v1175
        %v1271 = vunpack.c.h.b16 %v1175
        %v1272 = vpack.c.b16 %v1210, %v1208
        %v1273 = vpack.c.b16 %v1211, %v1209
        %v1274 = vpack.c.b16 %v1214, %v1212
        %v1275 = vpack.c.b16 %v1215, %v1213
        %v1276 = vpack.c.b16 %v1218, %v1216
        %v1277 = vpack.c.b16 %v1219, %v1217
        %v1278 = vpack.c.b16 %v1222, %v1220
        %v1279 = vpack.c.b16 %v1223, %v1221
        %v1280 = vpack.c.b16 %v1226, %v1224
        %v1281 = vpack.c.b16 %v1227, %v1225
        %v1282 = vpack.c.b16 %v1230, %v1228
        %v1283 = vpack.c.b16 %v1231, %v1229
        %v1284 = vpack.c.b16 %v1234, %v1232
        %v1285 = vpack.c.b16 %v1235, %v1233
        %v1286 = vpack.c.b16 %v1238, %v1236
        %v1287 = vpack.c.b16 %v1239, %v1237
        %v1288 = vpack.c.b16 %v1242, %v1240
        %v1289 = vpack.c.b16 %v1243, %v1241
        %v1290 = vpack.c.b16 %v1246, %v1244
        %v1291 = vpack.c.b16 %v1247, %v1245
        %v1292 = vpack.c.b16 %v1250, %v1248
        %v1293 = vpack.c.b16 %v1251, %v1249
        %v1294 = vpack.c.b16 %v1254, %v1252
        %v1295 = vpack.c.b16 %v1255, %v1253
        %v1296 = vpack.c.b16 %v1258, %v1256
        %v1297 = vpack.c.b16 %v1259, %v1257
        %v1298 = vpack.c.b16 %v1262, %v1260
        %v1299 = vpack.c.b16 %v1263, %v1261
        %v1300 = vpack.c.b16 %v1266, %v1264
        %v1301 = vpack.c.b16 %v1267, %v1265
        %v1302 = vpack.c.b16 %v1270, %v1268
        %v1303 = vpack.c.b16 %v1271, %v1269
        %1336 = vmatpush.bf16.msra.mxu0 %v1286
        %1337 = vmatpush.bf16.msra.mxu0 %v1284
        %1338 = vmatpush.bf16.msra.mxu0 %v1282
        %1339 = vmatpush.bf16.msra.mxu0 %v1280
        %1340 = vmatpush.bf16.msra.mxu0 %v1278
        %1341 = vmatpush.bf16.msra.mxu0 %v1276
        %1342 = vmatpush.bf16.msra.mxu0 %v1274
        %1343 = vmatpush.bf16.msra.mxu0 %v1272
        %1344 = vmatmul.bf16.gmra.mxu0 %v1142
        %v1345 = vpop.f32.mrf.mxu0
        %v1346 = vadd.f32 0.0, %v1345
        %v1347 = vpop.f32.mrf.mxu0
        %v1348 = vadd.f32 0.0, %v1347
        %1349 = vdwg.mxu0
        %1350 = vmatpush.bf16.msra.mxu0 %v1302
        %1351 = vmatpush.bf16.msra.mxu0 %v1300
        %1352 = vmatpush.bf16.msra.mxu0 %v1298
        %1353 = vmatpush.bf16.msra.mxu0 %v1296
        %1354 = vmatpush.bf16.msra.mxu0 %v1294
        %1355 = vmatpush.bf16.msra.mxu0 %v1292
        %1356 = vmatpush.bf16.msra.mxu0 %v1290
        %1357 = vmatpush.bf16.msra.mxu0 %v1288
        %1358 = vmatmul.bf16.gmra.mxu0 %v1143
        %v1359 = vpop.f32.mrf.mxu0
        %v1360 = vadd.f32 %v1346, %v1359
        %v1361 = vpop.f32.mrf.mxu0
        %v1362 = vadd.f32 %v1348, %v1361
        %1363 = vdwg.mxu0
        %1364 = vmatpush.bf16.msra.mxu0 %v1287
        %1365 = vmatpush.bf16.msra.mxu0 %v1285
        %1366 = vmatpush.bf16.msra.mxu0 %v1283
        %1367 = vmatpush.bf16.msra.mxu0 %v1281
        %1368 = vmatpush.bf16.msra.mxu0 %v1279
        %1369 = vmatpush.bf16.msra.mxu0 %v1277
        %1370 = vmatpush.bf16.msra.mxu0 %v1275
        %1371 = vmatpush.bf16.msra.mxu0 %v1273
        %1372 = vmatmul.bf16.gmra.mxu0 %v1142
        %v1373 = vpop.f32.mrf.mxu0
        %v1374 = vadd.f32 0.0, %v1373
        %v1375 = vpop.f32.mrf.mxu0
        %v1376 = vadd.f32 0.0, %v1375
        %1377 = vdwg.mxu0
        %1378 = vmatpush.bf16.msra.mxu0 %v1303
        %1379 = vmatpush.bf16.msra.mxu0 %v1301
        %1380 = vmatpush.bf16.msra.mxu0 %v1299
        %1381 = vmatpush.bf16.msra.mxu0 %v1297
        %1382 = vmatpush.bf16.msra.mxu0 %v1295
        %1383 = vmatpush.bf16.msra.mxu0 %v1293
        %1384 = vmatpush.bf16.msra.mxu0 %v1291
        %1385 = vmatpush.bf16.msra.mxu0 %v1289
        %1386 = vmatmul.bf16.gmra.mxu0 %v1143
        %v1387 = vpop.f32.mrf.mxu0
        %v1388 = vadd.f32 %v1374, %v1387
        %v1389 = vpop.f32.mrf.mxu0
        %v1390 = vadd.f32 %v1376, %v1389
        %1391 = vdwg.mxu0
        %v1392 = vld [vmem:[#allocation6] ss:$2 sm:$0x3]
        %v1394 = vperm.slane %v1392, 0
        %v1395 = vperm.slane %v1392, 1
        %v1398 = vmul.f32 %v1360, %v1394
        %v1399 = vmul.f32 %v1388, %v1395
        %v1400 = vmul.f32 %v1362, %v1394
        %v1401 = vmul.f32 %v1390, %v1395
        %s1402 = scalar_lea.vmem [#allocation6], 1
        %v1403 = vld [vmem:[%s1402] ss:$2 sm:$0x3]
        %v1405 = vperm.slane %v1403, 0
        %v1406 = vperm.slane %v1403, 1
        %v1409 = vadd.f32 %v1398, %v1405
        %v1410 = vadd.f32 %v1399, %v1406
        %v1411 = vadd.f32 %v1400, %v1405
        %v1412 = vadd.f32 %v1401, %v1406
        %v1413 = vmax.f32 %v1409, 0.0
        %v1414 = vmax.f32 %v1410, 0.0
        %v1415 = vmax.f32 %v1411, 0.0
        %v1416 = vmax.f32 %v1412, 0.0
        %v1417 = vld [vmem:[#allocation7] sm:$0xf]
        %vm1418 = vcmask 130048
        %v1420 = vsel %vm1418, %v1417, 0
        %1422 = vmatpush.msra.mxu0 0.0
        %1423 = vmatpush.msra.mxu0 0.0
        %1424 = vmatpush.msra.mxu0 0.0
        %1425 = vmatpush.msra.mxu0 0.0
        %1426 = vmatpush.msra.mxu0 0.0
        %1427 = vmatpush.msra.mxu0 0.0
        %1428 = vmatpush.msra.mxu0 0.0
        %1429 = vmatpush.msra.mxu0 0.0
        %1430 = vmatpush.msra.mxu0 0.0
        %1431 = vmatpush.msra.mxu0 0.0
        %1432 = vmatpush.msra.mxu0 0.0
        %1433 = vmatpush.msra.mxu0 0.0
        %1434 = vmatpush.msra.mxu0 0.0
        %1435 = vmatpush.msra.mxu0 0.0
        %1436 = vmatpush.msra.mxu0 %v1415
        %1437 = vmatpush.msra.mxu0 %v1413
        %1438 = vmatmul.f32.gmra.mxu0 %v1420
        %v1439 = vpop.f32.mrf.mxu0
        %v1440 = vadd.f32 0.0, %v1439
        %1441 = vdwg.mxu0
        %1442 = vmatpush.msra.mxu0 0.0
        %1443 = vmatpush.msra.mxu0 0.0
        %1444 = vmatpush.msra.mxu0 0.0
        %1445 = vmatpush.msra.mxu0 0.0
        %1446 = vmatpush.msra.mxu0 0.0
        %1447 = vmatpush.msra.mxu0 0.0
        %1448 = vmatpush.msra.mxu0 0.0
        %1449 = vmatpush.msra.mxu0 0.0
        %1450 = vmatpush.msra.mxu0 0.0
        %1451 = vmatpush.msra.mxu0 0.0
        %1452 = vmatpush.msra.mxu0 0.0
        %1453 = vmatpush.msra.mxu0 0.0
        %1454 = vmatpush.msra.mxu0 0.0
        %1455 = vmatpush.msra.mxu0 0.0
        %1456 = vmatpush.msra.mxu0 %v1416
        %1457 = vmatpush.msra.mxu0 %v1414
        %1458 = vmatmul.f32.gmra.mxu0 %v1420
        %v1459 = vpop.f32.mrf.mxu0
        %v1460 = vadd.f32 0.0, %v1459
        %1461 = vdwg.mxu0
        %v1462 = vld [vmem:[#allocation12] sm:$0xff]
        %v1463 = vld [vmem:[#allocation12 + $0x8] sm:$0xff]
        %v1464 = vld [vmem:[#allocation12 + $0x10] sm:$0xff]
        %v1465 = vld [vmem:[#allocation12 + $0x18] sm:$0xff]
        %v1466 = vld [vmem:[#allocation12 + $0x20] sm:$0xff]
        %v1467 = vld [vmem:[#allocation12 + $0x28] sm:$0xff]
        %v1468 = vld [vmem:[#allocation12 + $0x30] sm:$0xff]
        %v1469 = vld [vmem:[#allocation12 + $0x38] sm:$0xff]
        %v1470 = vld [vmem:[#allocation12 + $0x40] sm:$0xff]
        %v1471 = vld [vmem:[#allocation12 + $0x48] sm:$0xff]
        %v1472 = vld [vmem:[#allocation12 + $0x50] sm:$0xff]
        %v1473 = vld [vmem:[#allocation12 + $0x58] sm:$0xff]
        %v1474 = vld [vmem:[#allocation12 + $0x60] sm:$0xff]
        %v1475 = vld [vmem:[#allocation12 + $0x68] sm:$0xff]
        %v1476 = vld [vmem:[#allocation12 + $0x70] sm:$0xff]
        %v1477 = vld [vmem:[#allocation12 + $0x78] sm:$0xff]
        %v1478 = vld [vmem:[#allocation12 + $0x80] sm:$0xff]
        %v1479 = vld [vmem:[#allocation12 + $0x88] sm:$0xff]
        %v1480 = vld [vmem:[#allocation12 + $0x90] sm:$0xff]
        %v1481 = vld [vmem:[#allocation12 + $0x98] sm:$0xff]
        %v1482 = vld [vmem:[#allocation12 + $0xa0] sm:$0xff]
        %v1483 = vld [vmem:[#allocation12 + $0xa8] sm:$0xff]
        %v1484 = vld [vmem:[#allocation12 + $0xb0] sm:$0xff]
        %v1485 = vld [vmem:[#allocation12 + $0xb8] sm:$0xff]
        %v1486 = vld [vmem:[#allocation12 + $0xc0] sm:$0xff]
        %v1487 = vld [vmem:[#allocation12 + $0xc8] sm:$0xff]
        %v1488 = vld [vmem:[#allocation12 + $0xd0] sm:$0xff]
        %v1489 = vld [vmem:[#allocation12 + $0xd8] sm:$0xff]
        %v1490 = vld [vmem:[#allocation12 + $0xe0] sm:$0xff]
        %v1491 = vld [vmem:[#allocation12 + $0xe8] sm:$0xff]
        %v1492 = vld [vmem:[#allocation12 + $0xf0] sm:$0xff]
        %v1493 = vld [vmem:[#allocation12 + $0xf8] sm:$0xff]
        %v1494 = vld [vmem:[#allocation13] sm:$0xf]
        %v1495 = vld [vmem:[#allocation15] sm:$0xf]
        %v1496 = vld [vmem:[#allocation15 + $0x4] sm:$0xf]
        %v1497 = vld [vmem:[#allocation15 + $0x8] sm:$0xf]
        %v1498 = vld [vmem:[#allocation15 + $0xc] sm:$0xf]
        %v1499 = vld [vmem:[#allocation15 + $0x10] sm:$0xf]
        %v1500 = vld [vmem:[#allocation15 + $0x14] sm:$0xf]
        %v1501 = vld [vmem:[#allocation15 + $0x18] sm:$0xf]
        %v1502 = vld [vmem:[#allocation15 + $0x1c] sm:$0xf]
        %v1503 = vld [vmem:[#allocation15 + $0x20] sm:$0xf]
        %v1504 = vld [vmem:[#allocation15 + $0x24] sm:$0xf]
        %v1505 = vld [vmem:[#allocation15 + $0x28] sm:$0xf]
        %v1506 = vld [vmem:[#allocation15 + $0x2c] sm:$0xf]
        %v1507 = vld [vmem:[#allocation15 + $0x30] sm:$0xf]
        %v1508 = vld [vmem:[#allocation15 + $0x34] sm:$0xf]
        %v1509 = vld [vmem:[#allocation15 + $0x38] sm:$0xf]
        %v1510 = vld [vmem:[#allocation15 + $0x3c] sm:$0xf]
        %v1511 = vld [vmem:[#allocation15 + $0x40] sm:$0xf]
        %v1512 = vld [vmem:[#allocation15 + $0x44] sm:$0xf]
        %v1513 = vld [vmem:[#allocation15 + $0x48] sm:$0xf]
        %v1514 = vld [vmem:[#allocation15 + $0x4c] sm:$0xf]
        %v1515 = vld [vmem:[#allocation15 + $0x50] sm:$0xf]
        %v1516 = vld [vmem:[#allocation15 + $0x54] sm:$0xf]
        %v1517 = vld [vmem:[#allocation15 + $0x58] sm:$0xf]
        %v1518 = vld [vmem:[#allocation15 + $0x5c] sm:$0xf]
        %v1519 = vld [vmem:[#allocation15 + $0x60] sm:$0xf]
        %v1520 = vld [vmem:[#allocation15 + $0x64] sm:$0xf]
        %v1521 = vld [vmem:[#allocation15 + $0x68] sm:$0xf]
        %v1522 = vld [vmem:[#allocation15 + $0x6c] sm:$0xf]
        %v1523 = vld [vmem:[#allocation15 + $0x70] sm:$0xf]
        %v1524 = vld [vmem:[#allocation15 + $0x74] sm:$0xf]
        %v1525 = vld [vmem:[#allocation15 + $0x78] sm:$0xf]
        %v1526 = vld [vmem:[#allocation15 + $0x7c] sm:$0xf]
        %v1527 = vld [vmem:[#allocation16] sm:$0x1]
        %v1528 = vpack.c.bf16 %v1440, %v1440
        %v1529 = vpack.c.bf16 %v1460, %v1460
        %v1562 = vunpack.c.l.b16 %v1462
        %v1563 = vunpack.c.h.b16 %v1462
        %v1564 = vunpack.c.l.b16 %v1463
        %v1565 = vunpack.c.h.b16 %v1463
        %v1566 = vunpack.c.l.b16 %v1464
        %v1567 = vunpack.c.h.b16 %v1464
        %v1568 = vunpack.c.l.b16 %v1465
        %v1569 = vunpack.c.h.b16 %v1465
        %v1570 = vunpack.c.l.b16 %v1466
        %v1571 = vunpack.c.h.b16 %v1466
        %v1572 = vunpack.c.l.b16 %v1467
        %v1573 = vunpack.c.h.b16 %v1467
        %v1574 = vunpack.c.l.b16 %v1468
        %v1575 = vunpack.c.h.b16 %v1468
        %v1576 = vunpack.c.l.b16 %v1469
        %v1577 = vunpack.c.h.b16 %v1469
        %v1578 = vunpack.c.l.b16 %v1470
        %v1579 = vunpack.c.h.b16 %v1470
        %v1580 = vunpack.c.l.b16 %v1471
        %v1581 = vunpack.c.h.b16 %v1471
        %v1582 = vunpack.c.l.b16 %v1472
        %v1583 = vunpack.c.h.b16 %v1472
        %v1584 = vunpack.c.l.b16 %v1473
        %v1585 = vunpack.c.h.b16 %v1473
        %v1586 = vunpack.c.l.b16 %v1474
        %v1587 = vunpack.c.h.b16 %v1474
        %v1588 = vunpack.c.l.b16 %v1475
        %v1589 = vunpack.c.h.b16 %v1475
        %v1590 = vunpack.c.l.b16 %v1476
        %v1591 = vunpack.c.h.b16 %v1476
        %v1592 = vunpack.c.l.b16 %v1477
        %v1593 = vunpack.c.h.b16 %v1477
        %v1594 = vunpack.c.l.b16 %v1478
        %v1595 = vunpack.c.h.b16 %v1478
        %v1596 = vunpack.c.l.b16 %v1479
        %v1597 = vunpack.c.h.b16 %v1479
        %v1598 = vunpack.c.l.b16 %v1480
        %v1599 = vunpack.c.h.b16 %v1480
        %v1600 = vunpack.c.l.b16 %v1481
        %v1601 = vunpack.c.h.b16 %v1481
        %v1602 = vunpack.c.l.b16 %v1482
        %v1603 = vunpack.c.h.b16 %v1482
        %v1604 = vunpack.c.l.b16 %v1483
        %v1605 = vunpack.c.h.b16 %v1483
        %v1606 = vunpack.c.l.b16 %v1484
        %v1607 = vunpack.c.h.b16 %v1484
        %v1608 = vunpack.c.l.b16 %v1485
        %v1609 = vunpack.c.h.b16 %v1485
        %v1610 = vunpack.c.l.b16 %v1486
        %v1611 = vunpack.c.h.b16 %v1486
        %v1612 = vunpack.c.l.b16 %v1487
        %v1613 = vunpack.c.h.b16 %v1487
        %v1614 = vunpack.c.l.b16 %v1488
        %v1615 = vunpack.c.h.b16 %v1488
        %v1616 = vunpack.c.l.b16 %v1489
        %v1617 = vunpack.c.h.b16 %v1489
        %v1618 = vunpack.c.l.b16 %v1490
        %v1619 = vunpack.c.h.b16 %v1490
        %v1620 = vunpack.c.l.b16 %v1491
        %v1621 = vunpack.c.h.b16 %v1491
        %v1622 = vunpack.c.l.b16 %v1492
        %v1623 = vunpack.c.h.b16 %v1492
        %v1624 = vunpack.c.l.b16 %v1493
        %v1625 = vunpack.c.h.b16 %v1493
        %v1626 = vpack.c.b16 %v1564, %v1562
        %v1627 = vpack.c.b16 %v1565, %v1563
        %v1628 = vpack.c.b16 %v1568, %v1566
        %v1629 = vpack.c.b16 %v1569, %v1567
        %v1630 = vpack.c.b16 %v1572, %v1570
        %v1631 = vpack.c.b16 %v1573, %v1571
        %v1632 = vpack.c.b16 %v1576, %v1574
        %v1633 = vpack.c.b16 %v1577, %v1575
        %v1634 = vpack.c.b16 %v1580, %v1578
        %v1635 = vpack.c.b16 %v1581, %v1579
        %v1636 = vpack.c.b16 %v1584, %v1582
        %v1637 = vpack.c.b16 %v1585, %v1583
        %v1638 = vpack.c.b16 %v1588, %v1586
        %v1639 = vpack.c.b16 %v1589, %v1587
        %v1640 = vpack.c.b16 %v1592, %v1590
        %v1641 = vpack.c.b16 %v1593, %v1591
        %v1642 = vpack.c.b16 %v1596, %v1594
        %v1643 = vpack.c.b16 %v1597, %v1595
        %v1644 = vpack.c.b16 %v1600, %v1598
        %v1645 = vpack.c.b16 %v1601, %v1599
        %v1646 = vpack.c.b16 %v1604, %v1602
        %v1647 = vpack.c.b16 %v1605, %v1603
        %v1648 = vpack.c.b16 %v1608, %v1606
        %v1649 = vpack.c.b16 %v1609, %v1607
        %v1650 = vpack.c.b16 %v1612, %v1610
        %v1651 = vpack.c.b16 %v1613, %v1611
        %v1652 = vpack.c.b16 %v1616, %v1614
        %v1653 = vpack.c.b16 %v1617, %v1615
        %v1654 = vpack.c.b16 %v1620, %v1618
        %v1655 = vpack.c.b16 %v1621, %v1619
        %v1656 = vpack.c.b16 %v1624, %v1622
        %v1657 = vpack.c.b16 %v1625, %v1623
        %1690 = vmatpush.bf16.msra.mxu0 %v1640
        %1691 = vmatpush.bf16.msra.mxu0 %v1638
        %1692 = vmatpush.bf16.msra.mxu0 %v1636
        %1693 = vmatpush.bf16.msra.mxu0 %v1634
        %1694 = vmatpush.bf16.msra.mxu0 %v1632
        %1695 = vmatpush.bf16.msra.mxu0 %v1630
        %1696 = vmatpush.bf16.msra.mxu0 %v1628
        %1697 = vmatpush.bf16.msra.mxu0 %v1626
        %1698 = vmatmul.bf16.gmra.mxu0 %v1528
        %v1699 = vpop.f32.mrf.mxu0
        %v1700 = vadd.f32 0.0, %v1699
        %v1701 = vpop.f32.mrf.mxu0
        %1702 = vdwg.mxu0
        %1703 = vmatpush.bf16.msra.mxu0 %v1656
        %1704 = vmatpush.bf16.msra.mxu0 %v1654
        %1705 = vmatpush.bf16.msra.mxu0 %v1652
        %1706 = vmatpush.bf16.msra.mxu0 %v1650
        %1707 = vmatpush.bf16.msra.mxu0 %v1648
        %1708 = vmatpush.bf16.msra.mxu0 %v1646
        %1709 = vmatpush.bf16.msra.mxu0 %v1644
        %1710 = vmatpush.bf16.msra.mxu0 %v1642
        %1711 = vmatmul.bf16.gmra.mxu0 %v1529
        %v1712 = vpop.f32.mrf.mxu0
        %v1713 = vadd.f32 %v1700, %v1712
        %v1714 = vpop.f32.mrf.mxu0
        %1715 = vdwg.mxu0
        %1716 = vmatpush.bf16.msra.mxu0 %v1641
        %1717 = vmatpush.bf16.msra.mxu0 %v1639
        %1718 = vmatpush.bf16.msra.mxu0 %v1637
        %1719 = vmatpush.bf16.msra.mxu0 %v1635
        %1720 = vmatpush.bf16.msra.mxu0 %v1633
        %1721 = vmatpush.bf16.msra.mxu0 %v1631
        %1722 = vmatpush.bf16.msra.mxu0 %v1629
        %1723 = vmatpush.bf16.msra.mxu0 %v1627
        %1724 = vmatmul.bf16.gmra.mxu0 %v1528
        %v1725 = vpop.f32.mrf.mxu0
        %v1726 = vadd.f32 0.0, %v1725
        %v1727 = vpop.f32.mrf.mxu0
        %1728 = vdwg.mxu0
        %1729 = vmatpush.bf16.msra.mxu0 %v1657
        %1730 = vmatpush.bf16.msra.mxu0 %v1655
        %1731 = vmatpush.bf16.msra.mxu0 %v1653
        %1732 = vmatpush.bf16.msra.mxu0 %v1651
        %1733 = vmatpush.bf16.msra.mxu0 %v1649
        %1734 = vmatpush.bf16.msra.mxu0 %v1647
        %1735 = vmatpush.bf16.msra.mxu0 %v1645
        %1736 = vmatpush.bf16.msra.mxu0 %v1643
        %1737 = vmatmul.bf16.gmra.mxu0 %v1529
        %v1738 = vpop.f32.mrf.mxu0
        %v1739 = vadd.f32 %v1726, %v1738
        %v1740 = vpop.f32.mrf.mxu0
        %1741 = vdwg.mxu0
        %v1743 = vperm.slane %v1494, 0
        %v1744 = vperm.slane %v1494, 2
        %v1747 = vmul.f32 %v1713, %v1743
        %v1748 = vmul.f32 %v1739, %v1744
        %v1749 = vperm.slane %v1494, 1
        %v1750 = vperm.slane %v1494, 3
        %v1753 = vadd.f32 %v1747, %v1749
        %v1754 = vadd.f32 %v1748, %v1750
        %v1755 = vpack.c.bf16 %v1753, %v1753
        %v1756 = vpack.c.bf16 %v1754, %v1754
        %v1789 = vunpack.c.l.b16 %v1495
        %v1790 = vunpack.c.l.b16 %v1496
        %v1791 = vunpack.c.l.b16 %v1497
        %v1792 = vunpack.c.l.b16 %v1498
        %v1793 = vunpack.c.l.b16 %v1499
        %v1794 = vunpack.c.l.b16 %v1500
        %v1795 = vunpack.c.l.b16 %v1501
        %v1796 = vunpack.c.l.b16 %v1502
        %v1797 = vunpack.c.l.b16 %v1503
        %v1798 = vunpack.c.l.b16 %v1504
        %v1799 = vunpack.c.l.b16 %v1505
        %v1800 = vunpack.c.l.b16 %v1506
        %v1801 = vunpack.c.l.b16 %v1507
        %v1802 = vunpack.c.l.b16 %v1508
        %v1803 = vunpack.c.l.b16 %v1509
        %v1804 = vunpack.c.l.b16 %v1510
        %v1805 = vunpack.c.l.b16 %v1511
        %v1806 = vunpack.c.l.b16 %v1512
        %v1807 = vunpack.c.l.b16 %v1513
        %v1808 = vunpack.c.l.b16 %v1514
        %v1809 = vunpack.c.l.b16 %v1515
        %v1810 = vunpack.c.l.b16 %v1516
        %v1811 = vunpack.c.l.b16 %v1517
        %v1812 = vunpack.c.l.b16 %v1518
        %v1813 = vunpack.c.l.b16 %v1519
        %v1814 = vunpack.c.l.b16 %v1520
        %v1815 = vunpack.c.l.b16 %v1521
        %v1816 = vunpack.c.l.b16 %v1522
        %v1817 = vunpack.c.l.b16 %v1523
        %v1818 = vunpack.c.l.b16 %v1524
        %v1819 = vunpack.c.l.b16 %v1525
        %v1820 = vunpack.c.l.b16 %v1526
        %v1821 = vpack.c.b16 %v1790, %v1789
        %v1822 = vpack.c.b16 %v1792, %v1791
        %v1823 = vpack.c.b16 %v1794, %v1793
        %v1824 = vpack.c.b16 %v1796, %v1795
        %v1825 = vpack.c.b16 %v1798, %v1797
        %v1826 = vpack.c.b16 %v1800, %v1799
        %v1827 = vpack.c.b16 %v1802, %v1801
        %v1828 = vpack.c.b16 %v1804, %v1803
        %v1829 = vpack.c.b16 %v1806, %v1805
        %v1830 = vpack.c.b16 %v1808, %v1807
        %v1831 = vpack.c.b16 %v1810, %v1809
        %v1832 = vpack.c.b16 %v1812, %v1811
        %v1833 = vpack.c.b16 %v1814, %v1813
        %v1834 = vpack.c.b16 %v1816, %v1815
        %v1835 = vpack.c.b16 %v1818, %v1817
        %v1836 = vpack.c.b16 %v1820, %v1819
        %1853 = vmatpush.bf16.msra.mxu0 %v1828
        %1854 = vmatpush.bf16.msra.mxu0 %v1827
        %1855 = vmatpush.bf16.msra.mxu0 %v1826
        %1856 = vmatpush.bf16.msra.mxu0 %v1825
        %1857 = vmatpush.bf16.msra.mxu0 %v1824
        %1858 = vmatpush.bf16.msra.mxu0 %v1823
        %1859 = vmatpush.bf16.msra.mxu0 %v1822
        %1860 = vmatpush.bf16.msra.mxu0 %v1821
        %1861 = vmatmul.bf16.gmra.mxu0 %v1755
        %v1862 = vpop.f32.mrf.mxu0
        %v1863 = vadd.f32 %v1527, %v1862
        %v1864 = vpop.f32.mrf.mxu0
        %1865 = vdwg.mxu0
        %1866 = vmatpush.bf16.msra.mxu0 %v1836
        %1867 = vmatpush.bf16.msra.mxu0 %v1835
        %1868 = vmatpush.bf16.msra.mxu0 %v1834
        %1869 = vmatpush.bf16.msra.mxu0 %v1833
        %1870 = vmatpush.bf16.msra.mxu0 %v1832
        %1871 = vmatpush.bf16.msra.mxu0 %v1831
        %1872 = vmatpush.bf16.msra.mxu0 %v1830
        %1873 = vmatpush.bf16.msra.mxu0 %v1829
        %1874 = vmatmul.bf16.gmra.mxu0 %v1756
        %v1875 = vpop.f32.mrf.mxu0
        %v1876 = vadd.f32 %v1863, %v1875
        %v1877 = vpop.f32.mrf.mxu0
        %1878 = vdwg.mxu0
        %v1879 = vlaneseq
        %vm1880 = vcmp.ge.s32.totalorder %v1879, 0
        %vm1881 = vcmp.lt.s32.totalorder %v1879, 128
        %vm1882 = vmand %vm1880, %vm1881
        %1883 = vst.msk [vmem:[%s995] sm:$0x1] %vm1882, %v1876
        %v1886 = vrot.slane %v1754, 7
        %vm1887 = vcmask 1040384
        %v1888 = vsel %vm1887, %v1753, %v1886
        %vm1890 = vcmp.lt.s32.totalorder %v1879, 256
        %vm1891 = vmand %vm1880, %vm1890
        %1892 = vst.msk [vmem:[%s999] sm:$0x3] %vm1891, %v1888
        %v1893 = vld [vmem:[#allocation21] sm:$0xff]
        %v1894 = vld [vmem:[#allocation21 + $0x8] sm:$0xff]
        %v1895 = vld [vmem:[#allocation21 + $0x10] sm:$0xff]
        %v1896 = vld [vmem:[#allocation21 + $0x18] sm:$0xff]
        %v1897 = vld [vmem:[#allocation21 + $0x20] sm:$0xff]
        %v1898 = vld [vmem:[#allocation21 + $0x28] sm:$0xff]
        %v1899 = vld [vmem:[#allocation21 + $0x30] sm:$0xff]
        %v1900 = vld [vmem:[#allocation21 + $0x38] sm:$0xff]
        %v1901 = vld [vmem:[#allocation21 + $0x40] sm:$0xff]
        %v1902 = vld [vmem:[#allocation21 + $0x48] sm:$0xff]
        %v1903 = vld [vmem:[#allocation21 + $0x50] sm:$0xff]
        %v1904 = vld [vmem:[#allocation21 + $0x58] sm:$0xff]
        %v1905 = vld [vmem:[#allocation21 + $0x60] sm:$0xff]
        %v1906 = vld [vmem:[#allocation21 + $0x68] sm:$0xff]
        %v1907 = vld [vmem:[#allocation21 + $0x70] sm:$0xff]
        %v1908 = vld [vmem:[#allocation21 + $0x78] sm:$0xff]
        %v1909 = vld [vmem:[#allocation21 + $0x80] sm:$0xff]
        %v1910 = vld [vmem:[#allocation21 + $0x88] sm:$0xff]
        %v1911 = vld [vmem:[#allocation21 + $0x90] sm:$0xff]
        %v1912 = vld [vmem:[#allocation21 + $0x98] sm:$0xff]
        %v1913 = vld [vmem:[#allocation21 + $0xa0] sm:$0xff]
        %v1914 = vld [vmem:[#allocation21 + $0xa8] sm:$0xff]
        %v1915 = vld [vmem:[#allocation21 + $0xb0] sm:$0xff]
        %v1916 = vld [vmem:[#allocation21 + $0xb8] sm:$0xff]
        %v1917 = vld [vmem:[#allocation21 + $0xc0] sm:$0xff]
        %v1918 = vld [vmem:[#allocation21 + $0xc8] sm:$0xff]
        %v1919 = vld [vmem:[#allocation21 + $0xd0] sm:$0xff]
        %v1920 = vld [vmem:[#allocation21 + $0xd8] sm:$0xff]
        %v1921 = vld [vmem:[#allocation21 + $0xe0] sm:$0xff]
        %v1922 = vld [vmem:[#allocation21 + $0xe8] sm:$0xff]
        %v1923 = vld [vmem:[#allocation21 + $0xf0] sm:$0xff]
        %v1924 = vld [vmem:[#allocation21 + $0xf8] sm:$0xff]
        %v1925 = vld [vmem:[#allocation9] sm:$0x3]
        %v1927 = vperm.slane %v1925, 0
        %v1928 = vperm.slane %v1925, 1
        %v1931 = vsub.f32 %v1440, %v1927
        %v1932 = vsub.f32 %v1460, %v1928
        %v1933 = vpack.c.bf16 %v1931, %v1931
        %v1934 = vpack.c.bf16 %v1932, %v1932
        %v1935 = vld [vmem:[#allocation10] sm:$0xff]
        %v1936 = vld [vmem:[#allocation10 + $0x8] sm:$0xff]
        %v1937 = vld [vmem:[#allocation10 + $0x10] sm:$0xff]
        %v1938 = vld [vmem:[#allocation10 + $0x18] sm:$0xff]
        %v1939 = vld [vmem:[#allocation10 + $0x20] sm:$0xff]
        %v1940 = vld [vmem:[#allocation10 + $0x28] sm:$0xff]
        %v1941 = vld [vmem:[#allocation10 + $0x30] sm:$0xff]
        %v1942 = vld [vmem:[#allocation10 + $0x38] sm:$0xff]
        %v1943 = vld [vmem:[#allocation10 + $0x40] sm:$0xff]
        %v1944 = vld [vmem:[#allocation10 + $0x48] sm:$0xff]
        %v1945 = vld [vmem:[#allocation10 + $0x50] sm:$0xff]
        %v1946 = vld [vmem:[#allocation10 + $0x58] sm:$0xff]
        %v1947 = vld [vmem:[#allocation10 + $0x60] sm:$0xff]
        %v1948 = vld [vmem:[#allocation10 + $0x68] sm:$0xff]
        %v1949 = vld [vmem:[#allocation10 + $0x70] sm:$0xff]
        %v1950 = vld [vmem:[#allocation10 + $0x78] sm:$0xff]
        %v1951 = vld [vmem:[#allocation10 + $0x80] sm:$0xff]
        %v1952 = vld [vmem:[#allocation10 + $0x88] sm:$0xff]
        %v1953 = vld [vmem:[#allocation10 + $0x90] sm:$0xff]
        %v1954 = vld [vmem:[#allocation10 + $0x98] sm:$0xff]
        %v1955 = vld [vmem:[#allocation10 + $0xa0] sm:$0xff]
        %v1956 = vld [vmem:[#allocation10 + $0xa8] sm:$0xff]
        %v1957 = vld [vmem:[#allocation10 + $0xb0] sm:$0xff]
        %v1958 = vld [vmem:[#allocation10 + $0xb8] sm:$0xff]
        %v1959 = vld [vmem:[#allocation10 + $0xc0] sm:$0xff]
        %v1960 = vld [vmem:[#allocation10 + $0xc8] sm:$0xff]
        %v1961 = vld [vmem:[#allocation10 + $0xd0] sm:$0xff]
        %v1962 = vld [vmem:[#allocation10 + $0xd8] sm:$0xff]
        %v1963 = vld [vmem:[#allocation10 + $0xe0] sm:$0xff]
        %v1964 = vld [vmem:[#allocation10 + $0xe8] sm:$0xff]
        %v1965 = vld [vmem:[#allocation10 + $0xf0] sm:$0xff]
        %v1966 = vld [vmem:[#allocation10 + $0xf8] sm:$0xff]
        %v1968 = vshrl.u32 %v1933, 16
        %v1971 = vshrl.u32 %v1934, 16
        %v2007 = vunpack.c.l.b16 %v1935
        %v2008 = vunpack.c.h.b16 %v1935
        %v2009 = vunpack.c.l.b16 %v1936
        %v2010 = vunpack.c.h.b16 %v1936
        %v2011 = vunpack.c.l.b16 %v1937
        %v2012 = vunpack.c.h.b16 %v1937
        %v2013 = vunpack.c.l.b16 %v1938
        %v2014 = vunpack.c.h.b16 %v1938
        %v2015 = vunpack.c.l.b16 %v1939
        %v2016 = vunpack.c.h.b16 %v1939
        %v2017 = vunpack.c.l.b16 %v1940
        %v2018 = vunpack.c.h.b16 %v1940
        %v2019 = vunpack.c.l.b16 %v1941
        %v2020 = vunpack.c.h.b16 %v1941
        %v2021 = vunpack.c.l.b16 %v1942
        %v2022 = vunpack.c.h.b16 %v1942
        %v2023 = vunpack.c.l.b16 %v1943
        %v2024 = vunpack.c.h.b16 %v1943
        %v2025 = vunpack.c.l.b16 %v1944
        %v2026 = vunpack.c.h.b16 %v1944
        %v2027 = vunpack.c.l.b16 %v1945
        %v2028 = vunpack.c.h.b16 %v1945
        %v2029 = vunpack.c.l.b16 %v1946
        %v2030 = vunpack.c.h.b16 %v1946
        %v2031 = vunpack.c.l.b16 %v1947
        %v2032 = vunpack.c.h.b16 %v1947
        %v2033 = vunpack.c.l.b16 %v1948
        %v2034 = vunpack.c.h.b16 %v1948
        %v2035 = vunpack.c.l.b16 %v1949
        %v2036 = vunpack.c.h.b16 %v1949
        %v2037 = vunpack.c.l.b16 %v1950
        %v2038 = vunpack.c.h.b16 %v1950
        %v2039 = vunpack.c.l.b16 %v1951
        %v2040 = vunpack.c.h.b16 %v1951
        %v2041 = vunpack.c.l.b16 %v1952
        %v2042 = vunpack.c.h.b16 %v1952
        %v2043 = vunpack.c.l.b16 %v1953
        %v2044 = vunpack.c.h.b16 %v1953
        %v2045 = vunpack.c.l.b16 %v1954
        %v2046 = vunpack.c.h.b16 %v1954
        %v2047 = vunpack.c.l.b16 %v1955
        %v2048 = vunpack.c.h.b16 %v1955
        %v2049 = vunpack.c.l.b16 %v1956
        %v2050 = vunpack.c.h.b16 %v1956
        %v2051 = vunpack.c.l.b16 %v1957
        %v2052 = vunpack.c.h.b16 %v1957
        %v2053 = vunpack.c.l.b16 %v1958
        %v2054 = vunpack.c.h.b16 %v1958
        %v2055 = vunpack.c.l.b16 %v1959
        %v2056 = vunpack.c.h.b16 %v1959
        %v2057 = vunpack.c.l.b16 %v1960
        %v2058 = vunpack.c.h.b16 %v1960
        %v2059 = vunpack.c.l.b16 %v1961
        %v2060 = vunpack.c.h.b16 %v1961
        %v2061 = vunpack.c.l.b16 %v1962
        %v2062 = vunpack.c.h.b16 %v1962
        %v2063 = vunpack.c.l.b16 %v1963
        %v2064 = vunpack.c.h.b16 %v1963
        %v2065 = vunpack.c.l.b16 %v1964
        %v2066 = vunpack.c.h.b16 %v1964
        %v2067 = vunpack.c.l.b16 %v1965
        %v2068 = vunpack.c.h.b16 %v1965
        %v2069 = vunpack.c.l.b16 %v1966
        %v2070 = vunpack.c.h.b16 %v1966
        %v2071 = vpack.c.b16 %v2009, %v2007
        %v2072 = vpack.c.b16 %v2010, %v2008
        %v2073 = vpack.c.b16 %v2013, %v2011
        %v2074 = vpack.c.b16 %v2014, %v2012
        %v2075 = vpack.c.b16 %v2017, %v2015
        %v2076 = vpack.c.b16 %v2018, %v2016
        %v2077 = vpack.c.b16 %v2021, %v2019
        %v2078 = vpack.c.b16 %v2022, %v2020
        %v2079 = vpack.c.b16 %v2025, %v2023
        %v2080 = vpack.c.b16 %v2026, %v2024
        %v2081 = vpack.c.b16 %v2029, %v2027
        %v2082 = vpack.c.b16 %v2030, %v2028
        %v2083 = vpack.c.b16 %v2033, %v2031
        %v2084 = vpack.c.b16 %v2034, %v2032
        %v2085 = vpack.c.b16 %v2037, %v2035
        %v2086 = vpack.c.b16 %v2038, %v2036
        %v2087 = vpack.c.b16 %v2041, %v2039
        %v2088 = vpack.c.b16 %v2042, %v2040
        %v2089 = vpack.c.b16 %v2045, %v2043
        %v2090 = vpack.c.b16 %v2046, %v2044
        %v2091 = vpack.c.b16 %v2049, %v2047
        %v2092 = vpack.c.b16 %v2050, %v2048
        %v2093 = vpack.c.b16 %v2053, %v2051
        %v2094 = vpack.c.b16 %v2054, %v2052
        %v2095 = vpack.c.b16 %v2057, %v2055
        %v2096 = vpack.c.b16 %v2058, %v2056
        %v2097 = vpack.c.b16 %v2061, %v2059
        %v2098 = vpack.c.b16 %v2062, %v2060
        %v2099 = vpack.c.b16 %v2065, %v2063
        %v2100 = vpack.c.b16 %v2066, %v2064
        %v2101 = vpack.c.b16 %v2069, %v2067
        %v2102 = vpack.c.b16 %v2070, %v2068
        %2135 = vmatpush.bf16.msra.mxu0 %v2085
        %2136 = vmatpush.bf16.msra.mxu0 %v2083
        %2137 = vmatpush.bf16.msra.mxu0 %v2081
        %2138 = vmatpush.bf16.msra.mxu0 %v2079
        %2139 = vmatpush.bf16.msra.mxu0 %v2077
        %2140 = vmatpush.bf16.msra.mxu0 %v2075
        %2141 = vmatpush.bf16.msra.mxu0 %v2073
        %2142 = vmatpush.bf16.msra.mxu0 %v2071
        %2143 = vmatmul.bf16.gmra.mxu0 %v1968
        %v2144 = vpop.f32.mrf.mxu0
        %v2145 = vadd.f32 0.0, %v2144
        %v2146 = vpop.f32.mrf.mxu0
        %2147 = vdwg.mxu0
        %2148 = vmatpush.bf16.msra.mxu0 %v2101
        %2149 = vmatpush.bf16.msra.mxu0 %v2099
        %2150 = vmatpush.bf16.msra.mxu0 %v2097
        %2151 = vmatpush.bf16.msra.mxu0 %v2095
        %2152 = vmatpush.bf16.msra.mxu0 %v2093
        %2153 = vmatpush.bf16.msra.mxu0 %v2091
        %2154 = vmatpush.bf16.msra.mxu0 %v2089
        %2155 = vmatpush.bf16.msra.mxu0 %v2087
        %2156 = vmatmul.bf16.gmra.mxu0 %v1971
        %v2157 = vpop.f32.mrf.mxu0
        %v2158 = vadd.f32 %v2145, %v2157
        %v2159 = vpop.f32.mrf.mxu0
        %2160 = vdwg.mxu0
        %2161 = vmatpush.bf16.msra.mxu0 %v2086
        %2162 = vmatpush.bf16.msra.mxu0 %v2084
        %2163 = vmatpush.bf16.msra.mxu0 %v2082
        %2164 = vmatpush.bf16.msra.mxu0 %v2080
        %2165 = vmatpush.bf16.msra.mxu0 %v2078
        %2166 = vmatpush.bf16.msra.mxu0 %v2076
        %2167 = vmatpush.bf16.msra.mxu0 %v2074
        %2168 = vmatpush.bf16.msra.mxu0 %v2072
        %2169 = vmatmul.bf16.gmra.mxu0 %v1968
        %v2170 = vpop.f32.mrf.mxu0
        %v2171 = vadd.f32 0.0, %v2170
        %v2172 = vpop.f32.mrf.mxu0
        %2173 = vdwg.mxu0
        %2174 = vmatpush.bf16.msra.mxu0 %v2102
        %2175 = vmatpush.bf16.msra.mxu0 %v2100
        %2176 = vmatpush.bf16.msra.mxu0 %v2098
        %2177 = vmatpush.bf16.msra.mxu0 %v2096
        %2178 = vmatpush.bf16.msra.mxu0 %v2094
        %2179 = vmatpush.bf16.msra.mxu0 %v2092
        %2180 = vmatpush.bf16.msra.mxu0 %v2090
        %2181 = vmatpush.bf16.msra.mxu0 %v2088
        %2182 = vmatmul.bf16.gmra.mxu0 %v1971
        %v2183 = vpop.f32.mrf.mxu0
        %v2184 = vadd.f32 %v2171, %v2183
        %v2185 = vpop.f32.mrf.mxu0
        %2186 = vdwg.mxu0
        %v2187 = vld [vmem:[%s12] sm:$0xff]
        %v2188 = vld [vmem:[%s12 + $0x8] sm:$0xff]
        %v2189 = vld [vmem:[%s12 + $0x10] sm:$0xff]
        %v2190 = vld [vmem:[%s12 + $0x18] sm:$0xff]
        %v2191 = vld [vmem:[%s12 + $0x20] sm:$0xff]
        %v2192 = vld [vmem:[%s12 + $0x28] sm:$0xff]
        %v2193 = vld [vmem:[%s12 + $0x30] sm:$0xff]
        %v2194 = vld [vmem:[%s12 + $0x38] sm:$0xff]
        %v2195 = vld [vmem:[%s12 + $0x40] sm:$0xff]
        %v2196 = vld [vmem:[%s12 + $0x48] sm:$0xff]
        %v2197 = vld [vmem:[%s12 + $0x50] sm:$0xff]
        %v2198 = vld [vmem:[%s12 + $0x58] sm:$0xff]
        %v2199 = vld [vmem:[%s12 + $0x60] sm:$0xff]
        %v2200 = vld [vmem:[%s12 + $0x68] sm:$0xff]
        %v2201 = vld [vmem:[%s12 + $0x70] sm:$0xff]
        %v2202 = vld [vmem:[%s12 + $0x78] sm:$0xff]
        %v2203 = vld [vmem:[%s12 + $0x80] sm:$0xff]
        %v2204 = vld [vmem:[%s12 + $0x88] sm:$0xff]
        %v2205 = vld [vmem:[%s12 + $0x90] sm:$0xff]
        %v2206 = vld [vmem:[%s12 + $0x98] sm:$0xff]
        %v2207 = vld [vmem:[%s12 + $0xa0] sm:$0xff]
        %v2208 = vld [vmem:[%s12 + $0xa8] sm:$0xff]
        %v2209 = vld [vmem:[%s12 + $0xb0] sm:$0xff]
        %v2210 = vld [vmem:[%s12 + $0xb8] sm:$0xff]
        %v2211 = vld [vmem:[%s12 + $0xc0] sm:$0xff]
        %v2212 = vld [vmem:[%s12 + $0xc8] sm:$0xff]
        %v2213 = vld [vmem:[%s12 + $0xd0] sm:$0xff]
        %v2214 = vld [vmem:[%s12 + $0xd8] sm:$0xff]
        %v2215 = vld [vmem:[%s12 + $0xe0] sm:$0xff]
        %v2216 = vld [vmem:[%s12 + $0xe8] sm:$0xff]
        %v2217 = vld [vmem:[%s12 + $0xf0] sm:$0xff]
        %v2218 = vld [vmem:[%s12 + $0xf8] sm:$0xff]
        %v2219 = vld [vmem:[#allocation18] sm:$0xf]
        %v2220 = vld [vmem:[#allocation19] sm:$0xf]
        %v2221 = vld [vmem:[#allocation19 + $0x4] sm:$0xf]
        %v2222 = vld [vmem:[#allocation19 + $0x8] sm:$0xf]
        %v2223 = vld [vmem:[#allocation19 + $0xc] sm:$0xf]
        %v2224 = vld [vmem:[#allocation19 + $0x10] sm:$0xf]
        %v2225 = vld [vmem:[#allocation19 + $0x14] sm:$0xf]
        %v2226 = vld [vmem:[#allocation19 + $0x18] sm:$0xf]
        %v2227 = vld [vmem:[#allocation19 + $0x1c] sm:$0xf]
        %v2228 = vld [vmem:[#allocation19 + $0x20] sm:$0xf]
        %v2229 = vld [vmem:[#allocation19 + $0x24] sm:$0xf]
        %v2230 = vld [vmem:[#allocation19 + $0x28] sm:$0xf]
        %v2231 = vld [vmem:[#allocation19 + $0x2c] sm:$0xf]
        %v2232 = vld [vmem:[#allocation19 + $0x30] sm:$0xf]
        %v2233 = vld [vmem:[#allocation19 + $0x34] sm:$0xf]
        %v2234 = vld [vmem:[#allocation19 + $0x38] sm:$0xf]
        %v2235 = vld [vmem:[#allocation19 + $0x3c] sm:$0xf]
        %v2236 = vld [vmem:[#allocation19 + $0x40] sm:$0xf]
        %v2237 = vld [vmem:[#allocation19 + $0x44] sm:$0xf]
        %v2238 = vld [vmem:[#allocation19 + $0x48] sm:$0xf]
        %v2239 = vld [vmem:[#allocation19 + $0x4c] sm:$0xf]
        %v2240 = vld [vmem:[#allocation19 + $0x50] sm:$0xf]
        %v2241 = vld [vmem:[#allocation19 + $0x54] sm:$0xf]
        %v2242 = vld [vmem:[#allocation19 + $0x58] sm:$0xf]
        %v2243 = vld [vmem:[#allocation19 + $0x5c] sm:$0xf]
        %v2244 = vld [vmem:[#allocation19 + $0x60] sm:$0xf]
        %v2245 = vld [vmem:[#allocation19 + $0x64] sm:$0xf]
        %v2246 = vld [vmem:[#allocation19 + $0x68] sm:$0xf]
        %v2247 = vld [vmem:[#allocation19 + $0x6c] sm:$0xf]
        %v2248 = vld [vmem:[#allocation19 + $0x70] sm:$0xf]
        %v2249 = vld [vmem:[#allocation19 + $0x74] sm:$0xf]
        %v2250 = vld [vmem:[#allocation19 + $0x78] sm:$0xf]
        %v2251 = vld [vmem:[#allocation19 + $0x7c] sm:$0xf]
        %v2252 = vld [vmem:[%s15] sm:$0x1]
        %v2253 = vpack.c.bf16 %v2158, %v2158
        %v2254 = vpack.c.bf16 %v2184, %v2184
        %v2287 = vunpack.c.l.b16 %v2187
        %v2288 = vunpack.c.h.b16 %v2187
        %v2289 = vunpack.c.l.b16 %v2188
        %v2290 = vunpack.c.h.b16 %v2188
        %v2291 = vunpack.c.l.b16 %v2189
        %v2292 = vunpack.c.h.b16 %v2189
        %v2293 = vunpack.c.l.b16 %v2190
        %v2294 = vunpack.c.h.b16 %v2190
        %v2295 = vunpack.c.l.b16 %v2191
        %v2296 = vunpack.c.h.b16 %v2191
        %v2297 = vunpack.c.l.b16 %v2192
        %v2298 = vunpack.c.h.b16 %v2192
        %v2299 = vunpack.c.l.b16 %v2193
        %v2300 = vunpack.c.h.b16 %v2193
        %v2301 = vunpack.c.l.b16 %v2194
        %v2302 = vunpack.c.h.b16 %v2194
        %v2303 = vunpack.c.l.b16 %v2195
        %v2304 = vunpack.c.h.b16 %v2195
        %v2305 = vunpack.c.l.b16 %v2196
        %v2306 = vunpack.c.h.b16 %v2196
        %v2307 = vunpack.c.l.b16 %v2197
        %v2308 = vunpack.c.h.b16 %v2197
        %v2309 = vunpack.c.l.b16 %v2198
        %v2310 = vunpack.c.h.b16 %v2198
        %v2311 = vunpack.c.l.b16 %v2199
        %v2312 = vunpack.c.h.b16 %v2199
        %v2313 = vunpack.c.l.b16 %v2200
        %v2314 = vunpack.c.h.b16 %v2200
        %v2315 = vunpack.c.l.b16 %v2201
        %v2316 = vunpack.c.h.b16 %v2201
        %v2317 = vunpack.c.l.b16 %v2202
        %v2318 = vunpack.c.h.b16 %v2202
        %v2319 = vunpack.c.l.b16 %v2203
        %v2320 = vunpack.c.h.b16 %v2203
        %v2321 = vunpack.c.l.b16 %v2204
        %v2322 = vunpack.c.h.b16 %v2204
        %v2323 = vunpack.c.l.b16 %v2205
        %v2324 = vunpack.c.h.b16 %v2205
        %v2325 = vunpack.c.l.b16 %v2206
        %v2326 = vunpack.c.h.b16 %v2206
        %v2327 = vunpack.c.l.b16 %v2207
        %v2328 = vunpack.c.h.b16 %v2207
        %v2329 = vunpack.c.l.b16 %v2208
        %v2330 = vunpack.c.h.b16 %v2208
        %v2331 = vunpack.c.l.b16 %v2209
        %v2332 = vunpack.c.h.b16 %v2209
        %v2333 = vunpack.c.l.b16 %v2210
        %v2334 = vunpack.c.h.b16 %v2210
        %v2335 = vunpack.c.l.b16 %v2211
        %v2336 = vunpack.c.h.b16 %v2211
        %v2337 = vunpack.c.l.b16 %v2212
        %v2338 = vunpack.c.h.b16 %v2212
        %v2339 = vunpack.c.l.b16 %v2213
        %v2340 = vunpack.c.h.b16 %v2213
        %v2341 = vunpack.c.l.b16 %v2214
        %v2342 = vunpack.c.h.b16 %v2214
        %v2343 = vunpack.c.l.b16 %v2215
        %v2344 = vunpack.c.h.b16 %v2215
        %v2345 = vunpack.c.l.b16 %v2216
        %v2346 = vunpack.c.h.b16 %v2216
        %v2347 = vunpack.c.l.b16 %v2217
        %v2348 = vunpack.c.h.b16 %v2217
        %v2349 = vunpack.c.l.b16 %v2218
        %v2350 = vunpack.c.h.b16 %v2218
        %v2351 = vpack.c.b16 %v2289, %v2287
        %v2352 = vpack.c.b16 %v2290, %v2288
        %v2353 = vpack.c.b16 %v2293, %v2291
        %v2354 = vpack.c.b16 %v2294, %v2292
        %v2355 = vpack.c.b16 %v2297, %v2295
        %v2356 = vpack.c.b16 %v2298, %v2296
        %v2357 = vpack.c.b16 %v2301, %v2299
        %v2358 = vpack.c.b16 %v2302, %v2300
        %v2359 = vpack.c.b16 %v2305, %v2303
        %v2360 = vpack.c.b16 %v2306, %v2304
        %v2361 = vpack.c.b16 %v2309, %v2307
        %v2362 = vpack.c.b16 %v2310, %v2308
        %v2363 = vpack.c.b16 %v2313, %v2311
        %v2364 = vpack.c.b16 %v2314, %v2312
        %v2365 = vpack.c.b16 %v2317, %v2315
        %v2366 = vpack.c.b16 %v2318, %v2316
        %v2367 = vpack.c.b16 %v2321, %v2319
        %v2368 = vpack.c.b16 %v2322, %v2320
        %v2369 = vpack.c.b16 %v2325, %v2323
        %v2370 = vpack.c.b16 %v2326, %v2324
        %v2371 = vpack.c.b16 %v2329, %v2327
        %v2372 = vpack.c.b16 %v2330, %v2328
        %v2373 = vpack.c.b16 %v2333, %v2331
        %v2374 = vpack.c.b16 %v2334, %v2332
        %v2375 = vpack.c.b16 %v2337, %v2335
        %v2376 = vpack.c.b16 %v2338, %v2336
        %v2377 = vpack.c.b16 %v2341, %v2339
        %v2378 = vpack.c.b16 %v2342, %v2340
        %v2379 = vpack.c.b16 %v2345, %v2343
        %v2380 = vpack.c.b16 %v2346, %v2344
        %v2381 = vpack.c.b16 %v2349, %v2347
        %v2382 = vpack.c.b16 %v2350, %v2348
        %2415 = vmatpush.bf16.msra.mxu0 %v2365
        %2416 = vmatpush.bf16.msra.mxu0 %v2363
        %2417 = vmatpush.bf16.msra.mxu0 %v2361
        %2418 = vmatpush.bf16.msra.mxu0 %v2359
        %2419 = vmatpush.bf16.msra.mxu0 %v2357
        %2420 = vmatpush.bf16.msra.mxu0 %v2355
        %2421 = vmatpush.bf16.msra.mxu0 %v2353
        %2422 = vmatpush.bf16.msra.mxu0 %v2351
        %2423 = vmatmul.bf16.gmra.mxu0 %v2253
        %v2424 = vpop.f32.mrf.mxu0
        %v2425 = vadd.f32 0.0, %v2424
        %v2426 = vpop.f32.mrf.mxu0
        %2427 = vdwg.mxu0
        %2428 = vmatpush.bf16.msra.mxu0 %v2381
        %2429 = vmatpush.bf16.msra.mxu0 %v2379
        %2430 = vmatpush.bf16.msra.mxu0 %v2377
        %2431 = vmatpush.bf16.msra.mxu0 %v2375
        %2432 = vmatpush.bf16.msra.mxu0 %v2373
        %2433 = vmatpush.bf16.msra.mxu0 %v2371
        %2434 = vmatpush.bf16.msra.mxu0 %v2369
        %2435 = vmatpush.bf16.msra.mxu0 %v2367
        %2436 = vmatmul.bf16.gmra.mxu0 %v2254
        %v2437 = vpop.f32.mrf.mxu0
        %v2438 = vadd.f32 %v2425, %v2437
        %v2439 = vpop.f32.mrf.mxu0
        %2440 = vdwg.mxu0
        %2441 = vmatpush.bf16.msra.mxu0 %v2366
        %2442 = vmatpush.bf16.msra.mxu0 %v2364
        %2443 = vmatpush.bf16.msra.mxu0 %v2362
        %2444 = vmatpush.bf16.msra.mxu0 %v2360
        %2445 = vmatpush.bf16.msra.mxu0 %v2358
        %2446 = vmatpush.bf16.msra.mxu0 %v2356
        %2447 = vmatpush.bf16.msra.mxu0 %v2354
        %2448 = vmatpush.bf16.msra.mxu0 %v2352
        %2449 = vmatmul.bf16.gmra.mxu0 %v2253
        %v2450 = vpop.f32.mrf.mxu0
        %v2451 = vadd.f32 0.0, %v2450
        %v2452 = vpop.f32.mrf.mxu0
        %2453 = vdwg.mxu0
        %2454 = vmatpush.bf16.msra.mxu0 %v2382
        %2455 = vmatpush.bf16.msra.mxu0 %v2380
        %2456 = vmatpush.bf16.msra.mxu0 %v2378
        %2457 = vmatpush.bf16.msra.mxu0 %v2376
        %2458 = vmatpush.bf16.msra.mxu0 %v2374
        %2459 = vmatpush.bf16.msra.mxu0 %v2372
        %2460 = vmatpush.bf16.msra.mxu0 %v2370
        %2461 = vmatpush.bf16.msra.mxu0 %v2368
        %2462 = vmatmul.bf16.gmra.mxu0 %v2254
        %v2463 = vpop.f32.mrf.mxu0
        %v2464 = vadd.f32 %v2451, %v2463
        %v2465 = vpop.f32.mrf.mxu0
        %2466 = vdwg.mxu0
        %v2468 = vperm.slane %v2219, 0
        %v2469 = vperm.slane %v2219, 2
        %v2472 = vmul.f32 %v2438, %v2468
        %v2473 = vmul.f32 %v2464, %v2469
        %v2474 = vperm.slane %v2219, 1
        %v2475 = vperm.slane %v2219, 3
        %v2478 = vadd.f32 %v2472, %v2474
        %v2479 = vadd.f32 %v2473, %v2475
        %v2480 = vpack.c.bf16 %v2478, %v2478
        %v2481 = vpack.c.bf16 %v2479, %v2479
        %v2514 = vunpack.c.l.b16 %v2220
        %v2515 = vunpack.c.l.b16 %v2221
        %v2516 = vunpack.c.l.b16 %v2222
        %v2517 = vunpack.c.l.b16 %v2223
        %v2518 = vunpack.c.l.b16 %v2224
        %v2519 = vunpack.c.l.b16 %v2225
        %v2520 = vunpack.c.l.b16 %v2226
        %v2521 = vunpack.c.l.b16 %v2227
        %v2522 = vunpack.c.l.b16 %v2228
        %v2523 = vunpack.c.l.b16 %v2229
        %v2524 = vunpack.c.l.b16 %v2230
        %v2525 = vunpack.c.l.b16 %v2231
        %v2526 = vunpack.c.l.b16 %v2232
        %v2527 = vunpack.c.l.b16 %v2233
        %v2528 = vunpack.c.l.b16 %v2234
        %v2529 = vunpack.c.l.b16 %v2235
        %v2530 = vunpack.c.l.b16 %v2236
        %v2531 = vunpack.c.l.b16 %v2237
        %v2532 = vunpack.c.l.b16 %v2238
        %v2533 = vunpack.c.l.b16 %v2239
        %v2534 = vunpack.c.l.b16 %v2240
        %v2535 = vunpack.c.l.b16 %v2241
        %v2536 = vunpack.c.l.b16 %v2242
        %v2537 = vunpack.c.l.b16 %v2243
        %v2538 = vunpack.c.l.b16 %v2244
        %v2539 = vunpack.c.l.b16 %v2245
        %v2540 = vunpack.c.l.b16 %v2246
        %v2541 = vunpack.c.l.b16 %v2247
        %v2542 = vunpack.c.l.b16 %v2248
        %v2543 = vunpack.c.l.b16 %v2249
        %v2544 = vunpack.c.l.b16 %v2250
        %v2545 = vunpack.c.l.b16 %v2251
        %v2546 = vpack.c.b16 %v2515, %v2514
        %v2547 = vpack.c.b16 %v2517, %v2516
        %v2548 = vpack.c.b16 %v2519, %v2518
        %v2549 = vpack.c.b16 %v2521, %v2520
        %v2550 = vpack.c.b16 %v2523, %v2522
        %v2551 = vpack.c.b16 %v2525, %v2524
        %v2552 = vpack.c.b16 %v2527, %v2526
        %v2553 = vpack.c.b16 %v2529, %v2528
        %v2554 = vpack.c.b16 %v2531, %v2530
        %v2555 = vpack.c.b16 %v2533, %v2532
        %v2556 = vpack.c.b16 %v2535, %v2534
        %v2557 = vpack.c.b16 %v2537, %v2536
        %v2558 = vpack.c.b16 %v2539, %v2538
        %v2559 = vpack.c.b16 %v2541, %v2540
        %v2560 = vpack.c.b16 %v2543, %v2542
        %v2561 = vpack.c.b16 %v2545, %v2544
        %2578 = vmatpush.bf16.msra.mxu0 %v2553
        %2579 = vmatpush.bf16.msra.mxu0 %v2552
        %2580 = vmatpush.bf16.msra.mxu0 %v2551
        %2581 = vmatpush.bf16.msra.mxu0 %v2550
        %2582 = vmatpush.bf16.msra.mxu0 %v2549
        %2583 = vmatpush.bf16.msra.mxu0 %v2548
        %2584 = vmatpush.bf16.msra.mxu0 %v2547
        %2585 = vmatpush.bf16.msra.mxu0 %v2546
        %2586 = vmatmul.bf16.gmra.mxu0 %v2480
        %v2587 = vpop.f32.mrf.mxu0
        %v2588 = vadd.f32 %v2252, %v2587
        %v2589 = vpop.f32.mrf.mxu0
        %2590 = vdwg.mxu0
        %2591 = vmatpush.bf16.msra.mxu0 %v2561
        %2592 = vmatpush.bf16.msra.mxu0 %v2560
        %2593 = vmatpush.bf16.msra.mxu0 %v2559
        %2594 = vmatpush.bf16.msra.mxu0 %v2558
        %2595 = vmatpush.bf16.msra.mxu0 %v2557
        %2596 = vmatpush.bf16.msra.mxu0 %v2556
        %2597 = vmatpush.bf16.msra.mxu0 %v2555
        %2598 = vmatpush.bf16.msra.mxu0 %v2554
        %2599 = vmatmul.bf16.gmra.mxu0 %v2481
        %v2600 = vpop.f32.mrf.mxu0
        %v2601 = vadd.f32 %v2588, %v2600
        %v2602 = vpop.f32.mrf.mxu0
        %2603 = vdwg.mxu0
        %2604 = vst.msk [vmem:[%s995 + $0x1] sm:$0x1] %vm1882, %v2601
        %v2607 = vrot.slane %v2479, 7
        %v2608 = vsel %vm1887, %v2478, %v2607
        %2610 = vst.msk [vmem:[%s999 + $0x2] sm:$0x3] %vm1891, %v2608
        %v2611 = vld [vmem:[#allocation21 + $0x100] sm:$0xff]
        %v2612 = vld [vmem:[#allocation21 + $0x108] sm:$0xff]
        %v2613 = vld [vmem:[#allocation21 + $0x110] sm:$0xff]
        %v2614 = vld [vmem:[#allocation21 + $0x118] sm:$0xff]
        %v2615 = vld [vmem:[#allocation21 + $0x120] sm:$0xff]
        %v2616 = vld [vmem:[#allocation21 + $0x128] sm:$0xff]
        %v2617 = vld [vmem:[#allocation21 + $0x130] sm:$0xff]
        %v2618 = vld [vmem:[#allocation21 + $0x138] sm:$0xff]
        %v2619 = vld [vmem:[#allocation21 + $0x140] sm:$0xff]
        %v2620 = vld [vmem:[#allocation21 + $0x148] sm:$0xff]
        %v2621 = vld [vmem:[#allocation21 + $0x150] sm:$0xff]
        %v2622 = vld [vmem:[#allocation21 + $0x158] sm:$0xff]
        %v2623 = vld [vmem:[#allocation21 + $0x160] sm:$0xff]
        %v2624 = vld [vmem:[#allocation21 + $0x168] sm:$0xff]
        %v2625 = vld [vmem:[#allocation21 + $0x170] sm:$0xff]
        %v2626 = vld [vmem:[#allocation21 + $0x178] sm:$0xff]
        %v2627 = vld [vmem:[#allocation21 + $0x180] sm:$0xff]
        %v2628 = vld [vmem:[#allocation21 + $0x188] sm:$0xff]
        %v2629 = vld [vmem:[#allocation21 + $0x190] sm:$0xff]
        %v2630 = vld [vmem:[#allocation21 + $0x198] sm:$0xff]
        %v2631 = vld [vmem:[#allocation21 + $0x1a0] sm:$0xff]
        %v2632 = vld [vmem:[#allocation21 + $0x1a8] sm:$0xff]
        %v2633 = vld [vmem:[#allocation21 + $0x1b0] sm:$0xff]
        %v2634 = vld [vmem:[#allocation21 + $0x1b8] sm:$0xff]
        %v2635 = vld [vmem:[#allocation21 + $0x1c0] sm:$0xff]
        %v2636 = vld [vmem:[#allocation21 + $0x1c8] sm:$0xff]
        %v2637 = vld [vmem:[#allocation21 + $0x1d0] sm:$0xff]
        %v2638 = vld [vmem:[#allocation21 + $0x1d8] sm:$0xff]
        %v2639 = vld [vmem:[#allocation21 + $0x1e0] sm:$0xff]
        %v2640 = vld [vmem:[#allocation21 + $0x1e8] sm:$0xff]
        %v2641 = vld [vmem:[#allocation21 + $0x1f0] sm:$0xff]
        %v2642 = vld [vmem:[#allocation21 + $0x1f8] sm:$0xff]
        %v2675 = vunpack.c.l.b16 %v2611
        %v2676 = vunpack.c.h.b16 %v2611
        %v2677 = vunpack.c.l.b16 %v2612
        %v2678 = vunpack.c.h.b16 %v2612
        %v2679 = vunpack.c.l.b16 %v2613
        %v2680 = vunpack.c.h.b16 %v2613
        %v2681 = vunpack.c.l.b16 %v2614
        %v2682 = vunpack.c.h.b16 %v2614
        %v2683 = vunpack.c.l.b16 %v2615
        %v2684 = vunpack.c.h.b16 %v2615
        %v2685 = vunpack.c.l.b16 %v2616
        %v2686 = vunpack.c.h.b16 %v2616
        %v2687 = vunpack.c.l.b16 %v2617
        %v2688 = vunpack.c.h.b16 %v2617
        %v2689 = vunpack.c.l.b16 %v2618
        %v2690 = vunpack.c.h.b16 %v2618
        %v2691 = vunpack.c.l.b16 %v2619
        %v2692 = vunpack.c.h.b16 %v2619
        %v2693 = vunpack.c.l.b16 %v2620
        %v2694 = vunpack.c.h.b16 %v2620
        %v2695 = vunpack.c.l.b16 %v2621
        %v2696 = vunpack.c.h.b16 %v2621
        %v2697 = vunpack.c.l.b16 %v2622
        %v2698 = vunpack.c.h.b16 %v2622
        %v2699 = vunpack.c.l.b16 %v2623
        %v2700 = vunpack.c.h.b16 %v2623
        %v2701 = vunpack.c.l.b16 %v2624
        %v2702 = vunpack.c.h.b16 %v2624
        %v2703 = vunpack.c.l.b16 %v2625
        %v2704 = vunpack.c.h.b16 %v2625
        %v2705 = vunpack.c.l.b16 %v2626
        %v2706 = vunpack.c.h.b16 %v2626
        %v2707 = vunpack.c.l.b16 %v2627
        %v2708 = vunpack.c.h.b16 %v2627
        %v2709 = vunpack.c.l.b16 %v2628
        %v2710 = vunpack.c.h.b16 %v2628
        %v2711 = vunpack.c.l.b16 %v2629
        %v2712 = vunpack.c.h.b16 %v2629
        %v2713 = vunpack.c.l.b16 %v2630
        %v2714 = vunpack.c.h.b16 %v2630
        %v2715 = vunpack.c.l.b16 %v2631
        %v2716 = vunpack.c.h.b16 %v2631
        %v2717 = vunpack.c.l.b16 %v2632
        %v2718 = vunpack.c.h.b16 %v2632
        %v2719 = vunpack.c.l.b16 %v2633
        %v2720 = vunpack.c.h.b16 %v2633
        %v2721 = vunpack.c.l.b16 %v2634
        %v2722 = vunpack.c.h.b16 %v2634
        %v2723 = vunpack.c.l.b16 %v2635
        %v2724 = vunpack.c.h.b16 %v2635
        %v2725 = vunpack.c.l.b16 %v2636
        %v2726 = vunpack.c.h.b16 %v2636
        %v2727 = vunpack.c.l.b16 %v2637
        %v2728 = vunpack.c.h.b16 %v2637
        %v2729 = vunpack.c.l.b16 %v2638
        %v2730 = vunpack.c.h.b16 %v2638
        %v2731 = vunpack.c.l.b16 %v2639
        %v2732 = vunpack.c.h.b16 %v2639
        %v2733 = vunpack.c.l.b16 %v2640
        %v2734 = vunpack.c.h.b16 %v2640
        %v2735 = vunpack.c.l.b16 %v2641
        %v2736 = vunpack.c.h.b16 %v2641
        %v2737 = vunpack.c.l.b16 %v2642
        %v2738 = vunpack.c.h.b16 %v2642
        %v2739 = vpack.c.b16 %v2677, %v2675
        %v2740 = vpack.c.b16 %v2678, %v2676
        %v2741 = vpack.c.b16 %v2681, %v2679
        %v2742 = vpack.c.b16 %v2682, %v2680
        %v2743 = vpack.c.b16 %v2685, %v2683
        %v2744 = vpack.c.b16 %v2686, %v2684
        %v2745 = vpack.c.b16 %v2689, %v2687
        %v2746 = vpack.c.b16 %v2690, %v2688
        %v2747 = vpack.c.b16 %v2693, %v2691
        %v2748 = vpack.c.b16 %v2694, %v2692
        %v2749 = vpack.c.b16 %v2697, %v2695
        %v2750 = vpack.c.b16 %v2698, %v2696
        %v2751 = vpack.c.b16 %v2701, %v2699
        %v2752 = vpack.c.b16 %v2702, %v2700
        %v2753 = vpack.c.b16 %v2705, %v2703
        %v2754 = vpack.c.b16 %v2706, %v2704
        %v2755 = vpack.c.b16 %v2709, %v2707
        %v2756 = vpack.c.b16 %v2710, %v2708
        %v2757 = vpack.c.b16 %v2713, %v2711
        %v2758 = vpack.c.b16 %v2714, %v2712
        %v2759 = vpack.c.b16 %v2717, %v2715
        %v2760 = vpack.c.b16 %v2718, %v2716
        %v2761 = vpack.c.b16 %v2721, %v2719
        %v2762 = vpack.c.b16 %v2722, %v2720
        %v2763 = vpack.c.b16 %v2725, %v2723
        %v2764 = vpack.c.b16 %v2726, %v2724
        %v2765 = vpack.c.b16 %v2729, %v2727
        %v2766 = vpack.c.b16 %v2730, %v2728
        %v2767 = vpack.c.b16 %v2733, %v2731
        %v2768 = vpack.c.b16 %v2734, %v2732
        %v2769 = vpack.c.b16 %v2737, %v2735
        %v2770 = vpack.c.b16 %v2738, %v2736
        %2803 = vmatpush.bf16.msra.mxu0 %v2753
        %2804 = vmatpush.bf16.msra.mxu0 %v2751
        %2805 = vmatpush.bf16.msra.mxu0 %v2749
        %2806 = vmatpush.bf16.msra.mxu0 %v2747
        %2807 = vmatpush.bf16.msra.mxu0 %v2745
        %2808 = vmatpush.bf16.msra.mxu0 %v2743
        %2809 = vmatpush.bf16.msra.mxu0 %v2741
        %2810 = vmatpush.bf16.msra.mxu0 %v2739
        %2811 = vmatmul.bf16.gmra.mxu0 %v2480
        %v2812 = vpop.f32.mrf.mxu0
        %v2813 = vadd.f32 0.0, %v2812
        %v2814 = vpop.f32.mrf.mxu0
        %2815 = vdwg.mxu0
        %2816 = vmatpush.bf16.msra.mxu0 %v2769
        %2817 = vmatpush.bf16.msra.mxu0 %v2767
        %2818 = vmatpush.bf16.msra.mxu0 %v2765
        %2819 = vmatpush.bf16.msra.mxu0 %v2763
        %2820 = vmatpush.bf16.msra.mxu0 %v2761
        %2821 = vmatpush.bf16.msra.mxu0 %v2759
        %2822 = vmatpush.bf16.msra.mxu0 %v2757
        %2823 = vmatpush.bf16.msra.mxu0 %v2755
        %2824 = vmatmul.bf16.gmra.mxu0 %v2481
        %v2825 = vpop.f32.mrf.mxu0
        %v2826 = vadd.f32 %v2813, %v2825
        %v2827 = vpop.f32.mrf.mxu0
        %2828 = vdwg.mxu0
        %2829 = vmatpush.bf16.msra.mxu0 %v2754
        %2830 = vmatpush.bf16.msra.mxu0 %v2752
        %2831 = vmatpush.bf16.msra.mxu0 %v2750
        %2832 = vmatpush.bf16.msra.mxu0 %v2748
        %2833 = vmatpush.bf16.msra.mxu0 %v2746
        %2834 = vmatpush.bf16.msra.mxu0 %v2744
        %2835 = vmatpush.bf16.msra.mxu0 %v2742
        %2836 = vmatpush.bf16.msra.mxu0 %v2740
        %2837 = vmatmul.bf16.gmra.mxu0 %v2480
        %v2838 = vpop.f32.mrf.mxu0
        %v2839 = vadd.f32 0.0, %v2838
        %v2840 = vpop.f32.mrf.mxu0
        %2841 = vdwg.mxu0
        %2842 = vmatpush.bf16.msra.mxu0 %v2770
        %2843 = vmatpush.bf16.msra.mxu0 %v2768
        %2844 = vmatpush.bf16.msra.mxu0 %v2766
        %2845 = vmatpush.bf16.msra.mxu0 %v2764
        %2846 = vmatpush.bf16.msra.mxu0 %v2762
        %2847 = vmatpush.bf16.msra.mxu0 %v2760
        %2848 = vmatpush.bf16.msra.mxu0 %v2758
        %2849 = vmatpush.bf16.msra.mxu0 %v2756
        %2850 = vmatmul.bf16.gmra.mxu0 %v2481
        %v2851 = vpop.f32.mrf.mxu0
        %v2852 = vadd.f32 %v2839, %v2851
        %v2853 = vpop.f32.mrf.mxu0
        %2854 = vdwg.mxu0
        %v2887 = vunpack.c.l.b16 %v1893
        %v2888 = vunpack.c.h.b16 %v1893
        %v2889 = vunpack.c.l.b16 %v1894
        %v2890 = vunpack.c.h.b16 %v1894
        %v2891 = vunpack.c.l.b16 %v1895
        %v2892 = vunpack.c.h.b16 %v1895
        %v2893 = vunpack.c.l.b16 %v1896
        %v2894 = vunpack.c.h.b16 %v1896
        %v2895 = vunpack.c.l.b16 %v1897
        %v2896 = vunpack.c.h.b16 %v1897
        %v2897 = vunpack.c.l.b16 %v1898
        %v2898 = vunpack.c.h.b16 %v1898
        %v2899 = vunpack.c.l.b16 %v1899
        %v2900 = vunpack.c.h.b16 %v1899
        %v2901 = vunpack.c.l.b16 %v1900
        %v2902 = vunpack.c.h.b16 %v1900
        %v2903 = vunpack.c.l.b16 %v1901
        %v2904 = vunpack.c.h.b16 %v1901
        %v2905 = vunpack.c.l.b16 %v1902
        %v2906 = vunpack.c.h.b16 %v1902
        %v2907 = vunpack.c.l.b16 %v1903
        %v2908 = vunpack.c.h.b16 %v1903
        %v2909 = vunpack.c.l.b16 %v1904
        %v2910 = vunpack.c.h.b16 %v1904
        %v2911 = vunpack.c.l.b16 %v1905
        %v2912 = vunpack.c.h.b16 %v1905
        %v2913 = vunpack.c.l.b16 %v1906
        %v2914 = vunpack.c.h.b16 %v1906
        %v2915 = vunpack.c.l.b16 %v1907
        %v2916 = vunpack.c.h.b16 %v1907
        %v2917 = vunpack.c.l.b16 %v1908
        %v2918 = vunpack.c.h.b16 %v1908
        %v2919 = vunpack.c.l.b16 %v1909
        %v2920 = vunpack.c.h.b16 %v1909
        %v2921 = vunpack.c.l.b16 %v1910
        %v2922 = vunpack.c.h.b16 %v1910
        %v2923 = vunpack.c.l.b16 %v1911
        %v2924 = vunpack.c.h.b16 %v1911
        %v2925 = vunpack.c.l.b16 %v1912
        %v2926 = vunpack.c.h.b16 %v1912
        %v2927 = vunpack.c.l.b16 %v1913
        %v2928 = vunpack.c.h.b16 %v1913
        %v2929 = vunpack.c.l.b16 %v1914
        %v2930 = vunpack.c.h.b16 %v1914
        %v2931 = vunpack.c.l.b16 %v1915
        %v2932 = vunpack.c.h.b16 %v1915
        %v2933 = vunpack.c.l.b16 %v1916
        %v2934 = vunpack.c.h.b16 %v1916
        %v2935 = vunpack.c.l.b16 %v1917
        %v2936 = vunpack.c.h.b16 %v1917
        %v2937 = vunpack.c.l.b16 %v1918
        %v2938 = vunpack.c.h.b16 %v1918
        %v2939 = vunpack.c.l.b16 %v1919
        %v2940 = vunpack.c.h.b16 %v1919
        %v2941 = vunpack.c.l.b16 %v1920
        %v2942 = vunpack.c.h.b16 %v1920
        %v2943 = vunpack.c.l.b16 %v1921
        %v2944 = vunpack.c.h.b16 %v1921
        %v2945 = vunpack.c.l.b16 %v1922
        %v2946 = vunpack.c.h.b16 %v1922
        %v2947 = vunpack.c.l.b16 %v1923
        %v2948 = vunpack.c.h.b16 %v1923
        %v2949 = vunpack.c.l.b16 %v1924
        %v2950 = vunpack.c.h.b16 %v1924
        %v2951 = vpack.c.b16 %v2889, %v2887
        %v2952 = vpack.c.b16 %v2890, %v2888
        %v2953 = vpack.c.b16 %v2893, %v2891
        %v2954 = vpack.c.b16 %v2894, %v2892
        %v2955 = vpack.c.b16 %v2897, %v2895
        %v2956 = vpack.c.b16 %v2898, %v2896
        %v2957 = vpack.c.b16 %v2901, %v2899
        %v2958 = vpack.c.b16 %v2902, %v2900
        %v2959 = vpack.c.b16 %v2905, %v2903
        %v2960 = vpack.c.b16 %v2906, %v2904
        %v2961 = vpack.c.b16 %v2909, %v2907
        %v2962 = vpack.c.b16 %v2910, %v2908
        %v2963 = vpack.c.b16 %v2913, %v2911
        %v2964 = vpack.c.b16 %v2914, %v2912
        %v2965 = vpack.c.b16 %v2917, %v2915
        %v2966 = vpack.c.b16 %v2918, %v2916
        %v2967 = vpack.c.b16 %v2921, %v2919
        %v2968 = vpack.c.b16 %v2922, %v2920
        %v2969 = vpack.c.b16 %v2925, %v2923
        %v2970 = vpack.c.b16 %v2926, %v2924
        %v2971 = vpack.c.b16 %v2929, %v2927
        %v2972 = vpack.c.b16 %v2930, %v2928
        %v2973 = vpack.c.b16 %v2933, %v2931
        %v2974 = vpack.c.b16 %v2934, %v2932
        %v2975 = vpack.c.b16 %v2937, %v2935
        %v2976 = vpack.c.b16 %v2938, %v2936
        %v2977 = vpack.c.b16 %v2941, %v2939
        %v2978 = vpack.c.b16 %v2942, %v2940
        %v2979 = vpack.c.b16 %v2945, %v2943
        %v2980 = vpack.c.b16 %v2946, %v2944
        %v2981 = vpack.c.b16 %v2949, %v2947
        %v2982 = vpack.c.b16 %v2950, %v2948
        %3015 = vmatpush.bf16.msra.mxu0 %v2965
        %3016 = vmatpush.bf16.msra.mxu0 %v2963
        %3017 = vmatpush.bf16.msra.mxu0 %v2961
        %3018 = vmatpush.bf16.msra.mxu0 %v2959
        %3019 = vmatpush.bf16.msra.mxu0 %v2957
        %3020 = vmatpush.bf16.msra.mxu0 %v2955
        %3021 = vmatpush.bf16.msra.mxu0 %v2953
        %3022 = vmatpush.bf16.msra.mxu0 %v2951
        %3023 = vmatmul.bf16.gmra.mxu0 %v1755
        %v3024 = vpop.f32.mrf.mxu0
        %v3025 = vadd.f32 %v2826, %v3024
        %v3026 = vpop.f32.mrf.mxu0
        %3027 = vdwg.mxu0
        %3028 = vmatpush.bf16.msra.mxu0 %v2981
        %3029 = vmatpush.bf16.msra.mxu0 %v2979
        %3030 = vmatpush.bf16.msra.mxu0 %v2977
        %3031 = vmatpush.bf16.msra.mxu0 %v2975
        %3032 = vmatpush.bf16.msra.mxu0 %v2973
        %3033 = vmatpush.bf16.msra.mxu0 %v2971
        %3034 = vmatpush.bf16.msra.mxu0 %v2969
        %3035 = vmatpush.bf16.msra.mxu0 %v2967
        %3036 = vmatmul.bf16.gmra.mxu0 %v1756
        %v3037 = vpop.f32.mrf.mxu0
        %v3038 = vadd.f32 %v3025, %v3037
        %v3039 = vpop.f32.mrf.mxu0
        %3040 = vdwg.mxu0
        %3041 = vmatpush.bf16.msra.mxu0 %v2966
        %3042 = vmatpush.bf16.msra.mxu0 %v2964
        %3043 = vmatpush.bf16.msra.mxu0 %v2962
        %3044 = vmatpush.bf16.msra.mxu0 %v2960
        %3045 = vmatpush.bf16.msra.mxu0 %v2958
        %3046 = vmatpush.bf16.msra.mxu0 %v2956
        %3047 = vmatpush.bf16.msra.mxu0 %v2954
        %3048 = vmatpush.bf16.msra.mxu0 %v2952
        %3049 = vmatmul.bf16.gmra.mxu0 %v1755
        %v3050 = vpop.f32.mrf.mxu0
        %v3051 = vadd.f32 %v2852, %v3050
        %v3052 = vpop.f32.mrf.mxu0
        %3053 = vdwg.mxu0
        %3054 = vmatpush.bf16.msra.mxu0 %v2982
        %3055 = vmatpush.bf16.msra.mxu0 %v2980
        %3056 = vmatpush.bf16.msra.mxu0 %v2978
        %3057 = vmatpush.bf16.msra.mxu0 %v2976
        %3058 = vmatpush.bf16.msra.mxu0 %v2974
        %3059 = vmatpush.bf16.msra.mxu0 %v2972
        %3060 = vmatpush.bf16.msra.mxu0 %v2970
        %3061 = vmatpush.bf16.msra.mxu0 %v2968
        %3062 = vmatmul.bf16.gmra.mxu0 %v1756
        %v3063 = vpop.f32.mrf.mxu0
        %v3064 = vadd.f32 %v3051, %v3063
        %v3065 = vpop.f32.mrf.mxu0
        %3066 = vdwg.mxu0
        %v3067 = vld [vmem:[#allocation10] sm:$0xff]
        %v3068 = vld [vmem:[#allocation10 + $0x8] sm:$0xff]
        %v3069 = vld [vmem:[#allocation10 + $0x10] sm:$0xff]
        %v3070 = vld [vmem:[#allocation10 + $0x18] sm:$0xff]
        %v3071 = vld [vmem:[#allocation10 + $0x20] sm:$0xff]
        %v3072 = vld [vmem:[#allocation10 + $0x28] sm:$0xff]
        %v3073 = vld [vmem:[#allocation10 + $0x30] sm:$0xff]
        %v3074 = vld [vmem:[#allocation10 + $0x38] sm:$0xff]
        %v3075 = vld [vmem:[#allocation10 + $0x40] sm:$0xff]
        %v3076 = vld [vmem:[#allocation10 + $0x48] sm:$0xff]
        %v3077 = vld [vmem:[#allocation10 + $0x50] sm:$0xff]
        %v3078 = vld [vmem:[#allocation10 + $0x58] sm:$0xff]
        %v3079 = vld [vmem:[#allocation10 + $0x60] sm:$0xff]
        %v3080 = vld [vmem:[#allocation10 + $0x68] sm:$0xff]
        %v3081 = vld [vmem:[#allocation10 + $0x70] sm:$0xff]
        %v3082 = vld [vmem:[#allocation10 + $0x78] sm:$0xff]
        %v3083 = vld [vmem:[#allocation10 + $0x80] sm:$0xff]
        %v3084 = vld [vmem:[#allocation10 + $0x88] sm:$0xff]
        %v3085 = vld [vmem:[#allocation10 + $0x90] sm:$0xff]
        %v3086 = vld [vmem:[#allocation10 + $0x98] sm:$0xff]
        %v3087 = vld [vmem:[#allocation10 + $0xa0] sm:$0xff]
        %v3088 = vld [vmem:[#allocation10 + $0xa8] sm:$0xff]
        %v3089 = vld [vmem:[#allocation10 + $0xb0] sm:$0xff]
        %v3090 = vld [vmem:[#allocation10 + $0xb8] sm:$0xff]
        %v3091 = vld [vmem:[#allocation10 + $0xc0] sm:$0xff]
        %v3092 = vld [vmem:[#allocation10 + $0xc8] sm:$0xff]
        %v3093 = vld [vmem:[#allocation10 + $0xd0] sm:$0xff]
        %v3094 = vld [vmem:[#allocation10 + $0xd8] sm:$0xff]
        %v3095 = vld [vmem:[#allocation10 + $0xe0] sm:$0xff]
        %v3096 = vld [vmem:[#allocation10 + $0xe8] sm:$0xff]
        %v3097 = vld [vmem:[#allocation10 + $0xf0] sm:$0xff]
        %v3098 = vld [vmem:[#allocation10 + $0xf8] sm:$0xff]
        %v3101 = vrot.slane %v1933, 1
        %v3102 = vrot.slane %v1934, 1
        %v3137 = vunpack.c.l.b16 %v3067
        %v3138 = vunpack.c.h.b16 %v3067
        %v3139 = vunpack.c.l.b16 %v3068
        %v3140 = vunpack.c.h.b16 %v3068
        %v3141 = vunpack.c.l.b16 %v3069
        %v3142 = vunpack.c.h.b16 %v3069
        %v3143 = vunpack.c.l.b16 %v3070
        %v3144 = vunpack.c.h.b16 %v3070
        %v3145 = vunpack.c.l.b16 %v3071
        %v3146 = vunpack.c.h.b16 %v3071
        %v3147 = vunpack.c.l.b16 %v3072
        %v3148 = vunpack.c.h.b16 %v3072
        %v3149 = vunpack.c.l.b16 %v3073
        %v3150 = vunpack.c.h.b16 %v3073
        %v3151 = vunpack.c.l.b16 %v3074
        %v3152 = vunpack.c.h.b16 %v3074
        %v3153 = vunpack.c.l.b16 %v3075
        %v3154 = vunpack.c.h.b16 %v3075
        %v3155 = vunpack.c.l.b16 %v3076
        %v3156 = vunpack.c.h.b16 %v3076
        %v3157 = vunpack.c.l.b16 %v3077
        %v3158 = vunpack.c.h.b16 %v3077
        %v3159 = vunpack.c.l.b16 %v3078
        %v3160 = vunpack.c.h.b16 %v3078
        %v3161 = vunpack.c.l.b16 %v3079
        %v3162 = vunpack.c.h.b16 %v3079
        %v3163 = vunpack.c.l.b16 %v3080
        %v3164 = vunpack.c.h.b16 %v3080
        %v3165 = vunpack.c.l.b16 %v3081
        %v3166 = vunpack.c.h.b16 %v3081
        %v3167 = vunpack.c.l.b16 %v3082
        %v3168 = vunpack.c.h.b16 %v3082
        %v3169 = vunpack.c.l.b16 %v3083
        %v3170 = vunpack.c.h.b16 %v3083
        %v3171 = vunpack.c.l.b16 %v3084
        %v3172 = vunpack.c.h.b16 %v3084
        %v3173 = vunpack.c.l.b16 %v3085
        %v3174 = vunpack.c.h.b16 %v3085
        %v3175 = vunpack.c.l.b16 %v3086
        %v3176 = vunpack.c.h.b16 %v3086
        %v3177 = vunpack.c.l.b16 %v3087
        %v3178 = vunpack.c.h.b16 %v3087
        %v3179 = vunpack.c.l.b16 %v3088
        %v3180 = vunpack.c.h.b16 %v3088
        %v3181 = vunpack.c.l.b16 %v3089
        %v3182 = vunpack.c.h.b16 %v3089
        %v3183 = vunpack.c.l.b16 %v3090
        %v3184 = vunpack.c.h.b16 %v3090
        %v3185 = vunpack.c.l.b16 %v3091
        %v3186 = vunpack.c.h.b16 %v3091
        %v3187 = vunpack.c.l.b16 %v3092
        %v3188 = vunpack.c.h.b16 %v3092
        %v3189 = vunpack.c.l.b16 %v3093
        %v3190 = vunpack.c.h.b16 %v3093
        %v3191 = vunpack.c.l.b16 %v3094
        %v3192 = vunpack.c.h.b16 %v3094
        %v3193 = vunpack.c.l.b16 %v3095
        %v3194 = vunpack.c.h.b16 %v3095
        %v3195 = vunpack.c.l.b16 %v3096
        %v3196 = vunpack.c.h.b16 %v3096
        %v3197 = vunpack.c.l.b16 %v3097
        %v3198 = vunpack.c.h.b16 %v3097
        %v3199 = vunpack.c.l.b16 %v3098
        %v3200 = vunpack.c.h.b16 %v3098
        %v3201 = vpack.c.b16 %v3139, %v3137
        %v3202 = vpack.c.b16 %v3140, %v3138
        %v3203 = vpack.c.b16 %v3143, %v3141
        %v3204 = vpack.c.b16 %v3144, %v3142
        %v3205 = vpack.c.b16 %v3147, %v3145
        %v3206 = vpack.c.b16 %v3148, %v3146
        %v3207 = vpack.c.b16 %v3151, %v3149
        %v3208 = vpack.c.b16 %v3152, %v3150
        %v3209 = vpack.c.b16 %v3155, %v3153
        %v3210 = vpack.c.b16 %v3156, %v3154
        %v3211 = vpack.c.b16 %v3159, %v3157
        %v3212 = vpack.c.b16 %v3160, %v3158
        %v3213 = vpack.c.b16 %v3163, %v3161
        %v3214 = vpack.c.b16 %v3164, %v3162
        %v3215 = vpack.c.b16 %v3167, %v3165
        %v3216 = vpack.c.b16 %v3168, %v3166
        %v3217 = vpack.c.b16 %v3171, %v3169
        %v3218 = vpack.c.b16 %v3172, %v3170
        %v3219 = vpack.c.b16 %v3175, %v3173
        %v3220 = vpack.c.b16 %v3176, %v3174
        %v3221 = vpack.c.b16 %v3179, %v3177
        %v3222 = vpack.c.b16 %v3180, %v3178
        %v3223 = vpack.c.b16 %v3183, %v3181
        %v3224 = vpack.c.b16 %v3184, %v3182
        %v3225 = vpack.c.b16 %v3187, %v3185
        %v3226 = vpack.c.b16 %v3188, %v3186
        %v3227 = vpack.c.b16 %v3191, %v3189
        %v3228 = vpack.c.b16 %v3192, %v3190
        %v3229 = vpack.c.b16 %v3195, %v3193
        %v3230 = vpack.c.b16 %v3196, %v3194
        %v3231 = vpack.c.b16 %v3199, %v3197
        %v3232 = vpack.c.b16 %v3200, %v3198
        %3265 = vmatpush.bf16.msra.mxu0 %v3215
        %3266 = vmatpush.bf16.msra.mxu0 %v3213
        %3267 = vmatpush.bf16.msra.mxu0 %v3211
        %3268 = vmatpush.bf16.msra.mxu0 %v3209
        %3269 = vmatpush.bf16.msra.mxu0 %v3207
        %3270 = vmatpush.bf16.msra.mxu0 %v3205
        %3271 = vmatpush.bf16.msra.mxu0 %v3203
        %3272 = vmatpush.bf16.msra.mxu0 %v3201
        %3273 = vmatmul.bf16.gmra.mxu0 %v3101
        %v3274 = vpop.f32.mrf.mxu0
        %v3275 = vadd.f32 0.0, %v3274
        %v3276 = vpop.f32.mrf.mxu0
        %3277 = vdwg.mxu0
        %3278 = vmatpush.bf16.msra.mxu0 %v3231
        %3279 = vmatpush.bf16.msra.mxu0 %v3229
        %3280 = vmatpush.bf16.msra.mxu0 %v3227
        %3281 = vmatpush.bf16.msra.mxu0 %v3225
        %3282 = vmatpush.bf16.msra.mxu0 %v3223
        %3283 = vmatpush.bf16.msra.mxu0 %v3221
        %3284 = vmatpush.bf16.msra.mxu0 %v3219
        %3285 = vmatpush.bf16.msra.mxu0 %v3217
        %3286 = vmatmul.bf16.gmra.mxu0 %v3102
        %v3287 = vpop.f32.mrf.mxu0
        %v3288 = vadd.f32 %v3275, %v3287
        %v3289 = vpop.f32.mrf.mxu0
        %3290 = vdwg.mxu0
        %3291 = vmatpush.bf16.msra.mxu0 %v3216
        %3292 = vmatpush.bf16.msra.mxu0 %v3214
        %3293 = vmatpush.bf16.msra.mxu0 %v3212
        %3294 = vmatpush.bf16.msra.mxu0 %v3210
        %3295 = vmatpush.bf16.msra.mxu0 %v3208
        %3296 = vmatpush.bf16.msra.mxu0 %v3206
        %3297 = vmatpush.bf16.msra.mxu0 %v3204
        %3298 = vmatpush.bf16.msra.mxu0 %v3202
        %3299 = vmatmul.bf16.gmra.mxu0 %v3101
        %v3300 = vpop.f32.mrf.mxu0
        %v3301 = vadd.f32 0.0, %v3300
        %v3302 = vpop.f32.mrf.mxu0
        %3303 = vdwg.mxu0
        %3304 = vmatpush.bf16.msra.mxu0 %v3232
        %3305 = vmatpush.bf16.msra.mxu0 %v3230
        %3306 = vmatpush.bf16.msra.mxu0 %v3228
        %3307 = vmatpush.bf16.msra.mxu0 %v3226
        %3308 = vmatpush.bf16.msra.mxu0 %v3224
        %3309 = vmatpush.bf16.msra.mxu0 %v3222
        %3310 = vmatpush.bf16.msra.mxu0 %v3220
        %3311 = vmatpush.bf16.msra.mxu0 %v3218
        %3312 = vmatmul.bf16.gmra.mxu0 %v3102
        %v3313 = vpop.f32.mrf.mxu0
        %v3314 = vadd.f32 %v3301, %v3313
        %v3315 = vpop.f32.mrf.mxu0
        %3316 = vdwg.mxu0
        %s3317 = scalar_lea.vmem %s12, 256
        %v3318 = vld [vmem:[%s3317] sm:$0xff]
        %v3319 = vld [vmem:[%s3317 + $0x8] sm:$0xff]
        %v3320 = vld [vmem:[%s3317 + $0x10] sm:$0xff]
        %v3321 = vld [vmem:[%s3317 + $0x18] sm:$0xff]
        %v3322 = vld [vmem:[%s3317 + $0x20] sm:$0xff]
        %v3323 = vld [vmem:[%s3317 + $0x28] sm:$0xff]
        %v3324 = vld [vmem:[%s3317 + $0x30] sm:$0xff]
        %v3325 = vld [vmem:[%s3317 + $0x38] sm:$0xff]
        %v3326 = vld [vmem:[%s3317 + $0x40] sm:$0xff]
        %v3327 = vld [vmem:[%s3317 + $0x48] sm:$0xff]
        %v3328 = vld [vmem:[%s3317 + $0x50] sm:$0xff]
        %v3329 = vld [vmem:[%s3317 + $0x58] sm:$0xff]
        %v3330 = vld [vmem:[%s3317 + $0x60] sm:$0xff]
        %v3331 = vld [vmem:[%s3317 + $0x68] sm:$0xff]
        %v3332 = vld [vmem:[%s3317 + $0x70] sm:$0xff]
        %v3333 = vld [vmem:[%s3317 + $0x78] sm:$0xff]
        %v3334 = vld [vmem:[%s3317 + $0x80] sm:$0xff]
        %v3335 = vld [vmem:[%s3317 + $0x88] sm:$0xff]
        %v3336 = vld [vmem:[%s3317 + $0x90] sm:$0xff]
        %v3337 = vld [vmem:[%s3317 + $0x98] sm:$0xff]
        %v3338 = vld [vmem:[%s3317 + $0xa0] sm:$0xff]
        %v3339 = vld [vmem:[%s3317 + $0xa8] sm:$0xff]
        %v3340 = vld [vmem:[%s3317 + $0xb0] sm:$0xff]
        %v3341 = vld [vmem:[%s3317 + $0xb8] sm:$0xff]
        %v3342 = vld [vmem:[%s3317 + $0xc0] sm:$0xff]
        %v3343 = vld [vmem:[%s3317 + $0xc8] sm:$0xff]
        %v3344 = vld [vmem:[%s3317 + $0xd0] sm:$0xff]
        %v3345 = vld [vmem:[%s3317 + $0xd8] sm:$0xff]
        %v3346 = vld [vmem:[%s3317 + $0xe0] sm:$0xff]
        %v3347 = vld [vmem:[%s3317 + $0xe8] sm:$0xff]
        %v3348 = vld [vmem:[%s3317 + $0xf0] sm:$0xff]
        %v3349 = vld [vmem:[%s3317 + $0xf8] sm:$0xff]
        %s3350 = scalar_lea.vmem [#allocation18], 4
        %v3351 = vld [vmem:[%s3350] sm:$0xf]
        %s3352 = scalar_lea.vmem [#allocation19], 128
        %v3353 = vld [vmem:[%s3352] sm:$0xf]
        %v3354 = vld [vmem:[%s3352 + $0x4] sm:$0xf]
        %v3355 = vld [vmem:[%s3352 + $0x8] sm:$0xf]
        %v3356 = vld [vmem:[%s3352 + $0xc] sm:$0xf]
        %v3357 = vld [vmem:[%s3352 + $0x10] sm:$0xf]
        %v3358 = vld [vmem:[%s3352 + $0x14] sm:$0xf]
        %v3359 = vld [vmem:[%s3352 + $0x18] sm:$0xf]
        %v3360 = vld [vmem:[%s3352 + $0x1c] sm:$0xf]
        %v3361 = vld [vmem:[%s3352 + $0x20] sm:$0xf]
        %v3362 = vld [vmem:[%s3352 + $0x24] sm:$0xf]
        %v3363 = vld [vmem:[%s3352 + $0x28] sm:$0xf]
        %v3364 = vld [vmem:[%s3352 + $0x2c] sm:$0xf]
        %v3365 = vld [vmem:[%s3352 + $0x30] sm:$0xf]
        %v3366 = vld [vmem:[%s3352 + $0x34] sm:$0xf]
        %v3367 = vld [vmem:[%s3352 + $0x38] sm:$0xf]
        %v3368 = vld [vmem:[%s3352 + $0x3c] sm:$0xf]
        %v3369 = vld [vmem:[%s3352 + $0x40] sm:$0xf]
        %v3370 = vld [vmem:[%s3352 + $0x44] sm:$0xf]
        %v3371 = vld [vmem:[%s3352 + $0x48] sm:$0xf]
        %v3372 = vld [vmem:[%s3352 + $0x4c] sm:$0xf]
        %v3373 = vld [vmem:[%s3352 + $0x50] sm:$0xf]
        %v3374 = vld [vmem:[%s3352 + $0x54] sm:$0xf]
        %v3375 = vld [vmem:[%s3352 + $0x58] sm:$0xf]
        %v3376 = vld [vmem:[%s3352 + $0x5c] sm:$0xf]
        %v3377 = vld [vmem:[%s3352 + $0x60] sm:$0xf]
        %v3378 = vld [vmem:[%s3352 + $0x64] sm:$0xf]
        %v3379 = vld [vmem:[%s3352 + $0x68] sm:$0xf]
        %v3380 = vld [vmem:[%s3352 + $0x6c] sm:$0xf]
        %v3381 = vld [vmem:[%s3352 + $0x70] sm:$0xf]
        %v3382 = vld [vmem:[%s3352 + $0x74] sm:$0xf]
        %v3383 = vld [vmem:[%s3352 + $0x78] sm:$0xf]
        %v3384 = vld [vmem:[%s3352 + $0x7c] sm:$0xf]
        %s3385 = scalar_lea.vmem %s15, 1
        %v3386 = vld [vmem:[%s3385] sm:$0x1]
        %v3387 = vpack.c.bf16 %v3288, %v3288
        %v3388 = vpack.c.bf16 %v3314, %v3314
        %v3421 = vunpack.c.l.b16 %v3318
        %v3422 = vunpack.c.h.b16 %v3318
        %v3423 = vunpack.c.l.b16 %v3319
        %v3424 = vunpack.c.h.b16 %v3319
        %v3425 = vunpack.c.l.b16 %v3320
        %v3426 = vunpack.c.h.b16 %v3320
        %v3427 = vunpack.c.l.b16 %v3321
        %v3428 = vunpack.c.h.b16 %v3321
        %v3429 = vunpack.c.l.b16 %v3322
        %v3430 = vunpack.c.h.b16 %v3322
        %v3431 = vunpack.c.l.b16 %v3323
        %v3432 = vunpack.c.h.b16 %v3323
        %v3433 = vunpack.c.l.b16 %v3324
        %v3434 = vunpack.c.h.b16 %v3324
        %v3435 = vunpack.c.l.b16 %v3325
        %v3436 = vunpack.c.h.b16 %v3325
        %v3437 = vunpack.c.l.b16 %v3326
        %v3438 = vunpack.c.h.b16 %v3326
        %v3439 = vunpack.c.l.b16 %v3327
        %v3440 = vunpack.c.h.b16 %v3327
        %v3441 = vunpack.c.l.b16 %v3328
        %v3442 = vunpack.c.h.b16 %v3328
        %v3443 = vunpack.c.l.b16 %v3329
        %v3444 = vunpack.c.h.b16 %v3329
        %v3445 = vunpack.c.l.b16 %v3330
        %v3446 = vunpack.c.h.b16 %v3330
        %v3447 = vunpack.c.l.b16 %v3331
        %v3448 = vunpack.c.h.b16 %v3331
        %v3449 = vunpack.c.l.b16 %v3332
        %v3450 = vunpack.c.h.b16 %v3332
        %v3451 = vunpack.c.l.b16 %v3333
        %v3452 = vunpack.c.h.b16 %v3333
        %v3453 = vunpack.c.l.b16 %v3334
        %v3454 = vunpack.c.h.b16 %v3334
        %v3455 = vunpack.c.l.b16 %v3335
        %v3456 = vunpack.c.h.b16 %v3335
        %v3457 = vunpack.c.l.b16 %v3336
        %v3458 = vunpack.c.h.b16 %v3336
        %v3459 = vunpack.c.l.b16 %v3337
        %v3460 = vunpack.c.h.b16 %v3337
        %v3461 = vunpack.c.l.b16 %v3338
        %v3462 = vunpack.c.h.b16 %v3338
        %v3463 = vunpack.c.l.b16 %v3339
        %v3464 = vunpack.c.h.b16 %v3339
        %v3465 = vunpack.c.l.b16 %v3340
        %v3466 = vunpack.c.h.b16 %v3340
        %v3467 = vunpack.c.l.b16 %v3341
        %v3468 = vunpack.c.h.b16 %v3341
        %v3469 = vunpack.c.l.b16 %v3342
        %v3470 = vunpack.c.h.b16 %v3342
        %v3471 = vunpack.c.l.b16 %v3343
        %v3472 = vunpack.c.h.b16 %v3343
        %v3473 = vunpack.c.l.b16 %v3344
        %v3474 = vunpack.c.h.b16 %v3344
        %v3475 = vunpack.c.l.b16 %v3345
        %v3476 = vunpack.c.h.b16 %v3345
        %v3477 = vunpack.c.l.b16 %v3346
        %v3478 = vunpack.c.h.b16 %v3346
        %v3479 = vunpack.c.l.b16 %v3347
        %v3480 = vunpack.c.h.b16 %v3347
        %v3481 = vunpack.c.l.b16 %v3348
        %v3482 = vunpack.c.h.b16 %v3348
        %v3483 = vunpack.c.l.b16 %v3349
        %v3484 = vunpack.c.h.b16 %v3349
        %v3485 = vpack.c.b16 %v3423, %v3421
        %v3486 = vpack.c.b16 %v3424, %v3422
        %v3487 = vpack.c.b16 %v3427, %v3425
        %v3488 = vpack.c.b16 %v3428, %v3426
        %v3489 = vpack.c.b16 %v3431, %v3429
        %v3490 = vpack.c.b16 %v3432, %v3430
        %v3491 = vpack.c.b16 %v3435, %v3433
        %v3492 = vpack.c.b16 %v3436, %v3434
        %v3493 = vpack.c.b16 %v3439, %v3437
        %v3494 = vpack.c.b16 %v3440, %v3438
        %v3495 = vpack.c.b16 %v3443, %v3441
        %v3496 = vpack.c.b16 %v3444, %v3442
        %v3497 = vpack.c.b16 %v3447, %v3445
        %v3498 = vpack.c.b16 %v3448, %v3446
        %v3499 = vpack.c.b16 %v3451, %v3449
        %v3500 = vpack.c.b16 %v3452, %v3450
        %v3501 = vpack.c.b16 %v3455, %v3453
        %v3502 = vpack.c.b16 %v3456, %v3454
        %v3503 = vpack.c.b16 %v3459, %v3457
        %v3504 = vpack.c.b16 %v3460, %v3458
        %v3505 = vpack.c.b16 %v3463, %v3461
        %v3506 = vpack.c.b16 %v3464, %v3462
        %v3507 = vpack.c.b16 %v3467, %v3465
        %v3508 = vpack.c.b16 %v3468, %v3466
        %v3509 = vpack.c.b16 %v3471, %v3469
        %v3510 = vpack.c.b16 %v3472, %v3470
        %v3511 = vpack.c.b16 %v3475, %v3473
        %v3512 = vpack.c.b16 %v3476, %v3474
        %v3513 = vpack.c.b16 %v3479, %v3477
        %v3514 = vpack.c.b16 %v3480, %v3478
        %v3515 = vpack.c.b16 %v3483, %v3481
        %v3516 = vpack.c.b16 %v3484, %v3482
        %3549 = vmatpush.bf16.msra.mxu0 %v3499
        %3550 = vmatpush.bf16.msra.mxu0 %v3497
        %3551 = vmatpush.bf16.msra.mxu0 %v3495
        %3552 = vmatpush.bf16.msra.mxu0 %v3493
        %3553 = vmatpush.bf16.msra.mxu0 %v3491
        %3554 = vmatpush.bf16.msra.mxu0 %v3489
        %3555 = vmatpush.bf16.msra.mxu0 %v3487
        %3556 = vmatpush.bf16.msra.mxu0 %v3485
        %3557 = vmatmul.bf16.gmra.mxu0 %v3387
        %v3558 = vpop.f32.mrf.mxu0
        %v3559 = vadd.f32 0.0, %v3558
        %v3560 = vpop.f32.mrf.mxu0
        %3561 = vdwg.mxu0
        %3562 = vmatpush.bf16.msra.mxu0 %v3515
        %3563 = vmatpush.bf16.msra.mxu0 %v3513
        %3564 = vmatpush.bf16.msra.mxu0 %v3511
        %3565 = vmatpush.bf16.msra.mxu0 %v3509
        %3566 = vmatpush.bf16.msra.mxu0 %v3507
        %3567 = vmatpush.bf16.msra.mxu0 %v3505
        %3568 = vmatpush.bf16.msra.mxu0 %v3503
        %3569 = vmatpush.bf16.msra.mxu0 %v3501
        %3570 = vmatmul.bf16.gmra.mxu0 %v3388
        %v3571 = vpop.f32.mrf.mxu0
        %v3572 = vadd.f32 %v3559, %v3571
        %v3573 = vpop.f32.mrf.mxu0
        %3574 = vdwg.mxu0
        %3575 = vmatpush.bf16.msra.mxu0 %v3500
        %3576 = vmatpush.bf16.msra.mxu0 %v3498
        %3577 = vmatpush.bf16.msra.mxu0 %v3496
        %3578 = vmatpush.bf16.msra.mxu0 %v3494
        %3579 = vmatpush.bf16.msra.mxu0 %v3492
        %3580 = vmatpush.bf16.msra.mxu0 %v3490
        %3581 = vmatpush.bf16.msra.mxu0 %v3488
        %3582 = vmatpush.bf16.msra.mxu0 %v3486
        %3583 = vmatmul.bf16.gmra.mxu0 %v3387
        %v3584 = vpop.f32.mrf.mxu0
        %v3585 = vadd.f32 0.0, %v3584
        %v3586 = vpop.f32.mrf.mxu0
        %3587 = vdwg.mxu0
        %3588 = vmatpush.bf16.msra.mxu0 %v3516
        %3589 = vmatpush.bf16.msra.mxu0 %v3514
        %3590 = vmatpush.bf16.msra.mxu0 %v3512
        %3591 = vmatpush.bf16.msra.mxu0 %v3510
        %3592 = vmatpush.bf16.msra.mxu0 %v3508
        %3593 = vmatpush.bf16.msra.mxu0 %v3506
        %3594 = vmatpush.bf16.msra.mxu0 %v3504
        %3595 = vmatpush.bf16.msra.mxu0 %v3502
        %3596 = vmatmul.bf16.gmra.mxu0 %v3388
        %v3597 = vpop.f32.mrf.mxu0
        %v3598 = vadd.f32 %v3585, %v3597
        %v3599 = vpop.f32.mrf.mxu0
        %3600 = vdwg.mxu0
        %v3602 = vperm.slane %v3351, 0
        %v3603 = vperm.slane %v3351, 2
        %v3606 = vmul.f32 %v3572, %v3602
        %v3607 = vmul.f32 %v3598, %v3603
        %v3608 = vperm.slane %v3351, 1
        %v3609 = vperm.slane %v3351, 3
        %v3612 = vadd.f32 %v3606, %v3608
        %v3613 = vadd.f32 %v3607, %v3609
        %v3614 = vpack.c.bf16 %v3612, %v3612
        %v3615 = vpack.c.bf16 %v3613, %v3613
        %v3648 = vunpack.c.l.b16 %v3353
        %v3649 = vunpack.c.l.b16 %v3354
        %v3650 = vunpack.c.l.b16 %v3355
        %v3651 = vunpack.c.l.b16 %v3356
        %v3652 = vunpack.c.l.b16 %v3357
        %v3653 = vunpack.c.l.b16 %v3358
        %v3654 = vunpack.c.l.b16 %v3359
        %v3655 = vunpack.c.l.b16 %v3360
        %v3656 = vunpack.c.l.b16 %v3361
        %v3657 = vunpack.c.l.b16 %v3362
        %v3658 = vunpack.c.l.b16 %v3363
        %v3659 = vunpack.c.l.b16 %v3364
        %v3660 = vunpack.c.l.b16 %v3365
        %v3661 = vunpack.c.l.b16 %v3366
        %v3662 = vunpack.c.l.b16 %v3367
        %v3663 = vunpack.c.l.b16 %v3368
        %v3664 = vunpack.c.l.b16 %v3369
        %v3665 = vunpack.c.l.b16 %v3370
        %v3666 = vunpack.c.l.b16 %v3371
        %v3667 = vunpack.c.l.b16 %v3372
        %v3668 = vunpack.c.l.b16 %v3373
        %v3669 = vunpack.c.l.b16 %v3374
        %v3670 = vunpack.c.l.b16 %v3375
        %v3671 = vunpack.c.l.b16 %v3376
        %v3672 = vunpack.c.l.b16 %v3377
        %v3673 = vunpack.c.l.b16 %v3378
        %v3674 = vunpack.c.l.b16 %v3379
        %v3675 = vunpack.c.l.b16 %v3380
        %v3676 = vunpack.c.l.b16 %v3381
        %v3677 = vunpack.c.l.b16 %v3382
        %v3678 = vunpack.c.l.b16 %v3383
        %v3679 = vunpack.c.l.b16 %v3384
        %v3680 = vpack.c.b16 %v3649, %v3648
        %v3681 = vpack.c.b16 %v3651, %v3650
        %v3682 = vpack.c.b16 %v3653, %v3652
        %v3683 = vpack.c.b16 %v3655, %v3654
        %v3684 = vpack.c.b16 %v3657, %v3656
        %v3685 = vpack.c.b16 %v3659, %v3658
        %v3686 = vpack.c.b16 %v3661, %v3660
        %v3687 = vpack.c.b16 %v3663, %v3662
        %v3688 = vpack.c.b16 %v3665, %v3664
        %v3689 = vpack.c.b16 %v3667, %v3666
        %v3690 = vpack.c.b16 %v3669, %v3668
        %v3691 = vpack.c.b16 %v3671, %v3670
        %v3692 = vpack.c.b16 %v3673, %v3672
        %v3693 = vpack.c.b16 %v3675, %v3674
        %v3694 = vpack.c.b16 %v3677, %v3676
        %v3695 = vpack.c.b16 %v3679, %v3678
        %3712 = vmatpush.bf16.msra.mxu0 %v3687
        %3713 = vmatpush.bf16.msra.mxu0 %v3686
        %3714 = vmatpush.bf16.msra.mxu0 %v3685
        %3715 = vmatpush.bf16.msra.mxu0 %v3684
        %3716 = vmatpush.bf16.msra.mxu0 %v3683
        %3717 = vmatpush.bf16.msra.mxu0 %v3682
        %3718 = vmatpush.bf16.msra.mxu0 %v3681
        %3719 = vmatpush.bf16.msra.mxu0 %v3680
        %3720 = vmatmul.bf16.gmra.mxu0 %v3614
        %v3721 = vpop.f32.mrf.mxu0
        %v3722 = vadd.f32 %v3386, %v3721
        %v3723 = vpop.f32.mrf.mxu0
        %3724 = vdwg.mxu0
        %3725 = vmatpush.bf16.msra.mxu0 %v3695
        %3726 = vmatpush.bf16.msra.mxu0 %v3694
        %3727 = vmatpush.bf16.msra.mxu0 %v3693
        %3728 = vmatpush.bf16.msra.mxu0 %v3692
        %3729 = vmatpush.bf16.msra.mxu0 %v3691
        %3730 = vmatpush.bf16.msra.mxu0 %v3690
        %3731 = vmatpush.bf16.msra.mxu0 %v3689
        %3732 = vmatpush.bf16.msra.mxu0 %v3688
        %3733 = vmatmul.bf16.gmra.mxu0 %v3615
        %v3734 = vpop.f32.mrf.mxu0
        %v3735 = vadd.f32 %v3722, %v3734
        %v3736 = vpop.f32.mrf.mxu0
        %3737 = vdwg.mxu0
        %3738 = vst.msk [vmem:[%s995 + $0x2] sm:$0x1] %vm1882, %v3735
        %v3741 = vrot.slane %v3613, 7
        %v3742 = vsel %vm1887, %v3612, %v3741
        %3744 = vst.msk [vmem:[%s999 + $0x4] sm:$0x3] %vm1891, %v3742
        %v3745 = vld [vmem:[#allocation21 + $0x200] sm:$0xff]
        %v3746 = vld [vmem:[#allocation21 + $0x208] sm:$0xff]
        %v3747 = vld [vmem:[#allocation21 + $0x210] sm:$0xff]
        %v3748 = vld [vmem:[#allocation21 + $0x218] sm:$0xff]
        %v3749 = vld [vmem:[#allocation21 + $0x220] sm:$0xff]
        %v3750 = vld [vmem:[#allocation21 + $0x228] sm:$0xff]
        %v3751 = vld [vmem:[#allocation21 + $0x230] sm:$0xff]
        %v3752 = vld [vmem:[#allocation21 + $0x238] sm:$0xff]
        %v3753 = vld [vmem:[#allocation21 + $0x240] sm:$0xff]
        %v3754 = vld [vmem:[#allocation21 + $0x248] sm:$0xff]
        %v3755 = vld [vmem:[#allocation21 + $0x250] sm:$0xff]
        %v3756 = vld [vmem:[#allocation21 + $0x258] sm:$0xff]
        %v3757 = vld [vmem:[#allocation21 + $0x260] sm:$0xff]
        %v3758 = vld [vmem:[#allocation21 + $0x268] sm:$0xff]
        %v3759 = vld [vmem:[#allocation21 + $0x270] sm:$0xff]
        %v3760 = vld [vmem:[#allocation21 + $0x278] sm:$0xff]
        %v3761 = vld [vmem:[#allocation21 + $0x280] sm:$0xff]
        %v3762 = vld [vmem:[#allocation21 + $0x288] sm:$0xff]
        %v3763 = vld [vmem:[#allocation21 + $0x290] sm:$0xff]
        %v3764 = vld [vmem:[#allocation21 + $0x298] sm:$0xff]
        %v3765 = vld [vmem:[#allocation21 + $0x2a0] sm:$0xff]
        %v3766 = vld [vmem:[#allocation21 + $0x2a8] sm:$0xff]
        %v3767 = vld [vmem:[#allocation21 + $0x2b0] sm:$0xff]
        %v3768 = vld [vmem:[#allocation21 + $0x2b8] sm:$0xff]
        %v3769 = vld [vmem:[#allocation21 + $0x2c0] sm:$0xff]
        %v3770 = vld [vmem:[#allocation21 + $0x2c8] sm:$0xff]
        %v3771 = vld [vmem:[#allocation21 + $0x2d0] sm:$0xff]
        %v3772 = vld [vmem:[#allocation21 + $0x2d8] sm:$0xff]
        %v3773 = vld [vmem:[#allocation21 + $0x2e0] sm:$0xff]
        %v3774 = vld [vmem:[#allocation21 + $0x2e8] sm:$0xff]
        %v3775 = vld [vmem:[#allocation21 + $0x2f0] sm:$0xff]
        %v3776 = vld [vmem:[#allocation21 + $0x2f8] sm:$0xff]
        %v3809 = vunpack.c.l.b16 %v3745
        %v3810 = vunpack.c.h.b16 %v3745
        %v3811 = vunpack.c.l.b16 %v3746
        %v3812 = vunpack.c.h.b16 %v3746
        %v3813 = vunpack.c.l.b16 %v3747
        %v3814 = vunpack.c.h.b16 %v3747
        %v3815 = vunpack.c.l.b16 %v3748
        %v3816 = vunpack.c.h.b16 %v3748
        %v3817 = vunpack.c.l.b16 %v3749
        %v3818 = vunpack.c.h.b16 %v3749
        %v3819 = vunpack.c.l.b16 %v3750
        %v3820 = vunpack.c.h.b16 %v3750
        %v3821 = vunpack.c.l.b16 %v3751
        %v3822 = vunpack.c.h.b16 %v3751
        %v3823 = vunpack.c.l.b16 %v3752
        %v3824 = vunpack.c.h.b16 %v3752
        %v3825 = vunpack.c.l.b16 %v3753
        %v3826 = vunpack.c.h.b16 %v3753
        %v3827 = vunpack.c.l.b16 %v3754
        %v3828 = vunpack.c.h.b16 %v3754
        %v3829 = vunpack.c.l.b16 %v3755
        %v3830 = vunpack.c.h.b16 %v3755
        %v3831 = vunpack.c.l.b16 %v3756
        %v3832 = vunpack.c.h.b16 %v3756
        %v3833 = vunpack.c.l.b16 %v3757
        %v3834 = vunpack.c.h.b16 %v3757
        %v3835 = vunpack.c.l.b16 %v3758
        %v3836 = vunpack.c.h.b16 %v3758
        %v3837 = vunpack.c.l.b16 %v3759
        %v3838 = vunpack.c.h.b16 %v3759
        %v3839 = vunpack.c.l.b16 %v3760
        %v3840 = vunpack.c.h.b16 %v3760
        %v3841 = vunpack.c.l.b16 %v3761
        %v3842 = vunpack.c.h.b16 %v3761
        %v3843 = vunpack.c.l.b16 %v3762
        %v3844 = vunpack.c.h.b16 %v3762
        %v3845 = vunpack.c.l.b16 %v3763
        %v3846 = vunpack.c.h.b16 %v3763
        %v3847 = vunpack.c.l.b16 %v3764
        %v3848 = vunpack.c.h.b16 %v3764
        %v3849 = vunpack.c.l.b16 %v3765
        %v3850 = vunpack.c.h.b16 %v3765
        %v3851 = vunpack.c.l.b16 %v3766
        %v3852 = vunpack.c.h.b16 %v3766
        %v3853 = vunpack.c.l.b16 %v3767
        %v3854 = vunpack.c.h.b16 %v3767
        %v3855 = vunpack.c.l.b16 %v3768
        %v3856 = vunpack.c.h.b16 %v3768
        %v3857 = vunpack.c.l.b16 %v3769
        %v3858 = vunpack.c.h.b16 %v3769
        %v3859 = vunpack.c.l.b16 %v3770
        %v3860 = vunpack.c.h.b16 %v3770
        %v3861 = vunpack.c.l.b16 %v3771
        %v3862 = vunpack.c.h.b16 %v3771
        %v3863 = vunpack.c.l.b16 %v3772
        %v3864 = vunpack.c.h.b16 %v3772
        %v3865 = vunpack.c.l.b16 %v3773
        %v3866 = vunpack.c.h.b16 %v3773
        %v3867 = vunpack.c.l.b16 %v3774
        %v3868 = vunpack.c.h.b16 %v3774
        %v3869 = vunpack.c.l.b16 %v3775
        %v3870 = vunpack.c.h.b16 %v3775
        %v3871 = vunpack.c.l.b16 %v3776
        %v3872 = vunpack.c.h.b16 %v3776
        %v3873 = vpack.c.b16 %v3811, %v3809
        %v3874 = vpack.c.b16 %v3812, %v3810
        %v3875 = vpack.c.b16 %v3815, %v3813
        %v3876 = vpack.c.b16 %v3816, %v3814
        %v3877 = vpack.c.b16 %v3819, %v3817
        %v3878 = vpack.c.b16 %v3820, %v3818
        %v3879 = vpack.c.b16 %v3823, %v3821
        %v3880 = vpack.c.b16 %v3824, %v3822
        %v3881 = vpack.c.b16 %v3827, %v3825
        %v3882 = vpack.c.b16 %v3828, %v3826
        %v3883 = vpack.c.b16 %v3831, %v3829
        %v3884 = vpack.c.b16 %v3832, %v3830
        %v3885 = vpack.c.b16 %v3835, %v3833
        %v3886 = vpack.c.b16 %v3836, %v3834
        %v3887 = vpack.c.b16 %v3839, %v3837
        %v3888 = vpack.c.b16 %v3840, %v3838
        %v3889 = vpack.c.b16 %v3843, %v3841
        %v3890 = vpack.c.b16 %v3844, %v3842
        %v3891 = vpack.c.b16 %v3847, %v3845
        %v3892 = vpack.c.b16 %v3848, %v3846
        %v3893 = vpack.c.b16 %v3851, %v3849
        %v3894 = vpack.c.b16 %v3852, %v3850
        %v3895 = vpack.c.b16 %v3855, %v3853
        %v3896 = vpack.c.b16 %v3856, %v3854
        %v3897 = vpack.c.b16 %v3859, %v3857
        %v3898 = vpack.c.b16 %v3860, %v3858
        %v3899 = vpack.c.b16 %v3863, %v3861
        %v3900 = vpack.c.b16 %v3864, %v3862
        %v3901 = vpack.c.b16 %v3867, %v3865
        %v3902 = vpack.c.b16 %v3868, %v3866
        %v3903 = vpack.c.b16 %v3871, %v3869
        %v3904 = vpack.c.b16 %v3872, %v3870
        %3937 = vmatpush.bf16.msra.mxu0 %v3887
        %3938 = vmatpush.bf16.msra.mxu0 %v3885
        %3939 = vmatpush.bf16.msra.mxu0 %v3883
        %3940 = vmatpush.bf16.msra.mxu0 %v3881
        %3941 = vmatpush.bf16.msra.mxu0 %v3879
        %3942 = vmatpush.bf16.msra.mxu0 %v3877
        %3943 = vmatpush.bf16.msra.mxu0 %v3875
        %3944 = vmatpush.bf16.msra.mxu0 %v3873
        %3945 = vmatmul.bf16.gmra.mxu0 %v3614
        %v3946 = vpop.f32.mrf.mxu0
        %v3947 = vadd.f32 0.0, %v3946
        %v3948 = vpop.f32.mrf.mxu0
        %3949 = vdwg.mxu0
        %3950 = vmatpush.bf16.msra.mxu0 %v3903
        %3951 = vmatpush.bf16.msra.mxu0 %v3901
        %3952 = vmatpush.bf16.msra.mxu0 %v3899
        %3953 = vmatpush.bf16.msra.mxu0 %v3897
        %3954 = vmatpush.bf16.msra.mxu0 %v3895
        %3955 = vmatpush.bf16.msra.mxu0 %v3893
        %3956 = vmatpush.bf16.msra.mxu0 %v3891
        %3957 = vmatpush.bf16.msra.mxu0 %v3889
        %3958 = vmatmul.bf16.gmra.mxu0 %v3615
        %v3959 = vpop.f32.mrf.mxu0
        %v3960 = vadd.f32 %v3947, %v3959
        %v3961 = vpop.f32.mrf.mxu0
        %3962 = vdwg.mxu0
        %3963 = vmatpush.bf16.msra.mxu0 %v3888
        %3964 = vmatpush.bf16.msra.mxu0 %v3886
        %3965 = vmatpush.bf16.msra.mxu0 %v3884
        %3966 = vmatpush.bf16.msra.mxu0 %v3882
        %3967 = vmatpush.bf16.msra.mxu0 %v3880
        %3968 = vmatpush.bf16.msra.mxu0 %v3878
        %3969 = vmatpush.bf16.msra.mxu0 %v3876
        %3970 = vmatpush.bf16.msra.mxu0 %v3874
        %3971 = vmatmul.bf16.gmra.mxu0 %v3614
        %v3972 = vpop.f32.mrf.mxu0
        %v3973 = vadd.f32 0.0, %v3972
        %v3974 = vpop.f32.mrf.mxu0
        %3975 = vdwg.mxu0
        %3976 = vmatpush.bf16.msra.mxu0 %v3904
        %3977 = vmatpush.bf16.msra.mxu0 %v3902
        %3978 = vmatpush.bf16.msra.mxu0 %v3900
        %3979 = vmatpush.bf16.msra.mxu0 %v3898
        %3980 = vmatpush.bf16.msra.mxu0 %v3896
        %3981 = vmatpush.bf16.msra.mxu0 %v3894
        %3982 = vmatpush.bf16.msra.mxu0 %v3892
        %3983 = vmatpush.bf16.msra.mxu0 %v3890
        %3984 = vmatmul.bf16.gmra.mxu0 %v3615
        %v3985 = vpop.f32.mrf.mxu0
        %v3986 = vadd.f32 %v3973, %v3985
        %v3987 = vpop.f32.mrf.mxu0
        %3988 = vdwg.mxu0
        %v3989 = vadd.f32 %v3038, %v3960
        %v3990 = vadd.f32 %v3064, %v3986
        %v3991 = vld [vmem:[#allocation10] sm:$0xff]
        %v3992 = vld [vmem:[#allocation10 + $0x8] sm:$0xff]
        %v3993 = vld [vmem:[#allocation10 + $0x10] sm:$0xff]
        %v3994 = vld [vmem:[#allocation10 + $0x18] sm:$0xff]
        %v3995 = vld [vmem:[#allocation10 + $0x20] sm:$0xff]
        %v3996 = vld [vmem:[#allocation10 + $0x28] sm:$0xff]
        %v3997 = vld [vmem:[#allocation10 + $0x30] sm:$0xff]
        %v3998 = vld [vmem:[#allocation10 + $0x38] sm:$0xff]
        %v3999 = vld [vmem:[#allocation10 + $0x40] sm:$0xff]
        %v4000 = vld [vmem:[#allocation10 + $0x48] sm:$0xff]
        %v4001 = vld [vmem:[#allocation10 + $0x50] sm:$0xff]
        %v4002 = vld [vmem:[#allocation10 + $0x58] sm:$0xff]
        %v4003 = vld [vmem:[#allocation10 + $0x60] sm:$0xff]
        %v4004 = vld [vmem:[#allocation10 + $0x68] sm:$0xff]
        %v4005 = vld [vmem:[#allocation10 + $0x70] sm:$0xff]
        %v4006 = vld [vmem:[#allocation10 + $0x78] sm:$0xff]
        %v4007 = vld [vmem:[#allocation10 + $0x80] sm:$0xff]
        %v4008 = vld [vmem:[#allocation10 + $0x88] sm:$0xff]
        %v4009 = vld [vmem:[#allocation10 + $0x90] sm:$0xff]
        %v4010 = vld [vmem:[#allocation10 + $0x98] sm:$0xff]
        %v4011 = vld [vmem:[#allocation10 + $0xa0] sm:$0xff]
        %v4012 = vld [vmem:[#allocation10 + $0xa8] sm:$0xff]
        %v4013 = vld [vmem:[#allocation10 + $0xb0] sm:$0xff]
        %v4014 = vld [vmem:[#allocation10 + $0xb8] sm:$0xff]
        %v4015 = vld [vmem:[#allocation10 + $0xc0] sm:$0xff]
        %v4016 = vld [vmem:[#allocation10 + $0xc8] sm:$0xff]
        %v4017 = vld [vmem:[#allocation10 + $0xd0] sm:$0xff]
        %v4018 = vld [vmem:[#allocation10 + $0xd8] sm:$0xff]
        %v4019 = vld [vmem:[#allocation10 + $0xe0] sm:$0xff]
        %v4020 = vld [vmem:[#allocation10 + $0xe8] sm:$0xff]
        %v4021 = vld [vmem:[#allocation10 + $0xf0] sm:$0xff]
        %v4022 = vld [vmem:[#allocation10 + $0xf8] sm:$0xff]
        %v4023 = vrot.slane %v1968, 1
        %v4024 = vrot.slane %v1971, 1
        %v4059 = vunpack.c.l.b16 %v3991
        %v4060 = vunpack.c.h.b16 %v3991
        %v4061 = vunpack.c.l.b16 %v3992
        %v4062 = vunpack.c.h.b16 %v3992
        %v4063 = vunpack.c.l.b16 %v3993
        %v4064 = vunpack.c.h.b16 %v3993
        %v4065 = vunpack.c.l.b16 %v3994
        %v4066 = vunpack.c.h.b16 %v3994
        %v4067 = vunpack.c.l.b16 %v3995
        %v4068 = vunpack.c.h.b16 %v3995
        %v4069 = vunpack.c.l.b16 %v3996
        %v4070 = vunpack.c.h.b16 %v3996
        %v4071 = vunpack.c.l.b16 %v3997
        %v4072 = vunpack.c.h.b16 %v3997
        %v4073 = vunpack.c.l.b16 %v3998
        %v4074 = vunpack.c.h.b16 %v3998
        %v4075 = vunpack.c.l.b16 %v3999
        %v4076 = vunpack.c.h.b16 %v3999
        %v4077 = vunpack.c.l.b16 %v4000
        %v4078 = vunpack.c.h.b16 %v4000
        %v4079 = vunpack.c.l.b16 %v4001
        %v4080 = vunpack.c.h.b16 %v4001
        %v4081 = vunpack.c.l.b16 %v4002
        %v4082 = vunpack.c.h.b16 %v4002
        %v4083 = vunpack.c.l.b16 %v4003
        %v4084 = vunpack.c.h.b16 %v4003
        %v4085 = vunpack.c.l.b16 %v4004
        %v4086 = vunpack.c.h.b16 %v4004
        %v4087 = vunpack.c.l.b16 %v4005
        %v4088 = vunpack.c.h.b16 %v4005
        %v4089 = vunpack.c.l.b16 %v4006
        %v4090 = vunpack.c.h.b16 %v4006
        %v4091 = vunpack.c.l.b16 %v4007
        %v4092 = vunpack.c.h.b16 %v4007
        %v4093 = vunpack.c.l.b16 %v4008
        %v4094 = vunpack.c.h.b16 %v4008
        %v4095 = vunpack.c.l.b16 %v4009
        %v4096 = vunpack.c.h.b16 %v4009
        %v4097 = vunpack.c.l.b16 %v4010
        %v4098 = vunpack.c.h.b16 %v4010
        %v4099 = vunpack.c.l.b16 %v4011
        %v4100 = vunpack.c.h.b16 %v4011
        %v4101 = vunpack.c.l.b16 %v4012
        %v4102 = vunpack.c.h.b16 %v4012
        %v4103 = vunpack.c.l.b16 %v4013
        %v4104 = vunpack.c.h.b16 %v4013
        %v4105 = vunpack.c.l.b16 %v4014
        %v4106 = vunpack.c.h.b16 %v4014
        %v4107 = vunpack.c.l.b16 %v4015
        %v4108 = vunpack.c.h.b16 %v4015
        %v4109 = vunpack.c.l.b16 %v4016
        %v4110 = vunpack.c.h.b16 %v4016
        %v4111 = vunpack.c.l.b16 %v4017
        %v4112 = vunpack.c.h.b16 %v4017
        %v4113 = vunpack.c.l.b16 %v4018
        %v4114 = vunpack.c.h.b16 %v4018
        %v4115 = vunpack.c.l.b16 %v4019
        %v4116 = vunpack.c.h.b16 %v4019
        %v4117 = vunpack.c.l.b16 %v4020
        %v4118 = vunpack.c.h.b16 %v4020
        %v4119 = vunpack.c.l.b16 %v4021
        %v4120 = vunpack.c.h.b16 %v4021
        %v4121 = vunpack.c.l.b16 %v4022
        %v4122 = vunpack.c.h.b16 %v4022
        %v4123 = vpack.c.b16 %v4061, %v4059
        %v4124 = vpack.c.b16 %v4062, %v4060
        %v4125 = vpack.c.b16 %v4065, %v4063
        %v4126 = vpack.c.b16 %v4066, %v4064
        %v4127 = vpack.c.b16 %v4069, %v4067
        %v4128 = vpack.c.b16 %v4070, %v4068
        %v4129 = vpack.c.b16 %v4073, %v4071
        %v4130 = vpack.c.b16 %v4074, %v4072
        %v4131 = vpack.c.b16 %v4077, %v4075
        %v4132 = vpack.c.b16 %v4078, %v4076
        %v4133 = vpack.c.b16 %v4081, %v4079
        %v4134 = vpack.c.b16 %v4082, %v4080
        %v4135 = vpack.c.b16 %v4085, %v4083
        %v4136 = vpack.c.b16 %v4086, %v4084
        %v4137 = vpack.c.b16 %v4089, %v4087
        %v4138 = vpack.c.b16 %v4090, %v4088
        %v4139 = vpack.c.b16 %v4093, %v4091
        %v4140 = vpack.c.b16 %v4094, %v4092
        %v4141 = vpack.c.b16 %v4097, %v4095
        %v4142 = vpack.c.b16 %v4098, %v4096
        %v4143 = vpack.c.b16 %v4101, %v4099
        %v4144 = vpack.c.b16 %v4102, %v4100
        %v4145 = vpack.c.b16 %v4105, %v4103
        %v4146 = vpack.c.b16 %v4106, %v4104
        %v4147 = vpack.c.b16 %v4109, %v4107
        %v4148 = vpack.c.b16 %v4110, %v4108
        %v4149 = vpack.c.b16 %v4113, %v4111
        %v4150 = vpack.c.b16 %v4114, %v4112
        %v4151 = vpack.c.b16 %v4117, %v4115
        %v4152 = vpack.c.b16 %v4118, %v4116
        %v4153 = vpack.c.b16 %v4121, %v4119
        %v4154 = vpack.c.b16 %v4122, %v4120
        %4187 = vmatpush.bf16.msra.mxu0 %v4137
        %4188 = vmatpush.bf16.msra.mxu0 %v4135
        %4189 = vmatpush.bf16.msra.mxu0 %v4133
        %4190 = vmatpush.bf16.msra.mxu0 %v4131
        %4191 = vmatpush.bf16.msra.mxu0 %v4129
        %4192 = vmatpush.bf16.msra.mxu0 %v4127
        %4193 = vmatpush.bf16.msra.mxu0 %v4125
        %4194 = vmatpush.bf16.msra.mxu0 %v4123
        %4195 = vmatmul.bf16.gmra.mxu0 %v4023
        %v4196 = vpop.f32.mrf.mxu0
        %v4197 = vadd.f32 0.0, %v4196
        %v4198 = vpop.f32.mrf.mxu0
        %4199 = vdwg.mxu0
        %4200 = vmatpush.bf16.msra.mxu0 %v4153
        %4201 = vmatpush.bf16.msra.mxu0 %v4151
        %4202 = vmatpush.bf16.msra.mxu0 %v4149
        %4203 = vmatpush.bf16.msra.mxu0 %v4147
        %4204 = vmatpush.bf16.msra.mxu0 %v4145
        %4205 = vmatpush.bf16.msra.mxu0 %v4143
        %4206 = vmatpush.bf16.msra.mxu0 %v4141
        %4207 = vmatpush.bf16.msra.mxu0 %v4139
        %4208 = vmatmul.bf16.gmra.mxu0 %v4024
        %v4209 = vpop.f32.mrf.mxu0
        %v4210 = vadd.f32 %v4197, %v4209
        %v4211 = vpop.f32.mrf.mxu0
        %4212 = vdwg.mxu0
        %4213 = vmatpush.bf16.msra.mxu0 %v4138
        %4214 = vmatpush.bf16.msra.mxu0 %v4136
        %4215 = vmatpush.bf16.msra.mxu0 %v4134
        %4216 = vmatpush.bf16.msra.mxu0 %v4132
        %4217 = vmatpush.bf16.msra.mxu0 %v4130
        %4218 = vmatpush.bf16.msra.mxu0 %v4128
        %4219 = vmatpush.bf16.msra.mxu0 %v4126
        %4220 = vmatpush.bf16.msra.mxu0 %v4124
        %4221 = vmatmul.bf16.gmra.mxu0 %v4023
        %v4222 = vpop.f32.mrf.mxu0
        %v4223 = vadd.f32 0.0, %v4222
        %v4224 = vpop.f32.mrf.mxu0
        %4225 = vdwg.mxu0
        %4226 = vmatpush.bf16.msra.mxu0 %v4154
        %4227 = vmatpush.bf16.msra.mxu0 %v4152
        %4228 = vmatpush.bf16.msra.mxu0 %v4150
        %4229 = vmatpush.bf16.msra.mxu0 %v4148
        %4230 = vmatpush.bf16.msra.mxu0 %v4146
        %4231 = vmatpush.bf16.msra.mxu0 %v4144
        %4232 = vmatpush.bf16.msra.mxu0 %v4142
        %4233 = vmatpush.bf16.msra.mxu0 %v4140
        %4234 = vmatmul.bf16.gmra.mxu0 %v4024
        %v4235 = vpop.f32.mrf.mxu0
        %v4236 = vadd.f32 %v4223, %v4235
        %v4237 = vpop.f32.mrf.mxu0
        %4238 = vdwg.mxu0
        %s4239 = scalar_lea.vmem %s12, 512
        %v4240 = vld [vmem:[%s4239] sm:$0xff]
        %v4241 = vld [vmem:[%s4239 + $0x8] sm:$0xff]
        %v4242 = vld [vmem:[%s4239 + $0x10] sm:$0xff]
        %v4243 = vld [vmem:[%s4239 + $0x18] sm:$0xff]
        %v4244 = vld [vmem:[%s4239 + $0x20] sm:$0xff]
        %v4245 = vld [vmem:[%s4239 + $0x28] sm:$0xff]
        %v4246 = vld [vmem:[%s4239 + $0x30] sm:$0xff]
        %v4247 = vld [vmem:[%s4239 + $0x38] sm:$0xff]
        %v4248 = vld [vmem:[%s4239 + $0x40] sm:$0xff]
        %v4249 = vld [vmem:[%s4239 + $0x48] sm:$0xff]
        %v4250 = vld [vmem:[%s4239 + $0x50] sm:$0xff]
        %v4251 = vld [vmem:[%s4239 + $0x58] sm:$0xff]
        %v4252 = vld [vmem:[%s4239 + $0x60] sm:$0xff]
        %v4253 = vld [vmem:[%s4239 + $0x68] sm:$0xff]
        %v4254 = vld [vmem:[%s4239 + $0x70] sm:$0xff]
        %v4255 = vld [vmem:[%s4239 + $0x78] sm:$0xff]
        %v4256 = vld [vmem:[%s4239 + $0x80] sm:$0xff]
        %v4257 = vld [vmem:[%s4239 + $0x88] sm:$0xff]
        %v4258 = vld [vmem:[%s4239 + $0x90] sm:$0xff]
        %v4259 = vld [vmem:[%s4239 + $0x98] sm:$0xff]
        %v4260 = vld [vmem:[%s4239 + $0xa0] sm:$0xff]
        %v4261 = vld [vmem:[%s4239 + $0xa8] sm:$0xff]
        %v4262 = vld [vmem:[%s4239 + $0xb0] sm:$0xff]
        %v4263 = vld [vmem:[%s4239 + $0xb8] sm:$0xff]
        %v4264 = vld [vmem:[%s4239 + $0xc0] sm:$0xff]
        %v4265 = vld [vmem:[%s4239 + $0xc8] sm:$0xff]
        %v4266 = vld [vmem:[%s4239 + $0xd0] sm:$0xff]
        %v4267 = vld [vmem:[%s4239 + $0xd8] sm:$0xff]
        %v4268 = vld [vmem:[%s4239 + $0xe0] sm:$0xff]
        %v4269 = vld [vmem:[%s4239 + $0xe8] sm:$0xff]
        %v4270 = vld [vmem:[%s4239 + $0xf0] sm:$0xff]
        %v4271 = vld [vmem:[%s4239 + $0xf8] sm:$0xff]
        %s4272 = scalar_lea.vmem [#allocation18], 8
        %v4273 = vld [vmem:[%s4272] sm:$0xf]
        %s4274 = scalar_lea.vmem [#allocation19], 256
        %v4275 = vld [vmem:[%s4274] sm:$0xf]
        %v4276 = vld [vmem:[%s4274 + $0x4] sm:$0xf]
        %v4277 = vld [vmem:[%s4274 + $0x8] sm:$0xf]
        %v4278 = vld [vmem:[%s4274 + $0xc] sm:$0xf]
        %v4279 = vld [vmem:[%s4274 + $0x10] sm:$0xf]
        %v4280 = vld [vmem:[%s4274 + $0x14] sm:$0xf]
        %v4281 = vld [vmem:[%s4274 + $0x18] sm:$0xf]
        %v4282 = vld [vmem:[%s4274 + $0x1c] sm:$0xf]
        %v4283 = vld [vmem:[%s4274 + $0x20] sm:$0xf]
        %v4284 = vld [vmem:[%s4274 + $0x24] sm:$0xf]
        %v4285 = vld [vmem:[%s4274 + $0x28] sm:$0xf]
        %v4286 = vld [vmem:[%s4274 + $0x2c] sm:$0xf]
        %v4287 = vld [vmem:[%s4274 + $0x30] sm:$0xf]
        %v4288 = vld [vmem:[%s4274 + $0x34] sm:$0xf]
        %v4289 = vld [vmem:[%s4274 + $0x38] sm:$0xf]
        %v4290 = vld [vmem:[%s4274 + $0x3c] sm:$0xf]
        %v4291 = vld [vmem:[%s4274 + $0x40] sm:$0xf]
        %v4292 = vld [vmem:[%s4274 + $0x44] sm:$0xf]
        %v4293 = vld [vmem:[%s4274 + $0x48] sm:$0xf]
        %v4294 = vld [vmem:[%s4274 + $0x4c] sm:$0xf]
        %v4295 = vld [vmem:[%s4274 + $0x50] sm:$0xf]
        %v4296 = vld [vmem:[%s4274 + $0x54] sm:$0xf]
        %v4297 = vld [vmem:[%s4274 + $0x58] sm:$0xf]
        %v4298 = vld [vmem:[%s4274 + $0x5c] sm:$0xf]
        %v4299 = vld [vmem:[%s4274 + $0x60] sm:$0xf]
        %v4300 = vld [vmem:[%s4274 + $0x64] sm:$0xf]
        %v4301 = vld [vmem:[%s4274 + $0x68] sm:$0xf]
        %v4302 = vld [vmem:[%s4274 + $0x6c] sm:$0xf]
        %v4303 = vld [vmem:[%s4274 + $0x70] sm:$0xf]
        %v4304 = vld [vmem:[%s4274 + $0x74] sm:$0xf]
        %v4305 = vld [vmem:[%s4274 + $0x78] sm:$0xf]
        %v4306 = vld [vmem:[%s4274 + $0x7c] sm:$0xf]
        %s4307 = scalar_lea.vmem %s15, 2
        %v4308 = vld [vmem:[%s4307] sm:$0x1]
        %v4309 = vpack.c.bf16 %v4210, %v4210
        %v4310 = vpack.c.bf16 %v4236, %v4236
        %v4343 = vunpack.c.l.b16 %v4240
        %v4344 = vunpack.c.h.b16 %v4240
        %v4345 = vunpack.c.l.b16 %v4241
        %v4346 = vunpack.c.h.b16 %v4241
        %v4347 = vunpack.c.l.b16 %v4242
        %v4348 = vunpack.c.h.b16 %v4242
        %v4349 = vunpack.c.l.b16 %v4243
        %v4350 = vunpack.c.h.b16 %v4243
        %v4351 = vunpack.c.l.b16 %v4244
        %v4352 = vunpack.c.h.b16 %v4244
        %v4353 = vunpack.c.l.b16 %v4245
        %v4354 = vunpack.c.h.b16 %v4245
        %v4355 = vunpack.c.l.b16 %v4246
        %v4356 = vunpack.c.h.b16 %v4246
        %v4357 = vunpack.c.l.b16 %v4247
        %v4358 = vunpack.c.h.b16 %v4247
        %v4359 = vunpack.c.l.b16 %v4248
        %v4360 = vunpack.c.h.b16 %v4248
        %v4361 = vunpack.c.l.b16 %v4249
        %v4362 = vunpack.c.h.b16 %v4249
        %v4363 = vunpack.c.l.b16 %v4250
        %v4364 = vunpack.c.h.b16 %v4250
        %v4365 = vunpack.c.l.b16 %v4251
        %v4366 = vunpack.c.h.b16 %v4251
        %v4367 = vunpack.c.l.b16 %v4252
        %v4368 = vunpack.c.h.b16 %v4252
        %v4369 = vunpack.c.l.b16 %v4253
        %v4370 = vunpack.c.h.b16 %v4253
        %v4371 = vunpack.c.l.b16 %v4254
        %v4372 = vunpack.c.h.b16 %v4254
        %v4373 = vunpack.c.l.b16 %v4255
        %v4374 = vunpack.c.h.b16 %v4255
        %v4375 = vunpack.c.l.b16 %v4256
        %v4376 = vunpack.c.h.b16 %v4256
        %v4377 = vunpack.c.l.b16 %v4257
        %v4378 = vunpack.c.h.b16 %v4257
        %v4379 = vunpack.c.l.b16 %v4258
        %v4380 = vunpack.c.h.b16 %v4258
        %v4381 = vunpack.c.l.b16 %v4259
        %v4382 = vunpack.c.h.b16 %v4259
        %v4383 = vunpack.c.l.b16 %v4260
        %v4384 = vunpack.c.h.b16 %v4260
        %v4385 = vunpack.c.l.b16 %v4261
        %v4386 = vunpack.c.h.b16 %v4261
        %v4387 = vunpack.c.l.b16 %v4262
        %v4388 = vunpack.c.h.b16 %v4262
        %v4389 = vunpack.c.l.b16 %v4263
        %v4390 = vunpack.c.h.b16 %v4263
        %v4391 = vunpack.c.l.b16 %v4264
        %v4392 = vunpack.c.h.b16 %v4264
        %v4393 = vunpack.c.l.b16 %v4265
        %v4394 = vunpack.c.h.b16 %v4265
        %v4395 = vunpack.c.l.b16 %v4266
        %v4396 = vunpack.c.h.b16 %v4266
        %v4397 = vunpack.c.l.b16 %v4267
        %v4398 = vunpack.c.h.b16 %v4267
        %v4399 = vunpack.c.l.b16 %v4268
        %v4400 = vunpack.c.h.b16 %v4268
        %v4401 = vunpack.c.l.b16 %v4269
        %v4402 = vunpack.c.h.b16 %v4269
        %v4403 = vunpack.c.l.b16 %v4270
        %v4404 = vunpack.c.h.b16 %v4270
        %v4405 = vunpack.c.l.b16 %v4271
        %v4406 = vunpack.c.h.b16 %v4271
        %v4407 = vpack.c.b16 %v4345, %v4343
        %v4408 = vpack.c.b16 %v4346, %v4344
        %v4409 = vpack.c.b16 %v4349, %v4347
        %v4410 = vpack.c.b16 %v4350, %v4348
        %v4411 = vpack.c.b16 %v4353, %v4351
        %v4412 = vpack.c.b16 %v4354, %v4352
        %v4413 = vpack.c.b16 %v4357, %v4355
        %v4414 = vpack.c.b16 %v4358, %v4356
        %v4415 = vpack.c.b16 %v4361, %v4359
        %v4416 = vpack.c.b16 %v4362, %v4360
        %v4417 = vpack.c.b16 %v4365, %v4363
        %v4418 = vpack.c.b16 %v4366, %v4364
        %v4419 = vpack.c.b16 %v4369, %v4367
        %v4420 = vpack.c.b16 %v4370, %v4368
        %v4421 = vpack.c.b16 %v4373, %v4371
        %v4422 = vpack.c.b16 %v4374, %v4372
        %v4423 = vpack.c.b16 %v4377, %v4375
        %v4424 = vpack.c.b16 %v4378, %v4376
        %v4425 = vpack.c.b16 %v4381, %v4379
        %v4426 = vpack.c.b16 %v4382, %v4380
        %v4427 = vpack.c.b16 %v4385, %v4383
        %v4428 = vpack.c.b16 %v4386, %v4384
        %v4429 = vpack.c.b16 %v4389, %v4387
        %v4430 = vpack.c.b16 %v4390, %v4388
        %v4431 = vpack.c.b16 %v4393, %v4391
        %v4432 = vpack.c.b16 %v4394, %v4392
        %v4433 = vpack.c.b16 %v4397, %v4395
        %v4434 = vpack.c.b16 %v4398, %v4396
        %v4435 = vpack.c.b16 %v4401, %v4399
        %v4436 = vpack.c.b16 %v4402, %v4400
        %v4437 = vpack.c.b16 %v4405, %v4403
        %v4438 = vpack.c.b16 %v4406, %v4404
        %4471 = vmatpush.bf16.msra.mxu0 %v4421
        %4472 = vmatpush.bf16.msra.mxu0 %v4419
        %4473 = vmatpush.bf16.msra.mxu0 %v4417
        %4474 = vmatpush.bf16.msra.mxu0 %v4415
        %4475 = vmatpush.bf16.msra.mxu0 %v4413
        %4476 = vmatpush.bf16.msra.mxu0 %v4411
        %4477 = vmatpush.bf16.msra.mxu0 %v4409
        %4478 = vmatpush.bf16.msra.mxu0 %v4407
        %4479 = vmatmul.bf16.gmra.mxu0 %v4309
        %v4480 = vpop.f32.mrf.mxu0
        %v4481 = vadd.f32 0.0, %v4480
        %v4482 = vpop.f32.mrf.mxu0
        %4483 = vdwg.mxu0
        %4484 = vmatpush.bf16.msra.mxu0 %v4437
        %4485 = vmatpush.bf16.msra.mxu0 %v4435
        %4486 = vmatpush.bf16.msra.mxu0 %v4433
        %4487 = vmatpush.bf16.msra.mxu0 %v4431
        %4488 = vmatpush.bf16.msra.mxu0 %v4429
        %4489 = vmatpush.bf16.msra.mxu0 %v4427
        %4490 = vmatpush.bf16.msra.mxu0 %v4425
        %4491 = vmatpush.bf16.msra.mxu0 %v4423
        %4492 = vmatmul.bf16.gmra.mxu0 %v4310
        %v4493 = vpop.f32.mrf.mxu0
        %v4494 = vadd.f32 %v4481, %v4493
        %v4495 = vpop.f32.mrf.mxu0
        %4496 = vdwg.mxu0
        %4497 = vmatpush.bf16.msra.mxu0 %v4422
        %4498 = vmatpush.bf16.msra.mxu0 %v4420
        %4499 = vmatpush.bf16.msra.mxu0 %v4418
        %4500 = vmatpush.bf16.msra.mxu0 %v4416
        %4501 = vmatpush.bf16.msra.mxu0 %v4414
        %4502 = vmatpush.bf16.msra.mxu0 %v4412
        %4503 = vmatpush.bf16.msra.mxu0 %v4410
        %4504 = vmatpush.bf16.msra.mxu0 %v4408
        %4505 = vmatmul.bf16.gmra.mxu0 %v4309
        %v4506 = vpop.f32.mrf.mxu0
        %v4507 = vadd.f32 0.0, %v4506
        %v4508 = vpop.f32.mrf.mxu0
        %4509 = vdwg.mxu0
        %4510 = vmatpush.bf16.msra.mxu0 %v4438
        %4511 = vmatpush.bf16.msra.mxu0 %v4436
        %4512 = vmatpush.bf16.msra.mxu0 %v4434
        %4513 = vmatpush.bf16.msra.mxu0 %v4432
        %4514 = vmatpush.bf16.msra.mxu0 %v4430
        %4515 = vmatpush.bf16.msra.mxu0 %v4428
        %4516 = vmatpush.bf16.msra.mxu0 %v4426
        %4517 = vmatpush.bf16.msra.mxu0 %v4424
        %4518 = vmatmul.bf16.gmra.mxu0 %v4310
        %v4519 = vpop.f32.mrf.mxu0
        %v4520 = vadd.f32 %v4507, %v4519
        %v4521 = vpop.f32.mrf.mxu0
        %4522 = vdwg.mxu0
        %v4524 = vperm.slane %v4273, 0
        %v4525 = vperm.slane %v4273, 2
        %v4528 = vmul.f32 %v4494, %v4524
        %v4529 = vmul.f32 %v4520, %v4525
        %v4530 = vperm.slane %v4273, 1
        %v4531 = vperm.slane %v4273, 3
        %v4534 = vadd.f32 %v4528, %v4530
        %v4535 = vadd.f32 %v4529, %v4531
        %v4536 = vpack.c.bf16 %v4534, %v4534
        %v4537 = vpack.c.bf16 %v4535, %v4535
        %v4570 = vunpack.c.l.b16 %v4275
        %v4571 = vunpack.c.l.b16 %v4276
        %v4572 = vunpack.c.l.b16 %v4277
        %v4573 = vunpack.c.l.b16 %v4278
        %v4574 = vunpack.c.l.b16 %v4279
        %v4575 = vunpack.c.l.b16 %v4280
        %v4576 = vunpack.c.l.b16 %v4281
        %v4577 = vunpack.c.l.b16 %v4282
        %v4578 = vunpack.c.l.b16 %v4283
        %v4579 = vunpack.c.l.b16 %v4284
        %v4580 = vunpack.c.l.b16 %v4285
        %v4581 = vunpack.c.l.b16 %v4286
        %v4582 = vunpack.c.l.b16 %v4287
        %v4583 = vunpack.c.l.b16 %v4288
        %v4584 = vunpack.c.l.b16 %v4289
        %v4585 = vunpack.c.l.b16 %v4290
        %v4586 = vunpack.c.l.b16 %v4291
        %v4587 = vunpack.c.l.b16 %v4292
        %v4588 = vunpack.c.l.b16 %v4293
        %v4589 = vunpack.c.l.b16 %v4294
        %v4590 = vunpack.c.l.b16 %v4295
        %v4591 = vunpack.c.l.b16 %v4296
        %v4592 = vunpack.c.l.b16 %v4297
        %v4593 = vunpack.c.l.b16 %v4298
        %v4594 = vunpack.c.l.b16 %v4299
        %v4595 = vunpack.c.l.b16 %v4300
        %v4596 = vunpack.c.l.b16 %v4301
        %v4597 = vunpack.c.l.b16 %v4302
        %v4598 = vunpack.c.l.b16 %v4303
        %v4599 = vunpack.c.l.b16 %v4304
        %v4600 = vunpack.c.l.b16 %v4305
        %v4601 = vunpack.c.l.b16 %v4306
        %v4602 = vpack.c.b16 %v4571, %v4570
        %v4603 = vpack.c.b16 %v4573, %v4572
        %v4604 = vpack.c.b16 %v4575, %v4574
        %v4605 = vpack.c.b16 %v4577, %v4576
        %v4606 = vpack.c.b16 %v4579, %v4578
        %v4607 = vpack.c.b16 %v4581, %v4580
        %v4608 = vpack.c.b16 %v4583, %v4582
        %v4609 = vpack.c.b16 %v4585, %v4584
        %v4610 = vpack.c.b16 %v4587, %v4586
        %v4611 = vpack.c.b16 %v4589, %v4588
        %v4612 = vpack.c.b16 %v4591, %v4590
        %v4613 = vpack.c.b16 %v4593, %v4592
        %v4614 = vpack.c.b16 %v4595, %v4594
        %v4615 = vpack.c.b16 %v4597, %v4596
        %v4616 = vpack.c.b16 %v4599, %v4598
        %v4617 = vpack.c.b16 %v4601, %v4600
        %4634 = vmatpush.bf16.msra.mxu0 %v4609
        %4635 = vmatpush.bf16.msra.mxu0 %v4608
        %4636 = vmatpush.bf16.msra.mxu0 %v4607
        %4637 = vmatpush.bf16.msra.mxu0 %v4606
        %4638 = vmatpush.bf16.msra.mxu0 %v4605
        %4639 = vmatpush.bf16.msra.mxu0 %v4604
        %4640 = vmatpush.bf16.msra.mxu0 %v4603
        %4641 = vmatpush.bf16.msra.mxu0 %v4602
        %4642 = vmatmul.bf16.gmra.mxu0 %v4536
        %v4643 = vpop.f32.mrf.mxu0
        %v4644 = vadd.f32 %v4308, %v4643
        %v4645 = vpop.f32.mrf.mxu0
        %4646 = vdwg.mxu0
        %4647 = vmatpush.bf16.msra.mxu0 %v4617
        %4648 = vmatpush.bf16.msra.mxu0 %v4616
        %4649 = vmatpush.bf16.msra.mxu0 %v4615
        %4650 = vmatpush.bf16.msra.mxu0 %v4614
        %4651 = vmatpush.bf16.msra.mxu0 %v4613
        %4652 = vmatpush.bf16.msra.mxu0 %v4612
        %4653 = vmatpush.bf16.msra.mxu0 %v4611
        %4654 = vmatpush.bf16.msra.mxu0 %v4610
        %4655 = vmatmul.bf16.gmra.mxu0 %v4537
        %v4656 = vpop.f32.mrf.mxu0
        %v4657 = vadd.f32 %v4644, %v4656
        %v4658 = vpop.f32.mrf.mxu0
        %4659 = vdwg.mxu0
        %4660 = vst.msk [vmem:[%s995 + $0x3] sm:$0x1] %vm1882, %v4657
        %v4663 = vrot.slane %v4535, 7
        %v4664 = vsel %vm1887, %v4534, %v4663
        %4666 = vst.msk [vmem:[%s999 + $0x6] sm:$0x3] %vm1891, %v4664
        %v4667 = vld [vmem:[#allocation21 + $0x300] sm:$0xff]
        %v4668 = vld [vmem:[#allocation21 + $0x308] sm:$0xff]
        %v4669 = vld [vmem:[#allocation21 + $0x310] sm:$0xff]
        %v4670 = vld [vmem:[#allocation21 + $0x318] sm:$0xff]
        %v4671 = vld [vmem:[#allocation21 + $0x320] sm:$0xff]
        %v4672 = vld [vmem:[#allocation21 + $0x328] sm:$0xff]
        %v4673 = vld [vmem:[#allocation21 + $0x330] sm:$0xff]
        %v4674 = vld [vmem:[#allocation21 + $0x338] sm:$0xff]
        %v4675 = vld [vmem:[#allocation21 + $0x340] sm:$0xff]
        %v4676 = vld [vmem:[#allocation21 + $0x348] sm:$0xff]
        %v4677 = vld [vmem:[#allocation21 + $0x350] sm:$0xff]
        %v4678 = vld [vmem:[#allocation21 + $0x358] sm:$0xff]
        %v4679 = vld [vmem:[#allocation21 + $0x360] sm:$0xff]
        %v4680 = vld [vmem:[#allocation21 + $0x368] sm:$0xff]
        %v4681 = vld [vmem:[#allocation21 + $0x370] sm:$0xff]
        %v4682 = vld [vmem:[#allocation21 + $0x378] sm:$0xff]
        %v4683 = vld [vmem:[#allocation21 + $0x380] sm:$0xff]
        %v4684 = vld [vmem:[#allocation21 + $0x388] sm:$0xff]
        %v4685 = vld [vmem:[#allocation21 + $0x390] sm:$0xff]
        %v4686 = vld [vmem:[#allocation21 + $0x398] sm:$0xff]
        %v4687 = vld [vmem:[#allocation21 + $0x3a0] sm:$0xff]
        %v4688 = vld [vmem:[#allocation21 + $0x3a8] sm:$0xff]
        %v4689 = vld [vmem:[#allocation21 + $0x3b0] sm:$0xff]
        %v4690 = vld [vmem:[#allocation21 + $0x3b8] sm:$0xff]
        %v4691 = vld [vmem:[#allocation21 + $0x3c0] sm:$0xff]
        %v4692 = vld [vmem:[#allocation21 + $0x3c8] sm:$0xff]
        %v4693 = vld [vmem:[#allocation21 + $0x3d0] sm:$0xff]
        %v4694 = vld [vmem:[#allocation21 + $0x3d8] sm:$0xff]
        %v4695 = vld [vmem:[#allocation21 + $0x3e0] sm:$0xff]
        %v4696 = vld [vmem:[#allocation21 + $0x3e8] sm:$0xff]
        %v4697 = vld [vmem:[#allocation21 + $0x3f0] sm:$0xff]
        %v4698 = vld [vmem:[#allocation21 + $0x3f8] sm:$0xff]
        %v4731 = vunpack.c.l.b16 %v4667
        %v4732 = vunpack.c.h.b16 %v4667
        %v4733 = vunpack.c.l.b16 %v4668
        %v4734 = vunpack.c.h.b16 %v4668
        %v4735 = vunpack.c.l.b16 %v4669
        %v4736 = vunpack.c.h.b16 %v4669
        %v4737 = vunpack.c.l.b16 %v4670
        %v4738 = vunpack.c.h.b16 %v4670
        %v4739 = vunpack.c.l.b16 %v4671
        %v4740 = vunpack.c.h.b16 %v4671
        %v4741 = vunpack.c.l.b16 %v4672
        %v4742 = vunpack.c.h.b16 %v4672
        %v4743 = vunpack.c.l.b16 %v4673
        %v4744 = vunpack.c.h.b16 %v4673
        %v4745 = vunpack.c.l.b16 %v4674
        %v4746 = vunpack.c.h.b16 %v4674
        %v4747 = vunpack.c.l.b16 %v4675
        %v4748 = vunpack.c.h.b16 %v4675
        %v4749 = vunpack.c.l.b16 %v4676
        %v4750 = vunpack.c.h.b16 %v4676
        %v4751 = vunpack.c.l.b16 %v4677
        %v4752 = vunpack.c.h.b16 %v4677
        %v4753 = vunpack.c.l.b16 %v4678
        %v4754 = vunpack.c.h.b16 %v4678
        %v4755 = vunpack.c.l.b16 %v4679
        %v4756 = vunpack.c.h.b16 %v4679
        %v4757 = vunpack.c.l.b16 %v4680
        %v4758 = vunpack.c.h.b16 %v4680
        %v4759 = vunpack.c.l.b16 %v4681
        %v4760 = vunpack.c.h.b16 %v4681
        %v4761 = vunpack.c.l.b16 %v4682
        %v4762 = vunpack.c.h.b16 %v4682
        %v4763 = vunpack.c.l.b16 %v4683
        %v4764 = vunpack.c.h.b16 %v4683
        %v4765 = vunpack.c.l.b16 %v4684
        %v4766 = vunpack.c.h.b16 %v4684
        %v4767 = vunpack.c.l.b16 %v4685
        %v4768 = vunpack.c.h.b16 %v4685
        %v4769 = vunpack.c.l.b16 %v4686
        %v4770 = vunpack.c.h.b16 %v4686
        %v4771 = vunpack.c.l.b16 %v4687
        %v4772 = vunpack.c.h.b16 %v4687
        %v4773 = vunpack.c.l.b16 %v4688
        %v4774 = vunpack.c.h.b16 %v4688
        %v4775 = vunpack.c.l.b16 %v4689
        %v4776 = vunpack.c.h.b16 %v4689
        %v4777 = vunpack.c.l.b16 %v4690
        %v4778 = vunpack.c.h.b16 %v4690
        %v4779 = vunpack.c.l.b16 %v4691
        %v4780 = vunpack.c.h.b16 %v4691
        %v4781 = vunpack.c.l.b16 %v4692
        %v4782 = vunpack.c.h.b16 %v4692
        %v4783 = vunpack.c.l.b16 %v4693
        %v4784 = vunpack.c.h.b16 %v4693
        %v4785 = vunpack.c.l.b16 %v4694
        %v4786 = vunpack.c.h.b16 %v4694
        %v4787 = vunpack.c.l.b16 %v4695
        %v4788 = vunpack.c.h.b16 %v4695
        %v4789 = vunpack.c.l.b16 %v4696
        %v4790 = vunpack.c.h.b16 %v4696
        %v4791 = vunpack.c.l.b16 %v4697
        %v4792 = vunpack.c.h.b16 %v4697
        %v4793 = vunpack.c.l.b16 %v4698
        %v4794 = vunpack.c.h.b16 %v4698
        %v4795 = vpack.c.b16 %v4733, %v4731
        %v4796 = vpack.c.b16 %v4734, %v4732
        %v4797 = vpack.c.b16 %v4737, %v4735
        %v4798 = vpack.c.b16 %v4738, %v4736
        %v4799 = vpack.c.b16 %v4741, %v4739
        %v4800 = vpack.c.b16 %v4742, %v4740
        %v4801 = vpack.c.b16 %v4745, %v4743
        %v4802 = vpack.c.b16 %v4746, %v4744
        %v4803 = vpack.c.b16 %v4749, %v4747
        %v4804 = vpack.c.b16 %v4750, %v4748
        %v4805 = vpack.c.b16 %v4753, %v4751
        %v4806 = vpack.c.b16 %v4754, %v4752
        %v4807 = vpack.c.b16 %v4757, %v4755
        %v4808 = vpack.c.b16 %v4758, %v4756
        %v4809 = vpack.c.b16 %v4761, %v4759
        %v4810 = vpack.c.b16 %v4762, %v4760
        %v4811 = vpack.c.b16 %v4765, %v4763
        %v4812 = vpack.c.b16 %v4766, %v4764
        %v4813 = vpack.c.b16 %v4769, %v4767
        %v4814 = vpack.c.b16 %v4770, %v4768
        %v4815 = vpack.c.b16 %v4773, %v4771
        %v4816 = vpack.c.b16 %v4774, %v4772
        %v4817 = vpack.c.b16 %v4777, %v4775
        %v4818 = vpack.c.b16 %v4778, %v4776
        %v4819 = vpack.c.b16 %v4781, %v4779
        %v4820 = vpack.c.b16 %v4782, %v4780
        %v4821 = vpack.c.b16 %v4785, %v4783
        %v4822 = vpack.c.b16 %v4786, %v4784
        %v4823 = vpack.c.b16 %v4789, %v4787
        %v4824 = vpack.c.b16 %v4790, %v4788
        %v4825 = vpack.c.b16 %v4793, %v4791
        %v4826 = vpack.c.b16 %v4794, %v4792
        %4859 = vmatpush.bf16.msra.mxu0 %v4809
        %4860 = vmatpush.bf16.msra.mxu0 %v4807
        %4861 = vmatpush.bf16.msra.mxu0 %v4805
        %4862 = vmatpush.bf16.msra.mxu0 %v4803
        %4863 = vmatpush.bf16.msra.mxu0 %v4801
        %4864 = vmatpush.bf16.msra.mxu0 %v4799
        %4865 = vmatpush.bf16.msra.mxu0 %v4797
        %4866 = vmatpush.bf16.msra.mxu0 %v4795
        %4867 = vmatmul.bf16.gmra.mxu0 %v4536
        %v4868 = vpop.f32.mrf.mxu0
        %v4869 = vadd.f32 0.0, %v4868
        %v4870 = vpop.f32.mrf.mxu0
        %4871 = vdwg.mxu0
        %4872 = vmatpush.bf16.msra.mxu0 %v4825
        %4873 = vmatpush.bf16.msra.mxu0 %v4823
        %4874 = vmatpush.bf16.msra.mxu0 %v4821
        %4875 = vmatpush.bf16.msra.mxu0 %v4819
        %4876 = vmatpush.bf16.msra.mxu0 %v4817
        %4877 = vmatpush.bf16.msra.mxu0 %v4815
        %4878 = vmatpush.bf16.msra.mxu0 %v4813
        %4879 = vmatpush.bf16.msra.mxu0 %v4811
        %4880 = vmatmul.bf16.gmra.mxu0 %v4537
        %v4881 = vpop.f32.mrf.mxu0
        %v4882 = vadd.f32 %v4869, %v4881
        %v4883 = vpop.f32.mrf.mxu0
        %4884 = vdwg.mxu0
        %4885 = vmatpush.bf16.msra.mxu0 %v4810
        %4886 = vmatpush.bf16.msra.mxu0 %v4808
        %4887 = vmatpush.bf16.msra.mxu0 %v4806
        %4888 = vmatpush.bf16.msra.mxu0 %v4804
        %4889 = vmatpush.bf16.msra.mxu0 %v4802
        %4890 = vmatpush.bf16.msra.mxu0 %v4800
        %4891 = vmatpush.bf16.msra.mxu0 %v4798
        %4892 = vmatpush.bf16.msra.mxu0 %v4796
        %4893 = vmatmul.bf16.gmra.mxu0 %v4536
        %v4894 = vpop.f32.mrf.mxu0
        %v4895 = vadd.f32 0.0, %v4894
        %v4896 = vpop.f32.mrf.mxu0
        %4897 = vdwg.mxu0
        %4898 = vmatpush.bf16.msra.mxu0 %v4826
        %4899 = vmatpush.bf16.msra.mxu0 %v4824
        %4900 = vmatpush.bf16.msra.mxu0 %v4822
        %4901 = vmatpush.bf16.msra.mxu0 %v4820
        %4902 = vmatpush.bf16.msra.mxu0 %v4818
        %4903 = vmatpush.bf16.msra.mxu0 %v4816
        %4904 = vmatpush.bf16.msra.mxu0 %v4814
        %4905 = vmatpush.bf16.msra.mxu0 %v4812
        %4906 = vmatmul.bf16.gmra.mxu0 %v4537
        %v4907 = vpop.f32.mrf.mxu0
        %v4908 = vadd.f32 %v4895, %v4907
        %v4909 = vpop.f32.mrf.mxu0
        %4910 = vdwg.mxu0
        %v4911 = vadd.f32 %v3989, %v4882
        %v4912 = vadd.f32 %v3990, %v4908
        %v4913 = vld [vmem:[#allocation22] ss:$2 sm:$0x3]
        %v4915 = vperm.slane %v4913, 0
        %v4916 = vperm.slane %v4913, 1
        %v4919 = vmul.f32 %v4911, %v4915
        %v4920 = vmul.f32 %v4912, %v4916
        %s4921 = scalar_lea.vmem [#allocation22], 1
        %v4922 = vld [vmem:[%s4921] ss:$2 sm:$0x3]
        %v4924 = vperm.slane %v4922, 0
        %v4925 = vperm.slane %v4922, 1
        %v4928 = vadd.f32 %v4919, %v4924
        %v4929 = vadd.f32 %v4920, %v4925
        %v4930 = vmax.f32 %v4928, 0.0
        %v4931 = vmax.f32 %v4929, 0.0
        %v4932 = vld [vmem:[#allocation24] sm:$0xff]
        %v4933 = vld [vmem:[#allocation24 + $0x8] sm:$0xff]
        %v4934 = vld [vmem:[#allocation24 + $0x10] sm:$0xff]
        %v4935 = vld [vmem:[#allocation24 + $0x18] sm:$0xff]
        %v4936 = vld [vmem:[#allocation24 + $0x20] sm:$0xff]
        %v4937 = vld [vmem:[#allocation24 + $0x28] sm:$0xff]
        %v4938 = vld [vmem:[#allocation24 + $0x30] sm:$0xff]
        %v4939 = vld [vmem:[#allocation24 + $0x38] sm:$0xff]
        %v4940 = vld [vmem:[#allocation24 + $0x40] sm:$0xff]
        %v4941 = vld [vmem:[#allocation24 + $0x48] sm:$0xff]
        %v4942 = vld [vmem:[#allocation24 + $0x50] sm:$0xff]
        %v4943 = vld [vmem:[#allocation24 + $0x58] sm:$0xff]
        %v4944 = vld [vmem:[#allocation24 + $0x60] sm:$0xff]
        %v4945 = vld [vmem:[#allocation24 + $0x68] sm:$0xff]
        %v4946 = vld [vmem:[#allocation24 + $0x70] sm:$0xff]
        %v4947 = vld [vmem:[#allocation24 + $0x78] sm:$0xff]
        %v4948 = vld [vmem:[#allocation24 + $0x80] sm:$0xff]
        %v4949 = vld [vmem:[#allocation24 + $0x88] sm:$0xff]
        %v4950 = vld [vmem:[#allocation24 + $0x90] sm:$0xff]
        %v4951 = vld [vmem:[#allocation24 + $0x98] sm:$0xff]
        %v4952 = vld [vmem:[#allocation24 + $0xa0] sm:$0xff]
        %v4953 = vld [vmem:[#allocation24 + $0xa8] sm:$0xff]
        %v4954 = vld [vmem:[#allocation24 + $0xb0] sm:$0xff]
        %v4955 = vld [vmem:[#allocation24 + $0xb8] sm:$0xff]
        %v4956 = vld [vmem:[#allocation24 + $0xc0] sm:$0xff]
        %v4957 = vld [vmem:[#allocation24 + $0xc8] sm:$0xff]
        %v4958 = vld [vmem:[#allocation24 + $0xd0] sm:$0xff]
        %v4959 = vld [vmem:[#allocation24 + $0xd8] sm:$0xff]
        %v4960 = vld [vmem:[#allocation24 + $0xe0] sm:$0xff]
        %v4961 = vld [vmem:[#allocation24 + $0xe8] sm:$0xff]
        %v4962 = vld [vmem:[#allocation24 + $0xf0] sm:$0xff]
        %v4963 = vld [vmem:[#allocation24 + $0xf8] sm:$0xff]
        %v4964 = vld [vmem:[#allocation25] sm:$0xf]
        %v4965 = vld [vmem:[#allocation27] sm:$0xf]
        %v4966 = vld [vmem:[#allocation27 + $0x4] sm:$0xf]
        %v4967 = vld [vmem:[#allocation27 + $0x8] sm:$0xf]
        %v4968 = vld [vmem:[#allocation27 + $0xc] sm:$0xf]
        %v4969 = vld [vmem:[#allocation27 + $0x10] sm:$0xf]
        %v4970 = vld [vmem:[#allocation27 + $0x14] sm:$0xf]
        %v4971 = vld [vmem:[#allocation27 + $0x18] sm:$0xf]
        %v4972 = vld [vmem:[#allocation27 + $0x1c] sm:$0xf]
        %v4973 = vld [vmem:[#allocation27 + $0x20] sm:$0xf]
        %v4974 = vld [vmem:[#allocation27 + $0x24] sm:$0xf]
        %v4975 = vld [vmem:[#allocation27 + $0x28] sm:$0xf]
        %v4976 = vld [vmem:[#allocation27 + $0x2c] sm:$0xf]
        %v4977 = vld [vmem:[#allocation27 + $0x30] sm:$0xf]
        %v4978 = vld [vmem:[#allocation27 + $0x34] sm:$0xf]
        %v4979 = vld [vmem:[#allocation27 + $0x38] sm:$0xf]
        %v4980 = vld [vmem:[#allocation27 + $0x3c] sm:$0xf]
        %v4981 = vld [vmem:[#allocation27 + $0x40] sm:$0xf]
        %v4982 = vld [vmem:[#allocation27 + $0x44] sm:$0xf]
        %v4983 = vld [vmem:[#allocation27 + $0x48] sm:$0xf]
        %v4984 = vld [vmem:[#allocation27 + $0x4c] sm:$0xf]
        %v4985 = vld [vmem:[#allocation27 + $0x50] sm:$0xf]
        %v4986 = vld [vmem:[#allocation27 + $0x54] sm:$0xf]
        %v4987 = vld [vmem:[#allocation27 + $0x58] sm:$0xf]
        %v4988 = vld [vmem:[#allocation27 + $0x5c] sm:$0xf]
        %v4989 = vld [vmem:[#allocation27 + $0x60] sm:$0xf]
        %v4990 = vld [vmem:[#allocation27 + $0x64] sm:$0xf]
        %v4991 = vld [vmem:[#allocation27 + $0x68] sm:$0xf]
        %v4992 = vld [vmem:[#allocation27 + $0x6c] sm:$0xf]
        %v4993 = vld [vmem:[#allocation27 + $0x70] sm:$0xf]
        %v4994 = vld [vmem:[#allocation27 + $0x74] sm:$0xf]
        %v4995 = vld [vmem:[#allocation27 + $0x78] sm:$0xf]
        %v4996 = vld [vmem:[#allocation27 + $0x7c] sm:$0xf]
        %v4997 = vld [vmem:[#allocation28] sm:$0x1]
        %v4998 = vpack.c.bf16 %v4930, %v4930
        %v4999 = vpack.c.bf16 %v4931, %v4931
        %v5032 = vunpack.c.l.b16 %v4932
        %v5033 = vunpack.c.h.b16 %v4932
        %v5034 = vunpack.c.l.b16 %v4933
        %v5035 = vunpack.c.h.b16 %v4933
        %v5036 = vunpack.c.l.b16 %v4934
        %v5037 = vunpack.c.h.b16 %v4934
        %v5038 = vunpack.c.l.b16 %v4935
        %v5039 = vunpack.c.h.b16 %v4935
        %v5040 = vunpack.c.l.b16 %v4936
        %v5041 = vunpack.c.h.b16 %v4936
        %v5042 = vunpack.c.l.b16 %v4937
        %v5043 = vunpack.c.h.b16 %v4937
        %v5044 = vunpack.c.l.b16 %v4938
        %v5045 = vunpack.c.h.b16 %v4938
        %v5046 = vunpack.c.l.b16 %v4939
        %v5047 = vunpack.c.h.b16 %v4939
        %v5048 = vunpack.c.l.b16 %v4940
        %v5049 = vunpack.c.h.b16 %v4940
        %v5050 = vunpack.c.l.b16 %v4941
        %v5051 = vunpack.c.h.b16 %v4941
        %v5052 = vunpack.c.l.b16 %v4942
        %v5053 = vunpack.c.h.b16 %v4942
        %v5054 = vunpack.c.l.b16 %v4943
        %v5055 = vunpack.c.h.b16 %v4943
        %v5056 = vunpack.c.l.b16 %v4944
        %v5057 = vunpack.c.h.b16 %v4944
        %v5058 = vunpack.c.l.b16 %v4945
        %v5059 = vunpack.c.h.b16 %v4945
        %v5060 = vunpack.c.l.b16 %v4946
        %v5061 = vunpack.c.h.b16 %v4946
        %v5062 = vunpack.c.l.b16 %v4947
        %v5063 = vunpack.c.h.b16 %v4947
        %v5064 = vunpack.c.l.b16 %v4948
        %v5065 = vunpack.c.h.b16 %v4948
        %v5066 = vunpack.c.l.b16 %v4949
        %v5067 = vunpack.c.h.b16 %v4949
        %v5068 = vunpack.c.l.b16 %v4950
        %v5069 = vunpack.c.h.b16 %v4950
        %v5070 = vunpack.c.l.b16 %v4951
        %v5071 = vunpack.c.h.b16 %v4951
        %v5072 = vunpack.c.l.b16 %v4952
        %v5073 = vunpack.c.h.b16 %v4952
        %v5074 = vunpack.c.l.b16 %v4953
        %v5075 = vunpack.c.h.b16 %v4953
        %v5076 = vunpack.c.l.b16 %v4954
        %v5077 = vunpack.c.h.b16 %v4954
        %v5078 = vunpack.c.l.b16 %v4955
        %v5079 = vunpack.c.h.b16 %v4955
        %v5080 = vunpack.c.l.b16 %v4956
        %v5081 = vunpack.c.h.b16 %v4956
        %v5082 = vunpack.c.l.b16 %v4957
        %v5083 = vunpack.c.h.b16 %v4957
        %v5084 = vunpack.c.l.b16 %v4958
        %v5085 = vunpack.c.h.b16 %v4958
        %v5086 = vunpack.c.l.b16 %v4959
        %v5087 = vunpack.c.h.b16 %v4959
        %v5088 = vunpack.c.l.b16 %v4960
        %v5089 = vunpack.c.h.b16 %v4960
        %v5090 = vunpack.c.l.b16 %v4961
        %v5091 = vunpack.c.h.b16 %v4961
        %v5092 = vunpack.c.l.b16 %v4962
        %v5093 = vunpack.c.h.b16 %v4962
        %v5094 = vunpack.c.l.b16 %v4963
        %v5095 = vunpack.c.h.b16 %v4963
        %v5096 = vpack.c.b16 %v5034, %v5032
        %v5097 = vpack.c.b16 %v5035, %v5033
        %v5098 = vpack.c.b16 %v5038, %v5036
        %v5099 = vpack.c.b16 %v5039, %v5037
        %v5100 = vpack.c.b16 %v5042, %v5040
        %v5101 = vpack.c.b16 %v5043, %v5041
        %v5102 = vpack.c.b16 %v5046, %v5044
        %v5103 = vpack.c.b16 %v5047, %v5045
        %v5104 = vpack.c.b16 %v5050, %v5048
        %v5105 = vpack.c.b16 %v5051, %v5049
        %v5106 = vpack.c.b16 %v5054, %v5052
        %v5107 = vpack.c.b16 %v5055, %v5053
        %v5108 = vpack.c.b16 %v5058, %v5056
        %v5109 = vpack.c.b16 %v5059, %v5057
        %v5110 = vpack.c.b16 %v5062, %v5060
        %v5111 = vpack.c.b16 %v5063, %v5061
        %v5112 = vpack.c.b16 %v5066, %v5064
        %v5113 = vpack.c.b16 %v5067, %v5065
        %v5114 = vpack.c.b16 %v5070, %v5068
        %v5115 = vpack.c.b16 %v5071, %v5069
        %v5116 = vpack.c.b16 %v5074, %v5072
        %v5117 = vpack.c.b16 %v5075, %v5073
        %v5118 = vpack.c.b16 %v5078, %v5076
        %v5119 = vpack.c.b16 %v5079, %v5077
        %v5120 = vpack.c.b16 %v5082, %v5080
        %v5121 = vpack.c.b16 %v5083, %v5081
        %v5122 = vpack.c.b16 %v5086, %v5084
        %v5123 = vpack.c.b16 %v5087, %v5085
        %v5124 = vpack.c.b16 %v5090, %v5088
        %v5125 = vpack.c.b16 %v5091, %v5089
        %v5126 = vpack.c.b16 %v5094, %v5092
        %v5127 = vpack.c.b16 %v5095, %v5093
        %5160 = vmatpush.bf16.msra.mxu0 %v5110
        %5161 = vmatpush.bf16.msra.mxu0 %v5108
        %5162 = vmatpush.bf16.msra.mxu0 %v5106
        %5163 = vmatpush.bf16.msra.mxu0 %v5104
        %5164 = vmatpush.bf16.msra.mxu0 %v5102
        %5165 = vmatpush.bf16.msra.mxu0 %v5100
        %5166 = vmatpush.bf16.msra.mxu0 %v5098
        %5167 = vmatpush.bf16.msra.mxu0 %v5096
        %5168 = vmatmul.bf16.gmra.mxu0 %v4998
        %v5169 = vpop.f32.mrf.mxu0
        %v5170 = vadd.f32 0.0, %v5169
        %v5171 = vpop.f32.mrf.mxu0
        %5172 = vdwg.mxu0
        %5173 = vmatpush.bf16.msra.mxu0 %v5126
        %5174 = vmatpush.bf16.msra.mxu0 %v5124
        %5175 = vmatpush.bf16.msra.mxu0 %v5122
        %5176 = vmatpush.bf16.msra.mxu0 %v5120
        %5177 = vmatpush.bf16.msra.mxu0 %v5118
        %5178 = vmatpush.bf16.msra.mxu0 %v5116
        %5179 = vmatpush.bf16.msra.mxu0 %v5114
        %5180 = vmatpush.bf16.msra.mxu0 %v5112
        %5181 = vmatmul.bf16.gmra.mxu0 %v4999
        %v5182 = vpop.f32.mrf.mxu0
        %v5183 = vadd.f32 %v5170, %v5182
        %v5184 = vpop.f32.mrf.mxu0
        %5185 = vdwg.mxu0
        %5186 = vmatpush.bf16.msra.mxu0 %v5111
        %5187 = vmatpush.bf16.msra.mxu0 %v5109
        %5188 = vmatpush.bf16.msra.mxu0 %v5107
        %5189 = vmatpush.bf16.msra.mxu0 %v5105
        %5190 = vmatpush.bf16.msra.mxu0 %v5103
        %5191 = vmatpush.bf16.msra.mxu0 %v5101
        %5192 = vmatpush.bf16.msra.mxu0 %v5099
        %5193 = vmatpush.bf16.msra.mxu0 %v5097
        %5194 = vmatmul.bf16.gmra.mxu0 %v4998
        %v5195 = vpop.f32.mrf.mxu0
        %v5196 = vadd.f32 0.0, %v5195
        %v5197 = vpop.f32.mrf.mxu0
        %5198 = vdwg.mxu0
        %5199 = vmatpush.bf16.msra.mxu0 %v5127
        %5200 = vmatpush.bf16.msra.mxu0 %v5125
        %5201 = vmatpush.bf16.msra.mxu0 %v5123
        %5202 = vmatpush.bf16.msra.mxu0 %v5121
        %5203 = vmatpush.bf16.msra.mxu0 %v5119
        %5204 = vmatpush.bf16.msra.mxu0 %v5117
        %5205 = vmatpush.bf16.msra.mxu0 %v5115
        %5206 = vmatpush.bf16.msra.mxu0 %v5113
        %5207 = vmatmul.bf16.gmra.mxu0 %v4999
        %v5208 = vpop.f32.mrf.mxu0
        %v5209 = vadd.f32 %v5196, %v5208
        %v5210 = vpop.f32.mrf.mxu0
        %5211 = vdwg.mxu0
        %v5213 = vperm.slane %v4964, 0
        %v5214 = vperm.slane %v4964, 2
        %v5217 = vmul.f32 %v5183, %v5213
        %v5218 = vmul.f32 %v5209, %v5214
        %v5219 = vperm.slane %v4964, 1
        %v5220 = vperm.slane %v4964, 3
        %v5223 = vadd.f32 %v5217, %v5219
        %v5224 = vadd.f32 %v5218, %v5220
        %v5225 = vpack.c.bf16 %v5223, %v5223
        %v5226 = vpack.c.bf16 %v5224, %v5224
        %v5259 = vunpack.c.l.b16 %v4965
        %v5260 = vunpack.c.l.b16 %v4966
        %v5261 = vunpack.c.l.b16 %v4967
        %v5262 = vunpack.c.l.b16 %v4968
        %v5263 = vunpack.c.l.b16 %v4969
        %v5264 = vunpack.c.l.b16 %v4970
        %v5265 = vunpack.c.l.b16 %v4971
        %v5266 = vunpack.c.l.b16 %v4972
        %v5267 = vunpack.c.l.b16 %v4973
        %v5268 = vunpack.c.l.b16 %v4974
        %v5269 = vunpack.c.l.b16 %v4975
        %v5270 = vunpack.c.l.b16 %v4976
        %v5271 = vunpack.c.l.b16 %v4977
        %v5272 = vunpack.c.l.b16 %v4978
        %v5273 = vunpack.c.l.b16 %v4979
        %v5274 = vunpack.c.l.b16 %v4980
        %v5275 = vunpack.c.l.b16 %v4981
        %v5276 = vunpack.c.l.b16 %v4982
        %v5277 = vunpack.c.l.b16 %v4983
        %v5278 = vunpack.c.l.b16 %v4984
        %v5279 = vunpack.c.l.b16 %v4985
        %v5280 = vunpack.c.l.b16 %v4986
        %v5281 = vunpack.c.l.b16 %v4987
        %v5282 = vunpack.c.l.b16 %v4988
        %v5283 = vunpack.c.l.b16 %v4989
        %v5284 = vunpack.c.l.b16 %v4990
        %v5285 = vunpack.c.l.b16 %v4991
        %v5286 = vunpack.c.l.b16 %v4992
        %v5287 = vunpack.c.l.b16 %v4993
        %v5288 = vunpack.c.l.b16 %v4994
        %v5289 = vunpack.c.l.b16 %v4995
        %v5290 = vunpack.c.l.b16 %v4996
        %v5291 = vpack.c.b16 %v5260, %v5259
        %v5292 = vpack.c.b16 %v5262, %v5261
        %v5293 = vpack.c.b16 %v5264, %v5263
        %v5294 = vpack.c.b16 %v5266, %v5265
        %v5295 = vpack.c.b16 %v5268, %v5267
        %v5296 = vpack.c.b16 %v5270, %v5269
        %v5297 = vpack.c.b16 %v5272, %v5271
        %v5298 = vpack.c.b16 %v5274, %v5273
        %v5299 = vpack.c.b16 %v5276, %v5275
        %v5300 = vpack.c.b16 %v5278, %v5277
        %v5301 = vpack.c.b16 %v5280, %v5279
        %v5302 = vpack.c.b16 %v5282, %v5281
        %v5303 = vpack.c.b16 %v5284, %v5283
        %v5304 = vpack.c.b16 %v5286, %v5285
        %v5305 = vpack.c.b16 %v5288, %v5287
        %v5306 = vpack.c.b16 %v5290, %v5289
        %5323 = vmatpush.bf16.msra.mxu0 %v5298
        %5324 = vmatpush.bf16.msra.mxu0 %v5297
        %5325 = vmatpush.bf16.msra.mxu0 %v5296
        %5326 = vmatpush.bf16.msra.mxu0 %v5295
        %5327 = vmatpush.bf16.msra.mxu0 %v5294
        %5328 = vmatpush.bf16.msra.mxu0 %v5293
        %5329 = vmatpush.bf16.msra.mxu0 %v5292
        %5330 = vmatpush.bf16.msra.mxu0 %v5291
        %5331 = vmatmul.bf16.gmra.mxu0 %v5225
        %v5332 = vpop.f32.mrf.mxu0
        %v5333 = vadd.f32 %v4997, %v5332
        %v5334 = vpop.f32.mrf.mxu0
        %5335 = vdwg.mxu0
        %5336 = vmatpush.bf16.msra.mxu0 %v5306
        %5337 = vmatpush.bf16.msra.mxu0 %v5305
        %5338 = vmatpush.bf16.msra.mxu0 %v5304
        %5339 = vmatpush.bf16.msra.mxu0 %v5303
        %5340 = vmatpush.bf16.msra.mxu0 %v5302
        %5341 = vmatpush.bf16.msra.mxu0 %v5301
        %5342 = vmatpush.bf16.msra.mxu0 %v5300
        %5343 = vmatpush.bf16.msra.mxu0 %v5299
        %5344 = vmatmul.bf16.gmra.mxu0 %v5226
        %v5345 = vpop.f32.mrf.mxu0
        %v5346 = vadd.f32 %v5333, %v5345
        %v5347 = vpop.f32.mrf.mxu0
        %5348 = vdwg.mxu0
        %5349 = vst.msk [vmem:[%s995 + $0x4] sm:$0x1] %vm1882, %v5346
        %v5352 = vrot.slane %v5224, 7
        %v5353 = vsel %vm1887, %v5223, %v5352
        %5355 = vst.msk [vmem:[%s999 + $0x8] sm:$0x3] %vm1891, %v5353
        %p5356 = scmp.lt.s32.totalorder %s45, 1
        %s5357 = scalar_select %p5356, %s45, 1
        %s5358 = smul.addr %s5357, 5
        %s5359 = scalar_lea.vmem %s22, %s5358
        %p5360 = scmp.lt.s32.totalorder %s45, 1
        %s5361 = scalar_select %p5360, %s45, 1
        %s5362 = smul.addr %s5361, 10
        %s5363 = scalar_lea.vmem %s23, %s5362
        // Predicated region
        $region181: #{fsra_forward.1} parent=107 // pred_check
          %p5364 = pneg %p530
        $region182: #{fsra_forward.1} parent=107 // pred_check_branch
          %5366 = sbr.rel (%p5364) target = $region184
        $region183: #{fsra_forward.1} parent=107 // pred_region
          _
        $region184: #{fsra_forward.1} parent=107 // pred_fallthru
          _
        // Predicated region
        $region185: #{fsra_forward.1} parent=107 // pred_check
          %p5367 = pneg %p556
        $region186: #{fsra_forward.1} parent=107 // pred_check_branch
          %5369 = sbr.rel (%p5367) target = $region188
        $region187: #{fsra_forward.1} parent=107 // pred_region
          _
        $region188: #{fsra_forward.1} parent=107 // pred_fallthru
          _
      $region108: #{fsra_forward.1} parent=5 // pred_fallthru
        _
      %p5370 = scmp.le.s32.totalorder 2, %s40
      // Predicated region
      $region189: #{fsra_forward.1} parent=5 // pred_check
        %p5371 = pneg %p5370
      $region190: #{fsra_forward.1} parent=5 // pred_check_branch
        %5373 = sbr.rel (%p5371) target = $region192
      $region191: #{fsra_forward.1} parent=5 // pred_region
        %s5374 = ssub.s32 %s40, 2
        // Predicated region
        $region193: #{fsra_forward.1} parent=191 // pred_check
          %p5375 = pneg %p536
        $region194: #{fsra_forward.1} parent=191 // pred_check_branch
          %5377 = sbr.rel (%p5375) target = $region196
        $region195: #{fsra_forward.1} parent=191 // pred_region
          %p5378 = scmp.lt.s32.totalorder %s46, 1
          %s5379 = scalar_select %p5378, %s46, 1
          %s5380 = smul.addr %s5379, 5
          %s5381 = scalar_lea.vmem %s22, %s5380
        $region196: #{fsra_forward.1} parent=191 // pred_fallthru
          _
        // Predicated region
        $region197: #{fsra_forward.1} parent=191 // pred_check
          %p5382 = pneg %p562
        $region198: #{fsra_forward.1} parent=191 // pred_check_branch
          %5384 = sbr.rel (%p5382) target = $region200
        $region199: #{fsra_forward.1} parent=191 // pred_region
          %p5385 = scmp.lt.s32.totalorder %s46, 1
          %s5386 = scalar_select %p5385, %s46, 1
          %s5387 = smul.addr %s5386, 10
          %s5388 = scalar_lea.vmem %s23, %s5387
        $region200: #{fsra_forward.1} parent=191 // pred_fallthru
          _
      $region192: #{fsra_forward.1} parent=5 // pred_fallthru
        _
    $region6: #{fsra_forward.1} parent=1 // loop_footer
      %s44 = sadd.s32 1, %s40
    $region7: #{fsra_forward.1} parent=1 // loop_footer_branch
      %39 = sbr.rel target = $region3
    $region8: #{fsra_forward.1} parent=1 // loop_exit
      _
    %5389 = vsyncpa [#allocation3], 1
    %s5390 = scalar_lea.sflag [#allocation3], 1
    %5391 = vsyncpa %s5390, 1
    %5392 = vsyncpa [#allocation5], 1
    %5393 = vsyncpa [#allocation8], 1
    %5394 = vsyncpa [#allocation11], 1
    %5395 = vsyncpa [#allocation14], 1
    %5396 = vsyncpa [#allocation17], 1
    %5397 = vsyncpa [#allocation20], 1
    %5398 = vsyncpa [#allocation23], 1
    %5399 = vsyncpa [#allocation26], 1
    %5400 = vsyncpa [#allocation29], 1

</llo_original>
